<compile_context>
chip_gen: v6e
topology: v6e:2x2x1
jax: 0.10.0
libtpu: 0.0.40
codegen_flags: <defaults>
</compile_context>

<pallas_src>
import functools

import numpy as np
import jax
import jax.numpy as jnp
from jax import lax
from jax.experimental import pallas as pl
from jax.experimental.pallas import tpu as pltpu


# ----------------------------- fused Pallas kernel -----------------------------

def _danet_head_kernel(x_ref, w5a_ref, w5c_ref, w51_ref, w52_ref, wqkv_ref,
                       wA_ref, wB_ref, vec_ref, gam_ref, out_ref,
                       xp_a_ref, col_a_ref, xp_b_ref, col_b_ref,
                       *, H, W, C, Cq, Co):
    N = H * W
    vec = vec_ref[...]                     # (6, VW) f32: packed BN shifts / biases
    g_pam = gam_ref[0]                     # SMEM scalars (gamma of PAM / CAM)
    g_cam = gam_ref[1]

    def conv3x3(x_flat, w_ref, shift, xp_ref, col_ref):
        """3x3 'SAME' conv as a single im2col matmul (BN scale folded into w)."""
        Cin = x_flat.shape[-1]
        # Zero-pad inside VMEM, then copy the interior row by row.
        xp_ref[...] = jnp.zeros_like(xp_ref)
        for h in range(H):
            xp_ref[h + 1, 1:W + 1, :] = x_flat[h * W:(h + 1) * W, :]
        xp = xp_ref[...]
        # Build the (N, 9*Cin) im2col patch matrix in bf16.
        for ky in range(3):
            for kx in range(3):
                k = ky * 3 + kx
                col_ref[:, k * Cin:(k + 1) * Cin] = (
                    xp[ky:ky + H, kx:kx + W, :].reshape(N, Cin).astype(col_ref.dtype))
        y = jnp.dot(col_ref[...], w_ref[...], preferred_element_type=jnp.float32)
        return jnp.maximum(y + shift, 0.0)               # (N, Cout) f32

    x = x_ref[0]                                          # (N, Cin) f32

    # ---------------- PAM branch: conv5a -> position attention -> conv51 --------
    feat1 = conv3x3(x, w5a_ref, vec[0:1, :C], xp_a_ref, col_a_ref)
    qkv = jnp.dot(feat1.astype(jnp.bfloat16), wqkv_ref[...],
                  preferred_element_type=jnp.float32) + vec[4:5, :2 * Cq + C]
    q = qkv[:, :Cq]
    k = qkv[:, Cq:2 * Cq]
    v = qkv[:, 2 * Cq:]
    energy = lax.dot_general(q, k, (((1,), (1,)), ((), ())),
                             preferred_element_type=jnp.float32)          # (N, N)
    energy = energy - jnp.max(energy, axis=-1, keepdims=True)
    p = jnp.exp(energy)
    attn = p * pl.reciprocal(jnp.sum(p, axis=-1, keepdims=True), approx=True)
    # TODO(synk): for production N (= H*W >= 4096) this (N, N) attention must be
    # tiled flash-style (online softmax) instead of materialized in VMEM.
    sa_feat = g_pam * jnp.dot(attn, v, preferred_element_type=jnp.float32) + feat1
    sa_conv = conv3x3(sa_feat, w51_ref, vec[2:3, :C], xp_b_ref, col_b_ref)

    # ---------------- CAM branch: conv5c -> channel attention -> conv52 ---------
    feat2 = conv3x3(x, w5c_ref, vec[1:2, :C], xp_a_ref, col_a_ref)
    # channel gram matrix (C, C); C is tiny here so the axis-0 contraction is fine.
    energy_c = lax.dot_general(feat2, feat2, (((0,), (0,)), ((), ())),
                               preferred_element_type=jnp.float32)
    e_new = jnp.max(energy_c, axis=-1, keepdims=True) - energy_c
    e_new = e_new - jnp.max(e_new, axis=-1, keepdims=True)
    pc = jnp.exp(e_new)
    attn_c = pc * pl.reciprocal(jnp.sum(pc, axis=-1, keepdims=True), approx=True)
    sc_feat = g_cam * lax.dot_general(feat2, attn_c, (((1,), (1,)), ((), ())),
                                      preferred_element_type=jnp.float32) + feat2
    sc_conv = conv3x3(sc_feat, w52_ref, vec[3:4, :C], xp_b_ref, col_b_ref)

    # ---------------- fused output 1x1 convs (conv6 | conv7 | conv8) ------------
    # out[:, 0:Co]  = sa_conv @ w6 + b6
    # out[:, Co:2Co]= sc_conv @ w7 + b7
    # out[:, 2Co: ] = (sa_conv + sc_conv) @ w8 + b8       (feat_sum stays in VMEM)
    out_ref[0] = (jnp.dot(sa_conv.astype(jnp.bfloat16), wA_ref[...],
                          preferred_element_type=jnp.float32)
                  + jnp.dot(sc_conv.astype(jnp.bfloat16), wB_ref[...],
                            preferred_element_type=jnp.float32)
                  + vec[5:6, :3 * Co])


# ----------------------------- wrapper -----------------------------

def danet_head_forward(x_nchw, p):
    # TODO(synk): Dropout2d(0.1) is identity and BatchNorm is folded into a
    # per-channel scale/shift (inference mode only).
    x = jnp.transpose(x_nchw, (0, 2, 3, 1)).astype(jnp.float32)   # NCHW -> NHWC
    B, H, W, Cin = x.shape
    N = H * W
    C = p["w5a"].shape[-1]       # inter channels
    Cq = p["wq"].shape[-1]       # query/key channels
    Co = p["w6"].shape[-1]       # out channels
    VW = max(C, 2 * Cq + C, 3 * Co)

    x_flat = x.reshape(B, N, Cin)

    def fold3(w9, scale):        # fold BN scale into 3x3 weights, flatten, bf16
        return (w9 * scale[None, None, :]).reshape(9 * w9.shape[1],
                                                   w9.shape[2]).astype(jnp.bfloat16)

    w5a = fold3(p["w5a"], p["s5a"])
    w5c = fold3(p["w5c"], p["s5c"])
    w51 = fold3(p["w51"], p["s51"])
    w52 = fold3(p["w52"], p["s52"])
    wqkv = jnp.concatenate([p["wq"], p["wk"], p["wv"]], axis=1).astype(jnp.bfloat16)
    zo = jnp.zeros_like(p["w6"])
    wA = jnp.concatenate([p["w6"], zo, p["w8"]], axis=1).astype(jnp.bfloat16)
    wB = jnp.concatenate([zo, p["w7"], p["w8"]], axis=1).astype(jnp.bfloat16)

    def row(v):                  # pack per-channel vectors into one small block
        v = v.reshape(-1)
        return jnp.pad(v, (0, VW - v.shape[0]))

    vec = jnp.stack([row(p["t5a"]), row(p["t5c"]), row(p["t51"]), row(p["t52"]),
                     row(jnp.concatenate([p["bq"].reshape(-1), p["bk"].reshape(-1),
                                          p["bv"].reshape(-1)])),
                     row(jnp.concatenate([p["b6"], p["b7"], p["b8"]]))],
                    axis=0)                                      # (6, VW) f32
    gam = jnp.concatenate([p["g_pam"].reshape(-1), p["g_cam"].reshape(-1)])  # (2,)

    kernel = functools.partial(_danet_head_kernel, H=H, W=W, C=C, Cq=Cq, Co=Co)
    c2 = lambda b: (0, 0)
    y = pl.pallas_call(
        kernel,
        out_shape=jax.ShapeDtypeStruct((B, N, 3 * Co), jnp.float32),
        grid=(B,),
        in_specs=[
            pl.BlockSpec((1, N, Cin), lambda b: (b, 0, 0)),
            pl.BlockSpec((9 * Cin, C), c2), pl.BlockSpec((9 * Cin, C), c2),
            pl.BlockSpec((9 * C, C), c2), pl.BlockSpec((9 * C, C), c2),
            pl.BlockSpec((C, 2 * Cq + C), c2),
            pl.BlockSpec((C, 3 * Co), c2), pl.BlockSpec((C, 3 * Co), c2),
            pl.BlockSpec((6, VW), c2),
            pl.BlockSpec(memory_space=pltpu.MemorySpace.SMEM),
        ],
        out_specs=pl.BlockSpec((1, N, 3 * Co), lambda b: (b, 0, 0)),
        scratch_shapes=[
            pltpu.VMEM((H + 2, W + 2, Cin), jnp.float32),   # padded image (input convs)
            pltpu.VMEM((N, 9 * Cin), jnp.bfloat16),          # im2col (input convs)
            pltpu.VMEM((H + 2, W + 2, C), jnp.float32),      # padded image (inner convs)
            pltpu.VMEM((N, 9 * C), jnp.bfloat16),            # im2col (inner convs)
        ],
        compiler_params=pltpu.CompilerParams(dimension_semantics=("parallel",)),
    )(x_flat, w5a, w5c, w51, w52, wqkv, wA, wB, vec, gam)

    sa = y[:, :, :Co]
    sc = y[:, :, Co:2 * Co]
    sasc = y[:, :, 2 * Co:]

    def to_nchw(z):
        return jnp.transpose(z.reshape(B, H, W, Co), (0, 3, 1, 2))

    return to_nchw(sasc), to_nchw(sa), to_nchw(sc)


# ----------------------------- parameters -----------------------------

def init_params(key, in_channels, out_channels):
    inter = in_channels // 4
    cq = inter // 8
    keys = iter(jax.random.split(key, 64))

    def nrm(shape, s=0.1):
        return s * jax.random.normal(next(keys), shape, jnp.float32)

    def bn(c):
        g = 1.0 + nrm((c,), 0.1)
        beta = nrm((c,), 0.1)
        mean = nrm((c,), 0.1)
        var = 1.0 + jnp.abs(nrm((c,), 0.1))
        scale = g / jnp.sqrt(var + 1e-5)
        shift = beta - mean * scale
        return scale, shift

    p = {}
    for name, ci, co in [("5a", in_channels, inter), ("5c", in_channels, inter),
                         ("51", inter, inter), ("52", inter, inter)]:
        p["w" + name] = nrm((9, ci, co))                 # 3x3 weights, (ky*3+kx, Cin, Cout)
        p["s" + name], p["t" + name] = bn(co)
    p["wq"] = nrm((inter, cq)); p["bq"] = nrm((1, cq))
    p["wk"] = nrm((inter, cq)); p["bk"] = nrm((1, cq))
    p["wv"] = nrm((inter, inter)); p["bv"] = nrm((1, inter))
    # PyTorch __init__ uses gamma = zeros(1); we use nonzero deterministic values so
    # the attention branches are actually exercised numerically.
    p["g_pam"] = jnp.full((1, 1), 0.5, jnp.float32)
    p["g_cam"] = jnp.full((1, 1), 0.75, jnp.float32)
    for name in ("6", "7", "8"):
        p["w" + name] = nrm((inter, out_channels))
        p["b" + name] = nrm((out_channels,))
    return p


# ----------------------------- pure-JAX reference -----------------------------

def _ref_conv3(x, w9, scale, shift):
    Cin, Cout = w9.shape[1], w9.shape[2]
    w = w9.reshape(3, 3, Cin, Cout)
    y = lax.conv_general_dilated(x, w, (1, 1), "SAME",
                                 dimension_numbers=("NHWC", "HWIO", "NHWC"))
    return jax.nn.relu(y * scale + shift)


def ref_forward(x_nchw, p):
    x = jnp.transpose(x_nchw, (0, 2, 3, 1)).astype(jnp.float32)
    B, H, W, _ = x.shape
    N = H * W

    feat1 = _ref_conv3(x, p["w5a"], p["s5a"], p["t5a"])
    C = feat1.shape[-1]
    xs = feat1.reshape(B, N, C)
    q = xs @ p["wq"] + p["bq"]
    k = xs @ p["wk"] + p["bk"]
    v = xs @ p["wv"] + p["bv"]
    attn = jax.nn.softmax(jnp.einsum("bnc,bmc->bnm", q, k), axis=-1)
    sa_feat = (p["g_pam"][0, 0] * jnp.einsum("bnm,bmc->bnc", attn, v) + xs).reshape(B, H, W, C)
    sa_conv = _ref_conv3(sa_feat, p["w51"], p["s51"], p["t51"])
    sa_output = sa_conv.reshape(B, N, C) @ p["w6"] + p["b6"]

    feat2 = _ref_conv3(x, p["w5c"], p["s5c"], p["t5c"])
    ys = feat2.reshape(B, N, C)
    energy = jnp.einsum("bni,bnj->bij", ys, ys)
    e_new = jnp.max(energy, -1, keepdims=True) - energy
    attn_c = jax.nn.softmax(e_new, axis=-1)
    sc_feat = (p["g_cam"][0, 0] * jnp.einsum("bij,bnj->bni", attn_c, ys) + ys).reshape(B, H, W, C)
    sc_conv = _ref_conv3(sc_feat, p["w52"], p["s52"], p["t52"])
    sc_output = sc_conv.reshape(B, N, C) @ p["w7"] + p["b7"]

    feat_sum = sa_conv + sc_conv
    sasc_output = feat_sum.reshape(B, N, C) @ p["w8"] + p["b8"]

    def to_nchw(y):
        return jnp.transpose(y.reshape(B, H, W, -1), (0, 3, 1, 2))

    return to_nchw(sasc_output), to_nchw(sa_output), to_nchw(sc_output)


# ----------------------------- main -----------------------------

if __name__ == "__main__":
    in_channels, out_channels = 64, 16   # inter_channels = 16, query/key channels = 2
    B, H, W = 2, 8, 8
    key = jax.random.PRNGKey(0)
    kx, kp = jax.random.split(key)
    x = jax.random.normal(kx, (B, in_channels, H, W), jnp.float32)
    params = init_params(kp, in_channels, out_channels)

    fwd = jax.jit(danet_head_forward)
    outs = jax.block_until_ready(fwd(x, params))
    refs = jax.block_until_ready(ref_forward(x, params))
    # bf16 MXU operands (f32 accumulation) + approx reciprocal -> 2e-2 tolerance.
    for o, r in zip(outs, refs):
        np.testing.assert_allclose(np.asarray(o), np.asarray(r), rtol=2e-2, atol=2e-2)

    print("KERNEL_OK")
</pallas_src>

<mosaic_0001>
module attributes {stable_mosaic.version = 11 : i64} {
  func.func @_danet_head_kernel(%arg0: i32, %arg1: memref<1x64x64xf32, #tpu.memory_space<vmem>>, %arg2: memref<576x16xbf16, #tpu.memory_space<vmem>>, %arg3: memref<576x16xbf16, #tpu.memory_space<vmem>>, %arg4: memref<144x16xbf16, #tpu.memory_space<vmem>>, %arg5: memref<144x16xbf16, #tpu.memory_space<vmem>>, %arg6: memref<16x20xbf16, #tpu.memory_space<vmem>>, %arg7: memref<16x48xbf16, #tpu.memory_space<vmem>>, %arg8: memref<16x48xbf16, #tpu.memory_space<vmem>>, %arg9: memref<6x48xf32, #tpu.memory_space<vmem>>, %arg10: memref<2xf32, #tpu.memory_space<smem>>, %arg11: memref<1x64x48xf32, #tpu.memory_space<vmem>>, %arg12: memref<10x10x64xf32, #tpu.memory_space<vmem>>, %arg13: memref<64x576xbf16, #tpu.memory_space<vmem>>, %arg14: memref<10x10x16xf32, #tpu.memory_space<vmem>>, %arg15: memref<64x144xbf16, #tpu.memory_space<vmem>>) attributes {dimension_semantics = [#tpu.dimension_semantics<parallel>], iteration_bounds = array<i64: 2>, scalar_prefetch = 0 : i64, scratch_operands = 4 : i64, tpu.core_type = #tpu.core_type<tc>, window_params = [{transform_indices = @transform_0, window_bounds = array<i64: 1, 64, 64>}, {pipeline_mode = #tpu.pipeline_mode<synchronous>, transform_indices = @transform_1, window_bounds = array<i64: 576, 16>}, {pipeline_mode = #tpu.pipeline_mode<synchronous>, transform_indices = @transform_2, window_bounds = array<i64: 576, 16>}, {pipeline_mode = #tpu.pipeline_mode<synchronous>, transform_indices = @transform_3, window_bounds = array<i64: 144, 16>}, {pipeline_mode = #tpu.pipeline_mode<synchronous>, transform_indices = @transform_4, window_bounds = array<i64: 144, 16>}, {pipeline_mode = #tpu.pipeline_mode<synchronous>, transform_indices = @transform_5, window_bounds = array<i64: 16, 20>}, {pipeline_mode = #tpu.pipeline_mode<synchronous>, transform_indices = @transform_6, window_bounds = array<i64: 16, 48>}, {pipeline_mode = #tpu.pipeline_mode<synchronous>, transform_indices = @transform_7, window_bounds = array<i64: 16, 48>}, {pipeline_mode = #tpu.pipeline_mode<synchronous>, transform_indices = @transform_8, window_bounds = array<i64: 6, 48>}, {transform_indices = @transform_9, window_bounds = array<i64: 2>}, {transform_indices = @transform_10, window_bounds = array<i64: 1, 64, 48>}]} {
    %c0 = arith.constant 0 : index
    %c0_0 = arith.constant 0 : index
    %0 = vector.load %arg9[%c0, %c0_0] : memref<6x48xf32, #tpu.memory_space<vmem>>, vector<6x48xf32>
    %c0_1 = arith.constant 0 : index
    %1 = memref.load %arg10[%c0_1] : memref<2xf32, #tpu.memory_space<smem>>
    %c1 = arith.constant 1 : index
    %2 = memref.load %arg10[%c1] : memref<2xf32, #tpu.memory_space<smem>>
    %c0_2 = arith.constant 0 : index
    %c0_3 = arith.constant 0 : index
    %c0_4 = arith.constant 0 : index
    %3 = vector.load %arg1[%c0_2, %c0_3, %c0_4] : memref<1x64x64xf32, #tpu.memory_space<vmem>>, vector<1x64x64xf32>
    %4 = vector.shape_cast %3 : vector<1x64x64xf32> to vector<64x64xf32>
    %5 = vector.extract_strided_slice %0 {offsets = [0, 0], sizes = [1, 16], strides = [1, 1]} : vector<6x48xf32> to vector<1x16xf32>
    %cst = arith.constant 0.000000e+00 : f32
    %6 = vector.broadcast %cst : f32 to vector<10x10x64xf32>
    %c0_5 = arith.constant 0 : index
    %c0_6 = arith.constant 0 : index
    %c0_7 = arith.constant 0 : index
    %7 = vector.load %arg12[%c0_5, %c0_6, %c0_7] : memref<10x10x64xf32, #tpu.memory_space<vmem>>, vector<10x10x64xf32>
    tpu.vector_store %arg12[%c0_5, %c0_6, %c0_7], %6 {strides = array<i32>} : memref<10x10x64xf32, #tpu.memory_space<vmem>>, vector<10x10x64xf32>,
    %8 = vector.extract_strided_slice %4 {offsets = [0, 0], sizes = [8, 64], strides = [1, 1]} : vector<64x64xf32> to vector<8x64xf32>
    %c1_8 = arith.constant 1 : index
    %c1_9 = arith.constant 1 : index
    %c0_10 = arith.constant 0 : index
    %9 = vector.load %arg12[%c1_8, %c1_9, %c0_10] : memref<10x10x64xf32, #tpu.memory_space<vmem>>, vector<1x8x64xf32>
    %10 = vector.shape_cast %9 : vector<1x8x64xf32> to vector<8x64xf32>
    %11 = vector.shape_cast %8 : vector<8x64xf32> to vector<1x8x64xf32>
    tpu.vector_store %arg12[%c1_8, %c1_9, %c0_10], %11 {strides = array<i32>} : memref<10x10x64xf32, #tpu.memory_space<vmem>>, vector<1x8x64xf32>,
    %12 = vector.extract_strided_slice %4 {offsets = [8, 0], sizes = [8, 64], strides = [1, 1]} : vector<64x64xf32> to vector<8x64xf32>
    %c2 = arith.constant 2 : index
    %c1_11 = arith.constant 1 : index
    %c0_12 = arith.constant 0 : index
    %13 = vector.load %arg12[%c2, %c1_11, %c0_12] : memref<10x10x64xf32, #tpu.memory_space<vmem>>, vector<1x8x64xf32>
    %14 = vector.shape_cast %13 : vector<1x8x64xf32> to vector<8x64xf32>
    %15 = vector.shape_cast %12 : vector<8x64xf32> to vector<1x8x64xf32>
    tpu.vector_store %arg12[%c2, %c1_11, %c0_12], %15 {strides = array<i32>} : memref<10x10x64xf32, #tpu.memory_space<vmem>>, vector<1x8x64xf32>,
    %16 = vector.extract_strided_slice %4 {offsets = [16, 0], sizes = [8, 64], strides = [1, 1]} : vector<64x64xf32> to vector<8x64xf32>
    %c3 = arith.constant 3 : index
    %c1_13 = arith.constant 1 : index
    %c0_14 = arith.constant 0 : index
    %17 = vector.load %arg12[%c3, %c1_13, %c0_14] : memref<10x10x64xf32, #tpu.memory_space<vmem>>, vector<1x8x64xf32>
    %18 = vector.shape_cast %17 : vector<1x8x64xf32> to vector<8x64xf32>
    %19 = vector.shape_cast %16 : vector<8x64xf32> to vector<1x8x64xf32>
    tpu.vector_store %arg12[%c3, %c1_13, %c0_14], %19 {strides = array<i32>} : memref<10x10x64xf32, #tpu.memory_space<vmem>>, vector<1x8x64xf32>,
    %20 = vector.extract_strided_slice %4 {offsets = [24, 0], sizes = [8, 64], strides = [1, 1]} : vector<64x64xf32> to vector<8x64xf32>
    %c4 = arith.constant 4 : index
    %c1_15 = arith.constant 1 : index
    %c0_16 = arith.constant 0 : index
    %21 = vector.load %arg12[%c4, %c1_15, %c0_16] : memref<10x10x64xf32, #tpu.memory_space<vmem>>, vector<1x8x64xf32>
    %22 = vector.shape_cast %21 : vector<1x8x64xf32> to vector<8x64xf32>
    %23 = vector.shape_cast %20 : vector<8x64xf32> to vector<1x8x64xf32>
    tpu.vector_store %arg12[%c4, %c1_15, %c0_16], %23 {strides = array<i32>} : memref<10x10x64xf32, #tpu.memory_space<vmem>>, vector<1x8x64xf32>,
    %24 = vector.extract_strided_slice %4 {offsets = [32, 0], sizes = [8, 64], strides = [1, 1]} : vector<64x64xf32> to vector<8x64xf32>
    %c5 = arith.constant 5 : index
    %c1_17 = arith.constant 1 : index
    %c0_18 = arith.constant 0 : index
    %25 = vector.load %arg12[%c5, %c1_17, %c0_18] : memref<10x10x64xf32, #tpu.memory_space<vmem>>, vector<1x8x64xf32>
    %26 = vector.shape_cast %25 : vector<1x8x64xf32> to vector<8x64xf32>
    %27 = vector.shape_cast %24 : vector<8x64xf32> to vector<1x8x64xf32>
    tpu.vector_store %arg12[%c5, %c1_17, %c0_18], %27 {strides = array<i32>} : memref<10x10x64xf32, #tpu.memory_space<vmem>>, vector<1x8x64xf32>,
    %28 = vector.extract_strided_slice %4 {offsets = [40, 0], sizes = [8, 64], strides = [1, 1]} : vector<64x64xf32> to vector<8x64xf32>
    %c6 = arith.constant 6 : index
    %c1_19 = arith.constant 1 : index
    %c0_20 = arith.constant 0 : index
    %29 = vector.load %arg12[%c6, %c1_19, %c0_20] : memref<10x10x64xf32, #tpu.memory_space<vmem>>, vector<1x8x64xf32>
    %30 = vector.shape_cast %29 : vector<1x8x64xf32> to vector<8x64xf32>
    %31 = vector.shape_cast %28 : vector<8x64xf32> to vector<1x8x64xf32>
    tpu.vector_store %arg12[%c6, %c1_19, %c0_20], %31 {strides = array<i32>} : memref<10x10x64xf32, #tpu.memory_space<vmem>>, vector<1x8x64xf32>,
    %32 = vector.extract_strided_slice %4 {offsets = [48, 0], sizes = [8, 64], strides = [1, 1]} : vector<64x64xf32> to vector<8x64xf32>
    %c7 = arith.constant 7 : index
    %c1_21 = arith.constant 1 : index
    %c0_22 = arith.constant 0 : index
    %33 = vector.load %arg12[%c7, %c1_21, %c0_22] : memref<10x10x64xf32, #tpu.memory_space<vmem>>, vector<1x8x64xf32>
    %34 = vector.shape_cast %33 : vector<1x8x64xf32> to vector<8x64xf32>
    %35 = vector.shape_cast %32 : vector<8x64xf32> to vector<1x8x64xf32>
    tpu.vector_store %arg12[%c7, %c1_21, %c0_22], %35 {strides = array<i32>} : memref<10x10x64xf32, #tpu.memory_space<vmem>>, vector<1x8x64xf32>,
    %36 = vector.extract_strided_slice %4 {offsets = [56, 0], sizes = [8, 64], strides = [1, 1]} : vector<64x64xf32> to vector<8x64xf32>
    %c8 = arith.constant 8 : index
    %c1_23 = arith.constant 1 : index
    %c0_24 = arith.constant 0 : index
    %37 = vector.load %arg12[%c8, %c1_23, %c0_24] : memref<10x10x64xf32, #tpu.memory_space<vmem>>, vector<1x8x64xf32>
    %38 = vector.shape_cast %37 : vector<1x8x64xf32> to vector<8x64xf32>
    %39 = vector.shape_cast %36 : vector<8x64xf32> to vector<1x8x64xf32>
    tpu.vector_store %arg12[%c8, %c1_23, %c0_24], %39 {strides = array<i32>} : memref<10x10x64xf32, #tpu.memory_space<vmem>>, vector<1x8x64xf32>,
    %c0_25 = arith.constant 0 : index
    %c0_26 = arith.constant 0 : index
    %c0_27 = arith.constant 0 : index
    %40 = vector.load %arg12[%c0_25, %c0_26, %c0_27] : memref<10x10x64xf32, #tpu.memory_space<vmem>>, vector<10x10x64xf32>
    %41 = vector.extract_strided_slice %40 {offsets = [0, 0, 0], sizes = [8, 8, 64], strides = [1, 1, 1]} : vector<10x10x64xf32> to vector<8x8x64xf32>
    %42 = vector.shape_cast %41 : vector<8x8x64xf32> to vector<64x64xf32>
    %43 = arith.truncf %42 : vector<64x64xf32> to vector<64x64xbf16>
    %c0_28 = arith.constant 0 : index
    %c0_29 = arith.constant 0 : index
    %44 = vector.load %arg13[%c0_28, %c0_29] : memref<64x576xbf16, #tpu.memory_space<vmem>>, vector<64x64xbf16>
    tpu.vector_store %arg13[%c0_28, %c0_29], %43 {strides = array<i32>} : memref<64x576xbf16, #tpu.memory_space<vmem>>, vector<64x64xbf16>,
    %45 = vector.extract_strided_slice %40 {offsets = [0, 1, 0], sizes = [8, 8, 64], strides = [1, 1, 1]} : vector<10x10x64xf32> to vector<8x8x64xf32>
    %46 = vector.shape_cast %45 : vector<8x8x64xf32> to vector<64x64xf32>
    %47 = arith.truncf %46 : vector<64x64xf32> to vector<64x64xbf16>
    %c0_30 = arith.constant 0 : index
    %c64 = arith.constant 64 : index
    %48 = vector.load %arg13[%c0_30, %c64] : memref<64x576xbf16, #tpu.memory_space<vmem>>, vector<64x64xbf16>
    tpu.vector_store %arg13[%c0_30, %c64], %47 {strides = array<i32>} : memref<64x576xbf16, #tpu.memory_space<vmem>>, vector<64x64xbf16>,
    %49 = vector.extract_strided_slice %40 {offsets = [0, 2, 0], sizes = [8, 8, 64], strides = [1, 1, 1]} : vector<10x10x64xf32> to vector<8x8x64xf32>
    %50 = vector.shape_cast %49 : vector<8x8x64xf32> to vector<64x64xf32>
    %51 = arith.truncf %50 : vector<64x64xf32> to vector<64x64xbf16>
    %c0_31 = arith.constant 0 : index
    %c128 = arith.constant 128 : index
    %52 = vector.load %arg13[%c0_31, %c128] : memref<64x576xbf16, #tpu.memory_space<vmem>>, vector<64x64xbf16>
    tpu.vector_store %arg13[%c0_31, %c128], %51 {strides = array<i32>} : memref<64x576xbf16, #tpu.memory_space<vmem>>, vector<64x64xbf16>,
    %53 = vector.extract_strided_slice %40 {offsets = [1, 0, 0], sizes = [8, 8, 64], strides = [1, 1, 1]} : vector<10x10x64xf32> to vector<8x8x64xf32>
    %54 = vector.shape_cast %53 : vector<8x8x64xf32> to vector<64x64xf32>
    %55 = arith.truncf %54 : vector<64x64xf32> to vector<64x64xbf16>
    %c0_32 = arith.constant 0 : index
    %c192 = arith.constant 192 : index
    %56 = vector.load %arg13[%c0_32, %c192] : memref<64x576xbf16, #tpu.memory_space<vmem>>, vector<64x64xbf16>
    tpu.vector_store %arg13[%c0_32, %c192], %55 {strides = array<i32>} : memref<64x576xbf16, #tpu.memory_space<vmem>>, vector<64x64xbf16>,
    %57 = vector.extract_strided_slice %40 {offsets = [1, 1, 0], sizes = [8, 8, 64], strides = [1, 1, 1]} : vector<10x10x64xf32> to vector<8x8x64xf32>
    %58 = vector.shape_cast %57 : vector<8x8x64xf32> to vector<64x64xf32>
    %59 = arith.truncf %58 : vector<64x64xf32> to vector<64x64xbf16>
    %c0_33 = arith.constant 0 : index
    %c256 = arith.constant 256 : index
    %60 = vector.load %arg13[%c0_33, %c256] : memref<64x576xbf16, #tpu.memory_space<vmem>>, vector<64x64xbf16>
    tpu.vector_store %arg13[%c0_33, %c256], %59 {strides = array<i32>} : memref<64x576xbf16, #tpu.memory_space<vmem>>, vector<64x64xbf16>,
    %61 = vector.extract_strided_slice %40 {offsets = [1, 2, 0], sizes = [8, 8, 64], strides = [1, 1, 1]} : vector<10x10x64xf32> to vector<8x8x64xf32>
    %62 = vector.shape_cast %61 : vector<8x8x64xf32> to vector<64x64xf32>
    %63 = arith.truncf %62 : vector<64x64xf32> to vector<64x64xbf16>
    %c0_34 = arith.constant 0 : index
    %c320 = arith.constant 320 : index
    %64 = vector.load %arg13[%c0_34, %c320] : memref<64x576xbf16, #tpu.memory_space<vmem>>, vector<64x64xbf16>
    tpu.vector_store %arg13[%c0_34, %c320], %63 {strides = array<i32>} : memref<64x576xbf16, #tpu.memory_space<vmem>>, vector<64x64xbf16>,
    %65 = vector.extract_strided_slice %40 {offsets = [2, 0, 0], sizes = [8, 8, 64], strides = [1, 1, 1]} : vector<10x10x64xf32> to vector<8x8x64xf32>
    %66 = vector.shape_cast %65 : vector<8x8x64xf32> to vector<64x64xf32>
    %67 = arith.truncf %66 : vector<64x64xf32> to vector<64x64xbf16>
    %c0_35 = arith.constant 0 : index
    %c384 = arith.constant 384 : index
    %68 = vector.load %arg13[%c0_35, %c384] : memref<64x576xbf16, #tpu.memory_space<vmem>>, vector<64x64xbf16>
    tpu.vector_store %arg13[%c0_35, %c384], %67 {strides = array<i32>} : memref<64x576xbf16, #tpu.memory_space<vmem>>, vector<64x64xbf16>,
    %69 = vector.extract_strided_slice %40 {offsets = [2, 1, 0], sizes = [8, 8, 64], strides = [1, 1, 1]} : vector<10x10x64xf32> to vector<8x8x64xf32>
    %70 = vector.shape_cast %69 : vector<8x8x64xf32> to vector<64x64xf32>
    %71 = arith.truncf %70 : vector<64x64xf32> to vector<64x64xbf16>
    %c0_36 = arith.constant 0 : index
    %c448 = arith.constant 448 : index
    %72 = vector.load %arg13[%c0_36, %c448] : memref<64x576xbf16, #tpu.memory_space<vmem>>, vector<64x64xbf16>
    tpu.vector_store %arg13[%c0_36, %c448], %71 {strides = array<i32>} : memref<64x576xbf16, #tpu.memory_space<vmem>>, vector<64x64xbf16>,
    %73 = vector.extract_strided_slice %40 {offsets = [2, 2, 0], sizes = [8, 8, 64], strides = [1, 1, 1]} : vector<10x10x64xf32> to vector<8x8x64xf32>
    %74 = vector.shape_cast %73 : vector<8x8x64xf32> to vector<64x64xf32>
    %75 = arith.truncf %74 : vector<64x64xf32> to vector<64x64xbf16>
    %c0_37 = arith.constant 0 : index
    %c512 = arith.constant 512 : index
    %76 = vector.load %arg13[%c0_37, %c512] : memref<64x576xbf16, #tpu.memory_space<vmem>>, vector<64x64xbf16>
    tpu.vector_store %arg13[%c0_37, %c512], %75 {strides = array<i32>} : memref<64x576xbf16, #tpu.memory_space<vmem>>, vector<64x64xbf16>,
    %c0_38 = arith.constant 0 : index
    %c0_39 = arith.constant 0 : index
    %77 = vector.load %arg13[%c0_38, %c0_39] : memref<64x576xbf16, #tpu.memory_space<vmem>>, vector<64x576xbf16>
    %c0_40 = arith.constant 0 : index
    %c0_41 = arith.constant 0 : index
    %78 = vector.load %arg2[%c0_40, %c0_41] : memref<576x16xbf16, #tpu.memory_space<vmem>>, vector<576x16xbf16>
    %cst_42 = arith.constant dense<0.000000e+00> : vector<64x16xf32>
    %79 = tpu.matmul %77, %78, %cst_42 {dimension_numbers = #tpu.dot_dimension_numbers<[1], [0], [0], [1], [0, 0, 1, 1], [], []>} : vector<64x576xbf16>, vector<576x16xbf16>, vector<64x16xf32> -> vector<64x16xf32>
    %80 = vector.broadcast %5 : vector<1x16xf32> to vector<64x16xf32>
    %81 = arith.addf %79, %80 : vector<64x16xf32>
    %cst_43 = arith.constant 0.000000e+00 : f32
    %82 = vector.broadcast %cst_43 : f32 to vector<64x16xf32>
    %83 = arith.maximumf %81, %82 : vector<64x16xf32>
    %84 = arith.truncf %83 : vector<64x16xf32> to vector<64x16xbf16>
    %c0_44 = arith.constant 0 : index
    %c0_45 = arith.constant 0 : index
    %85 = vector.load %arg6[%c0_44, %c0_45] : memref<16x20xbf16, #tpu.memory_space<vmem>>, vector<16x20xbf16>
    %cst_46 = arith.constant dense<0.000000e+00> : vector<64x20xf32>
    %86 = tpu.matmul %84, %85, %cst_46 {dimension_numbers = #tpu.dot_dimension_numbers<[1], [0], [0], [1], [0, 0, 1, 1], [], []>} : vector<64x16xbf16>, vector<16x20xbf16>, vector<64x20xf32> -> vector<64x20xf32>
    %87 = vector.extract_strided_slice %0 {offsets = [4, 0], sizes = [1, 20], strides = [1, 1]} : vector<6x48xf32> to vector<1x20xf32>
    %88 = vector.broadcast %87 : vector<1x20xf32> to vector<64x20xf32>
    %89 = arith.addf %86, %88 : vector<64x20xf32>
    %90 = vector.extract_strided_slice %89 {offsets = [0, 0], sizes = [64, 2], strides = [1, 1]} : vector<64x20xf32> to vector<64x2xf32>
    %91 = vector.extract_strided_slice %89 {offsets = [0, 2], sizes = [64, 2], strides = [1, 1]} : vector<64x20xf32> to vector<64x2xf32>
    %92 = vector.extract_strided_slice %89 {offsets = [0, 4], sizes = [64, 16], strides = [1, 1]} : vector<64x20xf32> to vector<64x16xf32>
    %cst_47 = arith.constant dense<0.000000e+00> : vector<64x64xf32>
    %93 = tpu.matmul %90, %91, %cst_47 {dimension_numbers = #tpu.dot_dimension_numbers<[1], [1], [0], [0], [0, 0, 1, 0], [], []>} : vector<64x2xf32>, vector<64x2xf32>, vector<64x64xf32> -> vector<64x64xf32>
    %cst_48 = arith.constant dense<0xFF800000> : vector<64xf32>
    %94 = vector.multi_reduction <maximumf>, %93, %cst_48 [1] : vector<64x64xf32> to vector<64xf32>
    %95 = vector.shape_cast %94 : vector<64xf32> to vector<64x1xf32>
    %96 = vector.broadcast %95 : vector<64x1xf32> to vector<64x64xf32>
    %97 = arith.subf %93, %96 : vector<64x64xf32>
    %98 = math.exp %97 : vector<64x64xf32>
    %cst_49 = arith.constant dense<0.000000e+00> : vector<64xf32>
    %99 = vector.multi_reduction <add>, %98, %cst_49 [1] : vector<64x64xf32> to vector<64xf32>
    %100 = vector.shape_cast %99 : vector<64xf32> to vector<64x1xf32>
    %101 = tpu.reciprocal %100 {approx = true} : vector<64x1xf32> -> vector<64x1xf32>
    %102 = vector.broadcast %101 : vector<64x1xf32> to vector<64x64xf32>
    %103 = arith.mulf %98, %102 : vector<64x64xf32>
    %cst_50 = arith.constant dense<0.000000e+00> : vector<64x16xf32>
    %104 = tpu.matmul %103, %92, %cst_50 {dimension_numbers = #tpu.dot_dimension_numbers<[1], [0], [0], [1], [0, 0, 1, 1], [], []>} : vector<64x64xf32>, vector<64x16xf32>, vector<64x16xf32> -> vector<64x16xf32>
    %105 = vector.broadcast %1 : f32 to vector<64x16xf32>
    %106 = arith.mulf %105, %104 : vector<64x16xf32>
    %107 = arith.addf %106, %83 : vector<64x16xf32>
    %108 = vector.extract_strided_slice %0 {offsets = [2, 0], sizes = [1, 16], strides = [1, 1]} : vector<6x48xf32> to vector<1x16xf32>
    %cst_51 = arith.constant 0.000000e+00 : f32
    %109 = vector.broadcast %cst_51 : f32 to vector<10x10x16xf32>
    %c0_52 = arith.constant 0 : index
    %c0_53 = arith.constant 0 : index
    %c0_54 = arith.constant 0 : index
    %110 = vector.load %arg14[%c0_52, %c0_53, %c0_54] : memref<10x10x16xf32, #tpu.memory_space<vmem>>, vector<10x10x16xf32>
    tpu.vector_store %arg14[%c0_52, %c0_53, %c0_54], %109 {strides = array<i32>} : memref<10x10x16xf32, #tpu.memory_space<vmem>>, vector<10x10x16xf32>,
    %111 = vector.extract_strided_slice %107 {offsets = [0, 0], sizes = [8, 16], strides = [1, 1]} : vector<64x16xf32> to vector<8x16xf32>
    %c1_55 = arith.constant 1 : index
    %c1_56 = arith.constant 1 : index
    %c0_57 = arith.constant 0 : index
    %112 = vector.load %arg14[%c1_55, %c1_56, %c0_57] : memref<10x10x16xf32, #tpu.memory_space<vmem>>, vector<1x8x16xf32>
    %113 = vector.shape_cast %112 : vector<1x8x16xf32> to vector<8x16xf32>
    %114 = vector.shape_cast %111 : vector<8x16xf32> to vector<1x8x16xf32>
    tpu.vector_store %arg14[%c1_55, %c1_56, %c0_57], %114 {strides = array<i32>} : memref<10x10x16xf32, #tpu.memory_space<vmem>>, vector<1x8x16xf32>,
    %115 = vector.extract_strided_slice %107 {offsets = [8, 0], sizes = [8, 16], strides = [1, 1]} : vector<64x16xf32> to vector<8x16xf32>
    %c2_58 = arith.constant 2 : index
    %c1_59 = arith.constant 1 : index
    %c0_60 = arith.constant 0 : index
    %116 = vector.load %arg14[%c2_58, %c1_59, %c0_60] : memref<10x10x16xf32, #tpu.memory_space<vmem>>, vector<1x8x16xf32>
    %117 = vector.shape_cast %116 : vector<1x8x16xf32> to vector<8x16xf32>
    %118 = vector.shape_cast %115 : vector<8x16xf32> to vector<1x8x16xf32>
    tpu.vector_store %arg14[%c2_58, %c1_59, %c0_60], %118 {strides = array<i32>} : memref<10x10x16xf32, #tpu.memory_space<vmem>>, vector<1x8x16xf32>,
    %119 = vector.extract_strided_slice %107 {offsets = [16, 0], sizes = [8, 16], strides = [1, 1]} : vector<64x16xf32> to vector<8x16xf32>
    %c3_61 = arith.constant 3 : index
    %c1_62 = arith.constant 1 : index
    %c0_63 = arith.constant 0 : index
    %120 = vector.load %arg14[%c3_61, %c1_62, %c0_63] : memref<10x10x16xf32, #tpu.memory_space<vmem>>, vector<1x8x16xf32>
    %121 = vector.shape_cast %120 : vector<1x8x16xf32> to vector<8x16xf32>
    %122 = vector.shape_cast %119 : vector<8x16xf32> to vector<1x8x16xf32>
    tpu.vector_store %arg14[%c3_61, %c1_62, %c0_63], %122 {strides = array<i32>} : memref<10x10x16xf32, #tpu.memory_space<vmem>>, vector<1x8x16xf32>,
    %123 = vector.extract_strided_slice %107 {offsets = [24, 0], sizes = [8, 16], strides = [1, 1]} : vector<64x16xf32> to vector<8x16xf32>
    %c4_64 = arith.constant 4 : index
    %c1_65 = arith.constant 1 : index
    %c0_66 = arith.constant 0 : index
    %124 = vector.load %arg14[%c4_64, %c1_65, %c0_66] : memref<10x10x16xf32, #tpu.memory_space<vmem>>, vector<1x8x16xf32>
    %125 = vector.shape_cast %124 : vector<1x8x16xf32> to vector<8x16xf32>
    %126 = vector.shape_cast %123 : vector<8x16xf32> to vector<1x8x16xf32>
    tpu.vector_store %arg14[%c4_64, %c1_65, %c0_66], %126 {strides = array<i32>} : memref<10x10x16xf32, #tpu.memory_space<vmem>>, vector<1x8x16xf32>,
    %127 = vector.extract_strided_slice %107 {offsets = [32, 0], sizes = [8, 16], strides = [1, 1]} : vector<64x16xf32> to vector<8x16xf32>
    %c5_67 = arith.constant 5 : index
    %c1_68 = arith.constant 1 : index
    %c0_69 = arith.constant 0 : index
    %128 = vector.load %arg14[%c5_67, %c1_68, %c0_69] : memref<10x10x16xf32, #tpu.memory_space<vmem>>, vector<1x8x16xf32>
    %129 = vector.shape_cast %128 : vector<1x8x16xf32> to vector<8x16xf32>
    %130 = vector.shape_cast %127 : vector<8x16xf32> to vector<1x8x16xf32>
    tpu.vector_store %arg14[%c5_67, %c1_68, %c0_69], %130 {strides = array<i32>} : memref<10x10x16xf32, #tpu.memory_space<vmem>>, vector<1x8x16xf32>,
    %131 = vector.extract_strided_slice %107 {offsets = [40, 0], sizes = [8, 16], strides = [1, 1]} : vector<64x16xf32> to vector<8x16xf32>
    %c6_70 = arith.constant 6 : index
    %c1_71 = arith.constant 1 : index
    %c0_72 = arith.constant 0 : index
    %132 = vector.load %arg14[%c6_70, %c1_71, %c0_72] : memref<10x10x16xf32, #tpu.memory_space<vmem>>, vector<1x8x16xf32>
    %133 = vector.shape_cast %132 : vector<1x8x16xf32> to vector<8x16xf32>
    %134 = vector.shape_cast %131 : vector<8x16xf32> to vector<1x8x16xf32>
    tpu.vector_store %arg14[%c6_70, %c1_71, %c0_72], %134 {strides = array<i32>} : memref<10x10x16xf32, #tpu.memory_space<vmem>>, vector<1x8x16xf32>,
    %135 = vector.extract_strided_slice %107 {offsets = [48, 0], sizes = [8, 16], strides = [1, 1]} : vector<64x16xf32> to vector<8x16xf32>
    %c7_73 = arith.constant 7 : index
    %c1_74 = arith.constant 1 : index
    %c0_75 = arith.constant 0 : index
    %136 = vector.load %arg14[%c7_73, %c1_74, %c0_75] : memref<10x10x16xf32, #tpu.memory_space<vmem>>, vector<1x8x16xf32>
    %137 = vector.shape_cast %136 : vector<1x8x16xf32> to vector<8x16xf32>
    %138 = vector.shape_cast %135 : vector<8x16xf32> to vector<1x8x16xf32>
    tpu.vector_store %arg14[%c7_73, %c1_74, %c0_75], %138 {strides = array<i32>} : memref<10x10x16xf32, #tpu.memory_space<vmem>>, vector<1x8x16xf32>,
    %139 = vector.extract_strided_slice %107 {offsets = [56, 0], sizes = [8, 16], strides = [1, 1]} : vector<64x16xf32> to vector<8x16xf32>
    %c8_76 = arith.constant 8 : index
    %c1_77 = arith.constant 1 : index
    %c0_78 = arith.constant 0 : index
    %140 = vector.load %arg14[%c8_76, %c1_77, %c0_78] : memref<10x10x16xf32, #tpu.memory_space<vmem>>, vector<1x8x16xf32>
    %141 = vector.shape_cast %140 : vector<1x8x16xf32> to vector<8x16xf32>
    %142 = vector.shape_cast %139 : vector<8x16xf32> to vector<1x8x16xf32>
    tpu.vector_store %arg14[%c8_76, %c1_77, %c0_78], %142 {strides = array<i32>} : memref<10x10x16xf32, #tpu.memory_space<vmem>>, vector<1x8x16xf32>,
    %c0_79 = arith.constant 0 : index
    %c0_80 = arith.constant 0 : index
    %c0_81 = arith.constant 0 : index
    %143 = vector.load %arg14[%c0_79, %c0_80, %c0_81] : memref<10x10x16xf32, #tpu.memory_space<vmem>>, vector<10x10x16xf32>
    %144 = vector.extract_strided_slice %143 {offsets = [0, 0, 0], sizes = [8, 8, 16], strides = [1, 1, 1]} : vector<10x10x16xf32> to vector<8x8x16xf32>
    %145 = vector.shape_cast %144 : vector<8x8x16xf32> to vector<64x16xf32>
    %146 = arith.truncf %145 : vector<64x16xf32> to vector<64x16xbf16>
    %c0_82 = arith.constant 0 : index
    %c0_83 = arith.constant 0 : index
    %147 = vector.load %arg15[%c0_82, %c0_83] : memref<64x144xbf16, #tpu.memory_space<vmem>>, vector<64x16xbf16>
    tpu.vector_store %arg15[%c0_82, %c0_83], %146 {strides = array<i32>} : memref<64x144xbf16, #tpu.memory_space<vmem>>, vector<64x16xbf16>,
    %148 = vector.extract_strided_slice %143 {offsets = [0, 1, 0], sizes = [8, 8, 16], strides = [1, 1, 1]} : vector<10x10x16xf32> to vector<8x8x16xf32>
    %149 = vector.shape_cast %148 : vector<8x8x16xf32> to vector<64x16xf32>
    %150 = arith.truncf %149 : vector<64x16xf32> to vector<64x16xbf16>
    %c0_84 = arith.constant 0 : index
    %c16 = arith.constant 16 : index
    %151 = vector.load %arg15[%c0_84, %c16] : memref<64x144xbf16, #tpu.memory_space<vmem>>, vector<64x16xbf16>
    tpu.vector_store %arg15[%c0_84, %c16], %150 {strides = array<i32>} : memref<64x144xbf16, #tpu.memory_space<vmem>>, vector<64x16xbf16>,
    %152 = vector.extract_strided_slice %143 {offsets = [0, 2, 0], sizes = [8, 8, 16], strides = [1, 1, 1]} : vector<10x10x16xf32> to vector<8x8x16xf32>
    %153 = vector.shape_cast %152 : vector<8x8x16xf32> to vector<64x16xf32>
    %154 = arith.truncf %153 : vector<64x16xf32> to vector<64x16xbf16>
    %c0_85 = arith.constant 0 : index
    %c32 = arith.constant 32 : index
    %155 = vector.load %arg15[%c0_85, %c32] : memref<64x144xbf16, #tpu.memory_space<vmem>>, vector<64x16xbf16>
    tpu.vector_store %arg15[%c0_85, %c32], %154 {strides = array<i32>} : memref<64x144xbf16, #tpu.memory_space<vmem>>, vector<64x16xbf16>,
    %156 = vector.extract_strided_slice %143 {offsets = [1, 0, 0], sizes = [8, 8, 16], strides = [1, 1, 1]} : vector<10x10x16xf32> to vector<8x8x16xf32>
    %157 = vector.shape_cast %156 : vector<8x8x16xf32> to vector<64x16xf32>
    %158 = arith.truncf %157 : vector<64x16xf32> to vector<64x16xbf16>
    %c0_86 = arith.constant 0 : index
    %c48 = arith.constant 48 : index
    %159 = vector.load %arg15[%c0_86, %c48] : memref<64x144xbf16, #tpu.memory_space<vmem>>, vector<64x16xbf16>
    tpu.vector_store %arg15[%c0_86, %c48], %158 {strides = array<i32>} : memref<64x144xbf16, #tpu.memory_space<vmem>>, vector<64x16xbf16>,
    %160 = vector.extract_strided_slice %143 {offsets = [1, 1, 0], sizes = [8, 8, 16], strides = [1, 1, 1]} : vector<10x10x16xf32> to vector<8x8x16xf32>
    %161 = vector.shape_cast %160 : vector<8x8x16xf32> to vector<64x16xf32>
    %162 = arith.truncf %161 : vector<64x16xf32> to vector<64x16xbf16>
    %c0_87 = arith.constant 0 : index
    %c64_88 = arith.constant 64 : index
    %163 = vector.load %arg15[%c0_87, %c64_88] : memref<64x144xbf16, #tpu.memory_space<vmem>>, vector<64x16xbf16>
    tpu.vector_store %arg15[%c0_87, %c64_88], %162 {strides = array<i32>} : memref<64x144xbf16, #tpu.memory_space<vmem>>, vector<64x16xbf16>,
    %164 = vector.extract_strided_slice %143 {offsets = [1, 2, 0], sizes = [8, 8, 16], strides = [1, 1, 1]} : vector<10x10x16xf32> to vector<8x8x16xf32>
    %165 = vector.shape_cast %164 : vector<8x8x16xf32> to vector<64x16xf32>
    %166 = arith.truncf %165 : vector<64x16xf32> to vector<64x16xbf16>
    %c0_89 = arith.constant 0 : index
    %c80 = arith.constant 80 : index
    %167 = vector.load %arg15[%c0_89, %c80] : memref<64x144xbf16, #tpu.memory_space<vmem>>, vector<64x16xbf16>
    tpu.vector_store %arg15[%c0_89, %c80], %166 {strides = array<i32>} : memref<64x144xbf16, #tpu.memory_space<vmem>>, vector<64x16xbf16>,
    %168 = vector.extract_strided_slice %143 {offsets = [2, 0, 0], sizes = [8, 8, 16], strides = [1, 1, 1]} : vector<10x10x16xf32> to vector<8x8x16xf32>
    %169 = vector.shape_cast %168 : vector<8x8x16xf32> to vector<64x16xf32>
    %170 = arith.truncf %169 : vector<64x16xf32> to vector<64x16xbf16>
    %c0_90 = arith.constant 0 : index
    %c96 = arith.constant 96 : index
    %171 = vector.load %arg15[%c0_90, %c96] : memref<64x144xbf16, #tpu.memory_space<vmem>>, vector<64x16xbf16>
    tpu.vector_store %arg15[%c0_90, %c96], %170 {strides = array<i32>} : memref<64x144xbf16, #tpu.memory_space<vmem>>, vector<64x16xbf16>,
    %172 = vector.extract_strided_slice %143 {offsets = [2, 1, 0], sizes = [8, 8, 16], strides = [1, 1, 1]} : vector<10x10x16xf32> to vector<8x8x16xf32>
    %173 = vector.shape_cast %172 : vector<8x8x16xf32> to vector<64x16xf32>
    %174 = arith.truncf %173 : vector<64x16xf32> to vector<64x16xbf16>
    %c0_91 = arith.constant 0 : index
    %c112 = arith.constant 112 : index
    %175 = vector.load %arg15[%c0_91, %c112] : memref<64x144xbf16, #tpu.memory_space<vmem>>, vector<64x16xbf16>
    tpu.vector_store %arg15[%c0_91, %c112], %174 {strides = array<i32>} : memref<64x144xbf16, #tpu.memory_space<vmem>>, vector<64x16xbf16>,
    %176 = vector.extract_strided_slice %143 {offsets = [2, 2, 0], sizes = [8, 8, 16], strides = [1, 1, 1]} : vector<10x10x16xf32> to vector<8x8x16xf32>
    %177 = vector.shape_cast %176 : vector<8x8x16xf32> to vector<64x16xf32>
    %178 = arith.truncf %177 : vector<64x16xf32> to vector<64x16xbf16>
    %c0_92 = arith.constant 0 : index
    %c128_93 = arith.constant 128 : index
    %179 = vector.load %arg15[%c0_92, %c128_93] : memref<64x144xbf16, #tpu.memory_space<vmem>>, vector<64x16xbf16>
    tpu.vector_store %arg15[%c0_92, %c128_93], %178 {strides = array<i32>} : memref<64x144xbf16, #tpu.memory_space<vmem>>, vector<64x16xbf16>,
    %c0_94 = arith.constant 0 : index
    %c0_95 = arith.constant 0 : index
    %180 = vector.load %arg15[%c0_94, %c0_95] : memref<64x144xbf16, #tpu.memory_space<vmem>>, vector<64x144xbf16>
    %c0_96 = arith.constant 0 : index
    %c0_97 = arith.constant 0 : index
    %181 = vector.load %arg4[%c0_96, %c0_97] : memref<144x16xbf16, #tpu.memory_space<vmem>>, vector<144x16xbf16>
    %cst_98 = arith.constant dense<0.000000e+00> : vector<64x16xf32>
    %182 = tpu.matmul %180, %181, %cst_98 {dimension_numbers = #tpu.dot_dimension_numbers<[1], [0], [0], [1], [0, 0, 1, 1], [], []>} : vector<64x144xbf16>, vector<144x16xbf16>, vector<64x16xf32> -> vector<64x16xf32>
    %183 = vector.broadcast %108 : vector<1x16xf32> to vector<64x16xf32>
    %184 = arith.addf %182, %183 : vector<64x16xf32>
    %cst_99 = arith.constant 0.000000e+00 : f32
    %185 = vector.broadcast %cst_99 : f32 to vector<64x16xf32>
    %186 = arith.maximumf %184, %185 : vector<64x16xf32>
    %187 = vector.extract_strided_slice %0 {offsets = [1, 0], sizes = [1, 16], strides = [1, 1]} : vector<6x48xf32> to vector<1x16xf32>
    %cst_100 = arith.constant 0.000000e+00 : f32
    %188 = vector.broadcast %cst_100 : f32 to vector<10x10x64xf32>
    %c0_101 = arith.constant 0 : index
    %c0_102 = arith.constant 0 : index
    %c0_103 = arith.constant 0 : index
    %189 = vector.load %arg12[%c0_101, %c0_102, %c0_103] : memref<10x10x64xf32, #tpu.memory_space<vmem>>, vector<10x10x64xf32>
    tpu.vector_store %arg12[%c0_101, %c0_102, %c0_103], %188 {strides = array<i32>} : memref<10x10x64xf32, #tpu.memory_space<vmem>>, vector<10x10x64xf32>,
    %190 = vector.extract_strided_slice %4 {offsets = [0, 0], sizes = [8, 64], strides = [1, 1]} : vector<64x64xf32> to vector<8x64xf32>
    %c1_104 = arith.constant 1 : index
    %c1_105 = arith.constant 1 : index
    %c0_106 = arith.constant 0 : index
    %191 = vector.load %arg12[%c1_104, %c1_105, %c0_106] : memref<10x10x64xf32, #tpu.memory_space<vmem>>, vector<1x8x64xf32>
    %192 = vector.shape_cast %191 : vector<1x8x64xf32> to vector<8x64xf32>
    %193 = vector.shape_cast %190 : vector<8x64xf32> to vector<1x8x64xf32>
    tpu.vector_store %arg12[%c1_104, %c1_105, %c0_106], %193 {strides = array<i32>} : memref<10x10x64xf32, #tpu.memory_space<vmem>>, vector<1x8x64xf32>,
    %194 = vector.extract_strided_slice %4 {offsets = [8, 0], sizes = [8, 64], strides = [1, 1]} : vector<64x64xf32> to vector<8x64xf32>
    %c2_107 = arith.constant 2 : index
    %c1_108 = arith.constant 1 : index
    %c0_109 = arith.constant 0 : index
    %195 = vector.load %arg12[%c2_107, %c1_108, %c0_109] : memref<10x10x64xf32, #tpu.memory_space<vmem>>, vector<1x8x64xf32>
    %196 = vector.shape_cast %195 : vector<1x8x64xf32> to vector<8x64xf32>
    %197 = vector.shape_cast %194 : vector<8x64xf32> to vector<1x8x64xf32>
    tpu.vector_store %arg12[%c2_107, %c1_108, %c0_109], %197 {strides = array<i32>} : memref<10x10x64xf32, #tpu.memory_space<vmem>>, vector<1x8x64xf32>,
    %198 = vector.extract_strided_slice %4 {offsets = [16, 0], sizes = [8, 64], strides = [1, 1]} : vector<64x64xf32> to vector<8x64xf32>
    %c3_110 = arith.constant 3 : index
    %c1_111 = arith.constant 1 : index
    %c0_112 = arith.constant 0 : index
    %199 = vector.load %arg12[%c3_110, %c1_111, %c0_112] : memref<10x10x64xf32, #tpu.memory_space<vmem>>, vector<1x8x64xf32>
    %200 = vector.shape_cast %199 : vector<1x8x64xf32> to vector<8x64xf32>
    %201 = vector.shape_cast %198 : vector<8x64xf32> to vector<1x8x64xf32>
    tpu.vector_store %arg12[%c3_110, %c1_111, %c0_112], %201 {strides = array<i32>} : memref<10x10x64xf32, #tpu.memory_space<vmem>>, vector<1x8x64xf32>,
    %202 = vector.extract_strided_slice %4 {offsets = [24, 0], sizes = [8, 64], strides = [1, 1]} : vector<64x64xf32> to vector<8x64xf32>
    %c4_113 = arith.constant 4 : index
    %c1_114 = arith.constant 1 : index
    %c0_115 = arith.constant 0 : index
    %203 = vector.load %arg12[%c4_113, %c1_114, %c0_115] : memref<10x10x64xf32, #tpu.memory_space<vmem>>, vector<1x8x64xf32>
    %204 = vector.shape_cast %203 : vector<1x8x64xf32> to vector<8x64xf32>
    %205 = vector.shape_cast %202 : vector<8x64xf32> to vector<1x8x64xf32>
    tpu.vector_store %arg12[%c4_113, %c1_114, %c0_115], %205 {strides = array<i32>} : memref<10x10x64xf32, #tpu.memory_space<vmem>>, vector<1x8x64xf32>,
    %206 = vector.extract_strided_slice %4 {offsets = [32, 0], sizes = [8, 64], strides = [1, 1]} : vector<64x64xf32> to vector<8x64xf32>
    %c5_116 = arith.constant 5 : index
    %c1_117 = arith.constant 1 : index
    %c0_118 = arith.constant 0 : index
    %207 = vector.load %arg12[%c5_116, %c1_117, %c0_118] : memref<10x10x64xf32, #tpu.memory_space<vmem>>, vector<1x8x64xf32>
    %208 = vector.shape_cast %207 : vector<1x8x64xf32> to vector<8x64xf32>
    %209 = vector.shape_cast %206 : vector<8x64xf32> to vector<1x8x64xf32>
    tpu.vector_store %arg12[%c5_116, %c1_117, %c0_118], %209 {strides = array<i32>} : memref<10x10x64xf32, #tpu.memory_space<vmem>>, vector<1x8x64xf32>,
    %210 = vector.extract_strided_slice %4 {offsets = [40, 0], sizes = [8, 64], strides = [1, 1]} : vector<64x64xf32> to vector<8x64xf32>
    %c6_119 = arith.constant 6 : index
    %c1_120 = arith.constant 1 : index
    %c0_121 = arith.constant 0 : index
    %211 = vector.load %arg12[%c6_119, %c1_120, %c0_121] : memref<10x10x64xf32, #tpu.memory_space<vmem>>, vector<1x8x64xf32>
    %212 = vector.shape_cast %211 : vector<1x8x64xf32> to vector<8x64xf32>
    %213 = vector.shape_cast %210 : vector<8x64xf32> to vector<1x8x64xf32>
    tpu.vector_store %arg12[%c6_119, %c1_120, %c0_121], %213 {strides = array<i32>} : memref<10x10x64xf32, #tpu.memory_space<vmem>>, vector<1x8x64xf32>,
    %214 = vector.extract_strided_slice %4 {offsets = [48, 0], sizes = [8, 64], strides = [1, 1]} : vector<64x64xf32> to vector<8x64xf32>
    %c7_122 = arith.constant 7 : index
    %c1_123 = arith.constant 1 : index
    %c0_124 = arith.constant 0 : index
    %215 = vector.load %arg12[%c7_122, %c1_123, %c0_124] : memref<10x10x64xf32, #tpu.memory_space<vmem>>, vector<1x8x64xf32>
    %216 = vector.shape_cast %215 : vector<1x8x64xf32> to vector<8x64xf32>
    %217 = vector.shape_cast %214 : vector<8x64xf32> to vector<1x8x64xf32>
    tpu.vector_store %arg12[%c7_122, %c1_123, %c0_124], %217 {strides = array<i32>} : memref<10x10x64xf32, #tpu.memory_space<vmem>>, vector<1x8x64xf32>,
    %218 = vector.extract_strided_slice %4 {offsets = [56, 0], sizes = [8, 64], strides = [1, 1]} : vector<64x64xf32> to vector<8x64xf32>
    %c8_125 = arith.constant 8 : index
    %c1_126 = arith.constant 1 : index
    %c0_127 = arith.constant 0 : index
    %219 = vector.load %arg12[%c8_125, %c1_126, %c0_127] : memref<10x10x64xf32, #tpu.memory_space<vmem>>, vector<1x8x64xf32>
    %220 = vector.shape_cast %219 : vector<1x8x64xf32> to vector<8x64xf32>
    %221 = vector.shape_cast %218 : vector<8x64xf32> to vector<1x8x64xf32>
    tpu.vector_store %arg12[%c8_125, %c1_126, %c0_127], %221 {strides = array<i32>} : memref<10x10x64xf32, #tpu.memory_space<vmem>>, vector<1x8x64xf32>,
    %c0_128 = arith.constant 0 : index
    %c0_129 = arith.constant 0 : index
    %c0_130 = arith.constant 0 : index
    %222 = vector.load %arg12[%c0_128, %c0_129, %c0_130] : memref<10x10x64xf32, #tpu.memory_space<vmem>>, vector<10x10x64xf32>
    %223 = vector.extract_strided_slice %222 {offsets = [0, 0, 0], sizes = [8, 8, 64], strides = [1, 1, 1]} : vector<10x10x64xf32> to vector<8x8x64xf32>
    %224 = vector.shape_cast %223 : vector<8x8x64xf32> to vector<64x64xf32>
    %225 = arith.truncf %224 : vector<64x64xf32> to vector<64x64xbf16>
    %c0_131 = arith.constant 0 : index
    %c0_132 = arith.constant 0 : index
    %226 = vector.load %arg13[%c0_131, %c0_132] : memref<64x576xbf16, #tpu.memory_space<vmem>>, vector<64x64xbf16>
    tpu.vector_store %arg13[%c0_131, %c0_132], %225 {strides = array<i32>} : memref<64x576xbf16, #tpu.memory_space<vmem>>, vector<64x64xbf16>,
    %227 = vector.extract_strided_slice %222 {offsets = [0, 1, 0], sizes = [8, 8, 64], strides = [1, 1, 1]} : vector<10x10x64xf32> to vector<8x8x64xf32>
    %228 = vector.shape_cast %227 : vector<8x8x64xf32> to vector<64x64xf32>
    %229 = arith.truncf %228 : vector<64x64xf32> to vector<64x64xbf16>
    %c0_133 = arith.constant 0 : index
    %c64_134 = arith.constant 64 : index
    %230 = vector.load %arg13[%c0_133, %c64_134] : memref<64x576xbf16, #tpu.memory_space<vmem>>, vector<64x64xbf16>
    tpu.vector_store %arg13[%c0_133, %c64_134], %229 {strides = array<i32>} : memref<64x576xbf16, #tpu.memory_space<vmem>>, vector<64x64xbf16>,
    %231 = vector.extract_strided_slice %222 {offsets = [0, 2, 0], sizes = [8, 8, 64], strides = [1, 1, 1]} : vector<10x10x64xf32> to vector<8x8x64xf32>
    %232 = vector.shape_cast %231 : vector<8x8x64xf32> to vector<64x64xf32>
    %233 = arith.truncf %232 : vector<64x64xf32> to vector<64x64xbf16>
    %c0_135 = arith.constant 0 : index
    %c128_136 = arith.constant 128 : index
    %234 = vector.load %arg13[%c0_135, %c128_136] : memref<64x576xbf16, #tpu.memory_space<vmem>>, vector<64x64xbf16>
    tpu.vector_store %arg13[%c0_135, %c128_136], %233 {strides = array<i32>} : memref<64x576xbf16, #tpu.memory_space<vmem>>, vector<64x64xbf16>,
    %235 = vector.extract_strided_slice %222 {offsets = [1, 0, 0], sizes = [8, 8, 64], strides = [1, 1, 1]} : vector<10x10x64xf32> to vector<8x8x64xf32>
    %236 = vector.shape_cast %235 : vector<8x8x64xf32> to vector<64x64xf32>
    %237 = arith.truncf %236 : vector<64x64xf32> to vector<64x64xbf16>
    %c0_137 = arith.constant 0 : index
    %c192_138 = arith.constant 192 : index
    %238 = vector.load %arg13[%c0_137, %c192_138] : memref<64x576xbf16, #tpu.memory_space<vmem>>, vector<64x64xbf16>
    tpu.vector_store %arg13[%c0_137, %c192_138], %237 {strides = array<i32>} : memref<64x576xbf16, #tpu.memory_space<vmem>>, vector<64x64xbf16>,
    %239 = vector.extract_strided_slice %222 {offsets = [1, 1, 0], sizes = [8, 8, 64], strides = [1, 1, 1]} : vector<10x10x64xf32> to vector<8x8x64xf32>
    %240 = vector.shape_cast %239 : vector<8x8x64xf32> to vector<64x64xf32>
    %241 = arith.truncf %240 : vector<64x64xf32> to vector<64x64xbf16>
    %c0_139 = arith.constant 0 : index
    %c256_140 = arith.constant 256 : index
    %242 = vector.load %arg13[%c0_139, %c256_140] : memref<64x576xbf16, #tpu.memory_space<vmem>>, vector<64x64xbf16>
    tpu.vector_store %arg13[%c0_139, %c256_140], %241 {strides = array<i32>} : memref<64x576xbf16, #tpu.memory_space<vmem>>, vector<64x64xbf16>,
    %243 = vector.extract_strided_slice %222 {offsets = [1, 2, 0], sizes = [8, 8, 64], strides = [1, 1, 1]} : vector<10x10x64xf32> to vector<8x8x64xf32>
    %244 = vector.shape_cast %243 : vector<8x8x64xf32> to vector<64x64xf32>
    %245 = arith.truncf %244 : vector<64x64xf32> to vector<64x64xbf16>
    %c0_141 = arith.constant 0 : index
    %c320_142 = arith.constant 320 : index
    %246 = vector.load %arg13[%c0_141, %c320_142] : memref<64x576xbf16, #tpu.memory_space<vmem>>, vector<64x64xbf16>
    tpu.vector_store %arg13[%c0_141, %c320_142], %245 {strides = array<i32>} : memref<64x576xbf16, #tpu.memory_space<vmem>>, vector<64x64xbf16>,
    %247 = vector.extract_strided_slice %222 {offsets = [2, 0, 0], sizes = [8, 8, 64], strides = [1, 1, 1]} : vector<10x10x64xf32> to vector<8x8x64xf32>
    %248 = vector.shape_cast %247 : vector<8x8x64xf32> to vector<64x64xf32>
    %249 = arith.truncf %248 : vector<64x64xf32> to vector<64x64xbf16>
    %c0_143 = arith.constant 0 : index
    %c384_144 = arith.constant 384 : index
    %250 = vector.load %arg13[%c0_143, %c384_144] : memref<64x576xbf16, #tpu.memory_space<vmem>>, vector<64x64xbf16>
    tpu.vector_store %arg13[%c0_143, %c384_144], %249 {strides = array<i32>} : memref<64x576xbf16, #tpu.memory_space<vmem>>, vector<64x64xbf16>,
    %251 = vector.extract_strided_slice %222 {offsets = [2, 1, 0], sizes = [8, 8, 64], strides = [1, 1, 1]} : vector<10x10x64xf32> to vector<8x8x64xf32>
    %252 = vector.shape_cast %251 : vector<8x8x64xf32> to vector<64x64xf32>
    %253 = arith.truncf %252 : vector<64x64xf32> to vector<64x64xbf16>
    %c0_145 = arith.constant 0 : index
    %c448_146 = arith.constant 448 : index
    %254 = vector.load %arg13[%c0_145, %c448_146] : memref<64x576xbf16, #tpu.memory_space<vmem>>, vector<64x64xbf16>
    tpu.vector_store %arg13[%c0_145, %c448_146], %253 {strides = array<i32>} : memref<64x576xbf16, #tpu.memory_space<vmem>>, vector<64x64xbf16>,
    %255 = vector.extract_strided_slice %222 {offsets = [2, 2, 0], sizes = [8, 8, 64], strides = [1, 1, 1]} : vector<10x10x64xf32> to vector<8x8x64xf32>
    %256 = vector.shape_cast %255 : vector<8x8x64xf32> to vector<64x64xf32>
    %257 = arith.truncf %256 : vector<64x64xf32> to vector<64x64xbf16>
    %c0_147 = arith.constant 0 : index
    %c512_148 = arith.constant 512 : index
    %258 = vector.load %arg13[%c0_147, %c512_148] : memref<64x576xbf16, #tpu.memory_space<vmem>>, vector<64x64xbf16>
    tpu.vector_store %arg13[%c0_147, %c512_148], %257 {strides = array<i32>} : memref<64x576xbf16, #tpu.memory_space<vmem>>, vector<64x64xbf16>,
    %c0_149 = arith.constant 0 : index
    %c0_150 = arith.constant 0 : index
    %259 = vector.load %arg13[%c0_149, %c0_150] : memref<64x576xbf16, #tpu.memory_space<vmem>>, vector<64x576xbf16>
    %c0_151 = arith.constant 0 : index
    %c0_152 = arith.constant 0 : index
    %260 = vector.load %arg3[%c0_151, %c0_152] : memref<576x16xbf16, #tpu.memory_space<vmem>>, vector<576x16xbf16>
    %cst_153 = arith.constant dense<0.000000e+00> : vector<64x16xf32>
    %261 = tpu.matmul %259, %260, %cst_153 {dimension_numbers = #tpu.dot_dimension_numbers<[1], [0], [0], [1], [0, 0, 1, 1], [], []>} : vector<64x576xbf16>, vector<576x16xbf16>, vector<64x16xf32> -> vector<64x16xf32>
    %262 = vector.broadcast %187 : vector<1x16xf32> to vector<64x16xf32>
    %263 = arith.addf %261, %262 : vector<64x16xf32>
    %cst_154 = arith.constant 0.000000e+00 : f32
    %264 = vector.broadcast %cst_154 : f32 to vector<64x16xf32>
    %265 = arith.maximumf %263, %264 : vector<64x16xf32>
    %cst_155 = arith.constant dense<0.000000e+00> : vector<16x16xf32>
    %266 = tpu.matmul %265, %265, %cst_155 {dimension_numbers = #tpu.dot_dimension_numbers<[0], [0], [1], [1], [0, 1, 1, 1], [], []>} : vector<64x16xf32>, vector<64x16xf32>, vector<16x16xf32> -> vector<16x16xf32>
    %cst_156 = arith.constant dense<0xFF800000> : vector<16xf32>
    %267 = vector.multi_reduction <maximumf>, %266, %cst_156 [1] : vector<16x16xf32> to vector<16xf32>
    %268 = vector.shape_cast %267 : vector<16xf32> to vector<16x1xf32>
    %269 = vector.broadcast %268 : vector<16x1xf32> to vector<16x16xf32>
    %270 = arith.subf %269, %266 : vector<16x16xf32>
    %cst_157 = arith.constant dense<0xFF800000> : vector<16xf32>
    %271 = vector.multi_reduction <maximumf>, %270, %cst_157 [1] : vector<16x16xf32> to vector<16xf32>
    %272 = vector.shape_cast %271 : vector<16xf32> to vector<16x1xf32>
    %273 = vector.broadcast %272 : vector<16x1xf32> to vector<16x16xf32>
    %274 = arith.subf %270, %273 : vector<16x16xf32>
    %275 = math.exp %274 : vector<16x16xf32>
    %cst_158 = arith.constant dense<0.000000e+00> : vector<16xf32>
    %276 = vector.multi_reduction <add>, %275, %cst_158 [1] : vector<16x16xf32> to vector<16xf32>
    %277 = vector.shape_cast %276 : vector<16xf32> to vector<16x1xf32>
    %278 = tpu.reciprocal %277 {approx = true} : vector<16x1xf32> -> vector<16x1xf32>
    %279 = vector.broadcast %278 : vector<16x1xf32> to vector<16x16xf32>
    %280 = arith.mulf %275, %279 : vector<16x16xf32>
    %cst_159 = arith.constant dense<0.000000e+00> : vector<64x16xf32>
    %281 = tpu.matmul %265, %280, %cst_159 {dimension_numbers = #tpu.dot_dimension_numbers<[1], [1], [0], [0], [0, 0, 1, 0], [], []>} : vector<64x16xf32>, vector<16x16xf32>, vector<64x16xf32> -> vector<64x16xf32>
    %282 = vector.broadcast %2 : f32 to vector<64x16xf32>
    %283 = arith.mulf %282, %281 : vector<64x16xf32>
    %284 = arith.addf %283, %265 : vector<64x16xf32>
    %285 = vector.extract_strided_slice %0 {offsets = [3, 0], sizes = [1, 16], strides = [1, 1]} : vector<6x48xf32> to vector<1x16xf32>
    %cst_160 = arith.constant 0.000000e+00 : f32
    %286 = vector.broadcast %cst_160 : f32 to vector<10x10x16xf32>
    %c0_161 = arith.constant 0 : index
    %c0_162 = arith.constant 0 : index
    %c0_163 = arith.constant 0 : index
    %287 = vector.load %arg14[%c0_161, %c0_162, %c0_163] : memref<10x10x16xf32, #tpu.memory_space<vmem>>, vector<10x10x16xf32>
    tpu.vector_store %arg14[%c0_161, %c0_162, %c0_163], %286 {strides = array<i32>} : memref<10x10x16xf32, #tpu.memory_space<vmem>>, vector<10x10x16xf32>,
    %288 = vector.extract_strided_slice %284 {offsets = [0, 0], sizes = [8, 16], strides = [1, 1]} : vector<64x16xf32> to vector<8x16xf32>
    %c1_164 = arith.constant 1 : index
    %c1_165 = arith.constant 1 : index
    %c0_166 = arith.constant 0 : index
    %289 = vector.load %arg14[%c1_164, %c1_165, %c0_166] : memref<10x10x16xf32, #tpu.memory_space<vmem>>, vector<1x8x16xf32>
    %290 = vector.shape_cast %289 : vector<1x8x16xf32> to vector<8x16xf32>
    %291 = vector.shape_cast %288 : vector<8x16xf32> to vector<1x8x16xf32>
    tpu.vector_store %arg14[%c1_164, %c1_165, %c0_166], %291 {strides = array<i32>} : memref<10x10x16xf32, #tpu.memory_space<vmem>>, vector<1x8x16xf32>,
    %292 = vector.extract_strided_slice %284 {offsets = [8, 0], sizes = [8, 16], strides = [1, 1]} : vector<64x16xf32> to vector<8x16xf32>
    %c2_167 = arith.constant 2 : index
    %c1_168 = arith.constant 1 : index
    %c0_169 = arith.constant 0 : index
    %293 = vector.load %arg14[%c2_167, %c1_168, %c0_169] : memref<10x10x16xf32, #tpu.memory_space<vmem>>, vector<1x8x16xf32>
    %294 = vector.shape_cast %293 : vector<1x8x16xf32> to vector<8x16xf32>
    %295 = vector.shape_cast %292 : vector<8x16xf32> to vector<1x8x16xf32>
    tpu.vector_store %arg14[%c2_167, %c1_168, %c0_169], %295 {strides = array<i32>} : memref<10x10x16xf32, #tpu.memory_space<vmem>>, vector<1x8x16xf32>,
    %296 = vector.extract_strided_slice %284 {offsets = [16, 0], sizes = [8, 16], strides = [1, 1]} : vector<64x16xf32> to vector<8x16xf32>
    %c3_170 = arith.constant 3 : index
    %c1_171 = arith.constant 1 : index
    %c0_172 = arith.constant 0 : index
    %297 = vector.load %arg14[%c3_170, %c1_171, %c0_172] : memref<10x10x16xf32, #tpu.memory_space<vmem>>, vector<1x8x16xf32>
    %298 = vector.shape_cast %297 : vector<1x8x16xf32> to vector<8x16xf32>
    %299 = vector.shape_cast %296 : vector<8x16xf32> to vector<1x8x16xf32>
    tpu.vector_store %arg14[%c3_170, %c1_171, %c0_172], %299 {strides = array<i32>} : memref<10x10x16xf32, #tpu.memory_space<vmem>>, vector<1x8x16xf32>,
    %300 = vector.extract_strided_slice %284 {offsets = [24, 0], sizes = [8, 16], strides = [1, 1]} : vector<64x16xf32> to vector<8x16xf32>
    %c4_173 = arith.constant 4 : index
    %c1_174 = arith.constant 1 : index
    %c0_175 = arith.constant 0 : index
    %301 = vector.load %arg14[%c4_173, %c1_174, %c0_175] : memref<10x10x16xf32, #tpu.memory_space<vmem>>, vector<1x8x16xf32>
    %302 = vector.shape_cast %301 : vector<1x8x16xf32> to vector<8x16xf32>
    %303 = vector.shape_cast %300 : vector<8x16xf32> to vector<1x8x16xf32>
    tpu.vector_store %arg14[%c4_173, %c1_174, %c0_175], %303 {strides = array<i32>} : memref<10x10x16xf32, #tpu.memory_space<vmem>>, vector<1x8x16xf32>,
    %304 = vector.extract_strided_slice %284 {offsets = [32, 0], sizes = [8, 16], strides = [1, 1]} : vector<64x16xf32> to vector<8x16xf32>
    %c5_176 = arith.constant 5 : index
    %c1_177 = arith.constant 1 : index
    %c0_178 = arith.constant 0 : index
    %305 = vector.load %arg14[%c5_176, %c1_177, %c0_178] : memref<10x10x16xf32, #tpu.memory_space<vmem>>, vector<1x8x16xf32>
    %306 = vector.shape_cast %305 : vector<1x8x16xf32> to vector<8x16xf32>
    %307 = vector.shape_cast %304 : vector<8x16xf32> to vector<1x8x16xf32>
    tpu.vector_store %arg14[%c5_176, %c1_177, %c0_178], %307 {strides = array<i32>} : memref<10x10x16xf32, #tpu.memory_space<vmem>>, vector<1x8x16xf32>,
    %308 = vector.extract_strided_slice %284 {offsets = [40, 0], sizes = [8, 16], strides = [1, 1]} : vector<64x16xf32> to vector<8x16xf32>
    %c6_179 = arith.constant 6 : index
    %c1_180 = arith.constant 1 : index
    %c0_181 = arith.constant 0 : index
    %309 = vector.load %arg14[%c6_179, %c1_180, %c0_181] : memref<10x10x16xf32, #tpu.memory_space<vmem>>, vector<1x8x16xf32>
    %310 = vector.shape_cast %309 : vector<1x8x16xf32> to vector<8x16xf32>
    %311 = vector.shape_cast %308 : vector<8x16xf32> to vector<1x8x16xf32>
    tpu.vector_store %arg14[%c6_179, %c1_180, %c0_181], %311 {strides = array<i32>} : memref<10x10x16xf32, #tpu.memory_space<vmem>>, vector<1x8x16xf32>,
    %312 = vector.extract_strided_slice %284 {offsets = [48, 0], sizes = [8, 16], strides = [1, 1]} : vector<64x16xf32> to vector<8x16xf32>
    %c7_182 = arith.constant 7 : index
    %c1_183 = arith.constant 1 : index
    %c0_184 = arith.constant 0 : index
    %313 = vector.load %arg14[%c7_182, %c1_183, %c0_184] : memref<10x10x16xf32, #tpu.memory_space<vmem>>, vector<1x8x16xf32>
    %314 = vector.shape_cast %313 : vector<1x8x16xf32> to vector<8x16xf32>
    %315 = vector.shape_cast %312 : vector<8x16xf32> to vector<1x8x16xf32>
    tpu.vector_store %arg14[%c7_182, %c1_183, %c0_184], %315 {strides = array<i32>} : memref<10x10x16xf32, #tpu.memory_space<vmem>>, vector<1x8x16xf32>,
    %316 = vector.extract_strided_slice %284 {offsets = [56, 0], sizes = [8, 16], strides = [1, 1]} : vector<64x16xf32> to vector<8x16xf32>
    %c8_185 = arith.constant 8 : index
    %c1_186 = arith.constant 1 : index
    %c0_187 = arith.constant 0 : index
    %317 = vector.load %arg14[%c8_185, %c1_186, %c0_187] : memref<10x10x16xf32, #tpu.memory_space<vmem>>, vector<1x8x16xf32>
    %318 = vector.shape_cast %317 : vector<1x8x16xf32> to vector<8x16xf32>
    %319 = vector.shape_cast %316 : vector<8x16xf32> to vector<1x8x16xf32>
    tpu.vector_store %arg14[%c8_185, %c1_186, %c0_187], %319 {strides = array<i32>} : memref<10x10x16xf32, #tpu.memory_space<vmem>>, vector<1x8x16xf32>,
    %c0_188 = arith.constant 0 : index
    %c0_189 = arith.constant 0 : index
    %c0_190 = arith.constant 0 : index
    %320 = vector.load %arg14[%c0_188, %c0_189, %c0_190] : memref<10x10x16xf32, #tpu.memory_space<vmem>>, vector<10x10x16xf32>
    %321 = vector.extract_strided_slice %320 {offsets = [0, 0, 0], sizes = [8, 8, 16], strides = [1, 1, 1]} : vector<10x10x16xf32> to vector<8x8x16xf32>
    %322 = vector.shape_cast %321 : vector<8x8x16xf32> to vector<64x16xf32>
    %323 = arith.truncf %322 : vector<64x16xf32> to vector<64x16xbf16>
    %c0_191 = arith.constant 0 : index
    %c0_192 = arith.constant 0 : index
    %324 = vector.load %arg15[%c0_191, %c0_192] : memref<64x144xbf16, #tpu.memory_space<vmem>>, vector<64x16xbf16>
    tpu.vector_store %arg15[%c0_191, %c0_192], %323 {strides = array<i32>} : memref<64x144xbf16, #tpu.memory_space<vmem>>, vector<64x16xbf16>,
    %325 = vector.extract_strided_slice %320 {offsets = [0, 1, 0], sizes = [8, 8, 16], strides = [1, 1, 1]} : vector<10x10x16xf32> to vector<8x8x16xf32>
    %326 = vector.shape_cast %325 : vector<8x8x16xf32> to vector<64x16xf32>
    %327 = arith.truncf %326 : vector<64x16xf32> to vector<64x16xbf16>
    %c0_193 = arith.constant 0 : index
    %c16_194 = arith.constant 16 : index
    %328 = vector.load %arg15[%c0_193, %c16_194] : memref<64x144xbf16, #tpu.memory_space<vmem>>, vector<64x16xbf16>
    tpu.vector_store %arg15[%c0_193, %c16_194], %327 {strides = array<i32>} : memref<64x144xbf16, #tpu.memory_space<vmem>>, vector<64x16xbf16>,
    %329 = vector.extract_strided_slice %320 {offsets = [0, 2, 0], sizes = [8, 8, 16], strides = [1, 1, 1]} : vector<10x10x16xf32> to vector<8x8x16xf32>
    %330 = vector.shape_cast %329 : vector<8x8x16xf32> to vector<64x16xf32>
    %331 = arith.truncf %330 : vector<64x16xf32> to vector<64x16xbf16>
    %c0_195 = arith.constant 0 : index
    %c32_196 = arith.constant 32 : index
    %332 = vector.load %arg15[%c0_195, %c32_196] : memref<64x144xbf16, #tpu.memory_space<vmem>>, vector<64x16xbf16>
    tpu.vector_store %arg15[%c0_195, %c32_196], %331 {strides = array<i32>} : memref<64x144xbf16, #tpu.memory_space<vmem>>, vector<64x16xbf16>,
    %333 = vector.extract_strided_slice %320 {offsets = [1, 0, 0], sizes = [8, 8, 16], strides = [1, 1, 1]} : vector<10x10x16xf32> to vector<8x8x16xf32>
    %334 = vector.shape_cast %333 : vector<8x8x16xf32> to vector<64x16xf32>
    %335 = arith.truncf %334 : vector<64x16xf32> to vector<64x16xbf16>
    %c0_197 = arith.constant 0 : index
    %c48_198 = arith.constant 48 : index
    %336 = vector.load %arg15[%c0_197, %c48_198] : memref<64x144xbf16, #tpu.memory_space<vmem>>, vector<64x16xbf16>
    tpu.vector_store %arg15[%c0_197, %c48_198], %335 {strides = array<i32>} : memref<64x144xbf16, #tpu.memory_space<vmem>>, vector<64x16xbf16>,
    %337 = vector.extract_strided_slice %320 {offsets = [1, 1, 0], sizes = [8, 8, 16], strides = [1, 1, 1]} : vector<10x10x16xf32> to vector<8x8x16xf32>
    %338 = vector.shape_cast %337 : vector<8x8x16xf32> to vector<64x16xf32>
    %339 = arith.truncf %338 : vector<64x16xf32> to vector<64x16xbf16>
    %c0_199 = arith.constant 0 : index
    %c64_200 = arith.constant 64 : index
    %340 = vector.load %arg15[%c0_199, %c64_200] : memref<64x144xbf16, #tpu.memory_space<vmem>>, vector<64x16xbf16>
    tpu.vector_store %arg15[%c0_199, %c64_200], %339 {strides = array<i32>} : memref<64x144xbf16, #tpu.memory_space<vmem>>, vector<64x16xbf16>,
    %341 = vector.extract_strided_slice %320 {offsets = [1, 2, 0], sizes = [8, 8, 16], strides = [1, 1, 1]} : vector<10x10x16xf32> to vector<8x8x16xf32>
    %342 = vector.shape_cast %341 : vector<8x8x16xf32> to vector<64x16xf32>
    %343 = arith.truncf %342 : vector<64x16xf32> to vector<64x16xbf16>
    %c0_201 = arith.constant 0 : index
    %c80_202 = arith.constant 80 : index
    %344 = vector.load %arg15[%c0_201, %c80_202] : memref<64x144xbf16, #tpu.memory_space<vmem>>, vector<64x16xbf16>
    tpu.vector_store %arg15[%c0_201, %c80_202], %343 {strides = array<i32>} : memref<64x144xbf16, #tpu.memory_space<vmem>>, vector<64x16xbf16>,
    %345 = vector.extract_strided_slice %320 {offsets = [2, 0, 0], sizes = [8, 8, 16], strides = [1, 1, 1]} : vector<10x10x16xf32> to vector<8x8x16xf32>
    %346 = vector.shape_cast %345 : vector<8x8x16xf32> to vector<64x16xf32>
    %347 = arith.truncf %346 : vector<64x16xf32> to vector<64x16xbf16>
    %c0_203 = arith.constant 0 : index
    %c96_204 = arith.constant 96 : index
    %348 = vector.load %arg15[%c0_203, %c96_204] : memref<64x144xbf16, #tpu.memory_space<vmem>>, vector<64x16xbf16>
    tpu.vector_store %arg15[%c0_203, %c96_204], %347 {strides = array<i32>} : memref<64x144xbf16, #tpu.memory_space<vmem>>, vector<64x16xbf16>,
    %349 = vector.extract_strided_slice %320 {offsets = [2, 1, 0], sizes = [8, 8, 16], strides = [1, 1, 1]} : vector<10x10x16xf32> to vector<8x8x16xf32>
    %350 = vector.shape_cast %349 : vector<8x8x16xf32> to vector<64x16xf32>
    %351 = arith.truncf %350 : vector<64x16xf32> to vector<64x16xbf16>
    %c0_205 = arith.constant 0 : index
    %c112_206 = arith.constant 112 : index
    %352 = vector.load %arg15[%c0_205, %c112_206] : memref<64x144xbf16, #tpu.memory_space<vmem>>, vector<64x16xbf16>
    tpu.vector_store %arg15[%c0_205, %c112_206], %351 {strides = array<i32>} : memref<64x144xbf16, #tpu.memory_space<vmem>>, vector<64x16xbf16>,
    %353 = vector.extract_strided_slice %320 {offsets = [2, 2, 0], sizes = [8, 8, 16], strides = [1, 1, 1]} : vector<10x10x16xf32> to vector<8x8x16xf32>
    %354 = vector.shape_cast %353 : vector<8x8x16xf32> to vector<64x16xf32>
    %355 = arith.truncf %354 : vector<64x16xf32> to vector<64x16xbf16>
    %c0_207 = arith.constant 0 : index
    %c128_208 = arith.constant 128 : index
    %356 = vector.load %arg15[%c0_207, %c128_208] : memref<64x144xbf16, #tpu.memory_space<vmem>>, vector<64x16xbf16>
    tpu.vector_store %arg15[%c0_207, %c128_208], %355 {strides = array<i32>} : memref<64x144xbf16, #tpu.memory_space<vmem>>, vector<64x16xbf16>,
    %c0_209 = arith.constant 0 : index
    %c0_210 = arith.constant 0 : index
    %357 = vector.load %arg15[%c0_209, %c0_210] : memref<64x144xbf16, #tpu.memory_space<vmem>>, vector<64x144xbf16>
    %c0_211 = arith.constant 0 : index
    %c0_212 = arith.constant 0 : index
    %358 = vector.load %arg5[%c0_211, %c0_212] : memref<144x16xbf16, #tpu.memory_space<vmem>>, vector<144x16xbf16>
    %cst_213 = arith.constant dense<0.000000e+00> : vector<64x16xf32>
    %359 = tpu.matmul %357, %358, %cst_213 {dimension_numbers = #tpu.dot_dimension_numbers<[1], [0], [0], [1], [0, 0, 1, 1], [], []>} : vector<64x144xbf16>, vector<144x16xbf16>, vector<64x16xf32> -> vector<64x16xf32>
    %360 = vector.broadcast %285 : vector<1x16xf32> to vector<64x16xf32>
    %361 = arith.addf %359, %360 : vector<64x16xf32>
    %cst_214 = arith.constant 0.000000e+00 : f32
    %362 = vector.broadcast %cst_214 : f32 to vector<64x16xf32>
    %363 = arith.maximumf %361, %362 : vector<64x16xf32>
    %364 = arith.truncf %186 : vector<64x16xf32> to vector<64x16xbf16>
    %c0_215 = arith.constant 0 : index
    %c0_216 = arith.constant 0 : index
    %365 = vector.load %arg7[%c0_215, %c0_216] : memref<16x48xbf16, #tpu.memory_space<vmem>>, vector<16x48xbf16>
    %cst_217 = arith.constant dense<0.000000e+00> : vector<64x48xf32>
    %366 = tpu.matmul %364, %365, %cst_217 {dimension_numbers = #tpu.dot_dimension_numbers<[1], [0], [0], [1], [0, 0, 1, 1], [], []>} : vector<64x16xbf16>, vector<16x48xbf16>, vector<64x48xf32> -> vector<64x48xf32>
    %367 = arith.truncf %363 : vector<64x16xf32> to vector<64x16xbf16>
    %c0_218 = arith.constant 0 : index
    %c0_219 = arith.constant 0 : index
    %368 = vector.load %arg8[%c0_218, %c0_219] : memref<16x48xbf16, #tpu.memory_space<vmem>>, vector<16x48xbf16>
    %cst_220 = arith.constant dense<0.000000e+00> : vector<64x48xf32>
    %369 = tpu.matmul %367, %368, %cst_220 {dimension_numbers = #tpu.dot_dimension_numbers<[1], [0], [0], [1], [0, 0, 1, 1], [], []>} : vector<64x16xbf16>, vector<16x48xbf16>, vector<64x48xf32> -> vector<64x48xf32>
    %370 = arith.addf %366, %369 : vector<64x48xf32>
    %371 = vector.extract_strided_slice %0 {offsets = [5, 0], sizes = [1, 48], strides = [1, 1]} : vector<6x48xf32> to vector<1x48xf32>
    %372 = vector.broadcast %371 : vector<1x48xf32> to vector<64x48xf32>
    %373 = arith.addf %370, %372 : vector<64x48xf32>
    %c0_221 = arith.constant 0 : index
    %c0_222 = arith.constant 0 : index
    %c0_223 = arith.constant 0 : index
    %374 = vector.load %arg11[%c0_221, %c0_222, %c0_223] : memref<1x64x48xf32, #tpu.memory_space<vmem>>, vector<1x64x48xf32>
    %375 = vector.shape_cast %374 : vector<1x64x48xf32> to vector<64x48xf32>
    %376 = vector.shape_cast %373 : vector<64x48xf32> to vector<1x64x48xf32>
    tpu.vector_store %arg11[%c0_221, %c0_222, %c0_223], %376 {strides = array<i32>} : memref<1x64x48xf32, #tpu.memory_space<vmem>>, vector<1x64x48xf32>,
    return
  }
  func.func @transform_0(%arg0: i32) -> (i32, i32, i32) {
    %c0_i32 = arith.constant 0 : i32
    %c0_i32_0 = arith.constant 0 : i32
    %c0_i32_1 = arith.constant 0 : i32
    return %arg0, %c0_i32, %c0_i32_0 : i32, i32, i32
  }
  func.func @transform_1(%arg0: i32) -> (i32, i32) {
    %c0_i32 = arith.constant 0 : i32
    %c0_i32_0 = arith.constant 0 : i32
    %c0_i32_1 = arith.constant 0 : i32
    return %c0_i32, %c0_i32_0 : i32, i32
  }
  func.func @transform_2(%arg0: i32) -> (i32, i32) {
    %c0_i32 = arith.constant 0 : i32
    %c0_i32_0 = arith.constant 0 : i32
    %c0_i32_1 = arith.constant 0 : i32
    return %c0_i32, %c0_i32_0 : i32, i32
  }
  func.func @transform_3(%arg0: i32) -> (i32, i32) {
    %c0_i32 = arith.constant 0 : i32
    %c0_i32_0 = arith.constant 0 : i32
    %c0_i32_1 = arith.constant 0 : i32
    return %c0_i32, %c0_i32_0 : i32, i32
  }
  func.func @transform_4(%arg0: i32) -> (i32, i32) {
    %c0_i32 = arith.constant 0 : i32
    %c0_i32_0 = arith.constant 0 : i32
    %c0_i32_1 = arith.constant 0 : i32
    return %c0_i32, %c0_i32_0 : i32, i32
  }
  func.func @transform_5(%arg0: i32) -> (i32, i32) {
    %c0_i32 = arith.constant 0 : i32
    %c0_i32_0 = arith.constant 0 : i32
    %c0_i32_1 = arith.constant 0 : i32
    return %c0_i32, %c0_i32_0 : i32, i32
  }
  func.func @transform_6(%arg0: i32) -> (i32, i32) {
    %c0_i32 = arith.constant 0 : i32
    %c0_i32_0 = arith.constant 0 : i32
    %c0_i32_1 = arith.constant 0 : i32
    return %c0_i32, %c0_i32_0 : i32, i32
  }
  func.func @transform_7(%arg0: i32) -> (i32, i32) {
    %c0_i32 = arith.constant 0 : i32
    %c0_i32_0 = arith.constant 0 : i32
    %c0_i32_1 = arith.constant 0 : i32
    return %c0_i32, %c0_i32_0 : i32, i32
  }
  func.func @transform_8(%arg0: i32) -> (i32, i32) {
    %c0_i32 = arith.constant 0 : i32
    %c0_i32_0 = arith.constant 0 : i32
    %c0_i32_1 = arith.constant 0 : i32
    return %c0_i32, %c0_i32_0 : i32, i32
  }
  func.func @transform_9(%arg0: i32) -> i32 {
    %c0_i32 = arith.constant 0 : i32
    %c0_i32_0 = arith.constant 0 : i32
    return %c0_i32 : i32
  }
  func.func @transform_10(%arg0: i32) -> (i32, i32, i32) {
    %c0_i32 = arith.constant 0 : i32
    %c0_i32_0 = arith.constant 0 : i32
    %c0_i32_1 = arith.constant 0 : i32
    return %arg0, %c0_i32, %c0_i32_0 : i32, i32, i32
  }
}

</mosaic_0001>

<llo_original>
// kernel: danet_head_forward.1
$region0: #{danet_head_forward.1}
  #allocation0 [shape = 'u32[]', space=smem, size = 0x4, offset = 0x4, fixed_abs, tag = 'smem constant byte address 0x4 - core index']
  #allocation1 [shape = 'u32[144,128]{1,0:T(1,128)}', space=vmem, size = 0x12000, scoped, tag = 'internal scratch']
  #allocation2 [shape = 'f32[10,10,64]{2,1,0:T(8,128)}', space=vmem, size = 0x14000, scoped, tag = 'scratch operand']
  #allocation3 [shape = 'bf16[64,576]{1,0:T(8,128)(2,1)}', space=vmem, size = 0x14000, scoped, tag = 'scratch operand']
  #allocation4 [shape = 'f32[10,10,16]{2,1,0:T(8,128)}', space=vmem, size = 0x14000, scoped, tag = 'scratch operand']
  #allocation5 [shape = 'bf16[64,144]{1,0:T(8,128)(2,1)}', space=vmem, size = 0x8000, scoped, tag = 'scratch operand']
  %s0 = inlined_call_operand.vmem [shape: f32[2,64,64], index: 0, kind: input, shape index: {}]
  %s1 = inlined_call_operand.vmem [shape: bf16[576,16], index: 1, kind: input, shape index: {}]
  %s2 = inlined_call_operand.vmem [shape: bf16[576,16], index: 2, kind: input, shape index: {}]
  %s3 = inlined_call_operand.vmem [shape: bf16[144,16], index: 3, kind: input, shape index: {}]
  %s4 = inlined_call_operand.vmem [shape: bf16[144,16], index: 4, kind: input, shape index: {}]
  %s5 = inlined_call_operand.vmem [shape: bf16[16,20], index: 5, kind: input, shape index: {}]
  %s6 = inlined_call_operand.vmem [shape: bf16[16,48], index: 6, kind: input, shape index: {}]
  %s7 = inlined_call_operand.vmem [shape: bf16[16,48], index: 7, kind: input, shape index: {}]
  %s8 = inlined_call_operand.vmem [shape: f32[6,48], index: 8, kind: input, shape index: {}]
  %s9 = inlined_call_operand.vmem [shape: f32[2], index: 9, kind: input, shape index: {}]
  %s10 = inlined_call_operand.vmem [shape: f32[2,64,48], index: 10, kind: output, shape index: {}]
  %s11 = sld [smem:[#allocation0]]
  $region77: #{danet_head_forward.1} parent=0
    _
  %s13 = ssub.s32 1, %s11
  %s14 = scalar_select 0, %s13, %s11
  $region1: #{danet_head_forward.1} parent=0
    #allocation6 [shape = 'u8[512]{0}', space=smem, size = 0x200, scoped, tag = 'input window, operand 9, single buffered']
    #allocation7 [shape = 's32[2]{0}', space=sflag, size = 0x8, scoped, tag = 'scoped memory for danet_head_forward.1']
    %15 = vsyncpa [#allocation7], 0
    loop: start=0, step=1, limit=4
    $region2: #{danet_head_forward.1} parent=1 // loop_pre_header
      _
    $region3: #{danet_head_forward.1} parent=1 // loop_header
      %s17 = sphi 0, %s21
      %p18 = scmp.ge.s32.totalorder %s17, 4
      %s27 = sphi 0, %s29
      %s30 = sphi 0, %s27
      %s31 = sphi 0, %s30
      %s47 = sphi 0, %s31
      %s51 = sphi 0, %s51
      %s53 = sphi 0, %s51
      %s54 = sphi 0, %s53
      %s68 = sphi 0, %s54
      %s72 = sphi 0, %s72
      %s74 = sphi 0, %s72
      %s75 = sphi 0, %s74
      %s89 = sphi 0, %s75
      %s93 = sphi 0, %s93
      %s95 = sphi 0, %s93
      %s96 = sphi 0, %s95
      %s110 = sphi 0, %s96
      %s114 = sphi 0, %s114
      %s116 = sphi 0, %s114
      %s117 = sphi 0, %s116
      %s131 = sphi 0, %s117
      %s135 = sphi 0, %s135
      %s137 = sphi 0, %s135
      %s138 = sphi 0, %s137
      %s152 = sphi 0, %s138
      %s156 = sphi 0, %s156
      %s158 = sphi 0, %s156
      %s159 = sphi 0, %s158
      %s173 = sphi 0, %s159
      %s177 = sphi 0, %s177
      %s179 = sphi 0, %s177
      %s180 = sphi 0, %s179
      %s194 = sphi 0, %s180
      %s198 = sphi 0, %s198
      %s200 = sphi 0, %s198
      %s201 = sphi 0, %s200
      %s215 = sphi 0, %s201
      %s219 = sphi 0, %s219
      %s221 = sphi 0, %s219
      %s222 = sphi 0, %s221
      %s236 = sphi 0, %s222
      %s242 = sphi 0, %s244
      %s245 = sphi 0, %s242
      %s246 = sphi 0, %s245
      %s262 = sphi 0, %s246
    $region4: #{danet_head_forward.1} parent=1 // loop_header_branch
      %20 = sbr.rel (%p18) target = $region8
    $region5: #{danet_head_forward.1} parent=1 // loop_body
      %s22 = ssub.s32 %s17, 1
      %s23 = ssub.s32 %s17, 2
      %s24 = sadd.s32 %s17, 1
      %s25 = ssub.s32 %s17, %s24
      %p26 = scmp.eq.s32.totalorder %s25, 0
      %s28 = sadd.s32 %s27, 1
      %s29 = scalar_select %p26, %s27, %s28
      %p32 = pneg %p26
      %p33 = scmp.eq.s32.totalorder %s17, 1
      %p34 = por %p32, %p33
      %p35 = scmp.ne.s32.totalorder %s27, %s30
      %p36 = scmp.eq.s32.totalorder %s17, 0
      %p37 = por %p35, %p36
      %p38 = scmp.ne.s32.totalorder %s27, %s30
      %p39 = scmp.eq.s32.totalorder %s22, 1
      %p40 = por %p38, %p39
      %p41 = scmp.ne.s32.totalorder %s30, %s31
      %p42 = scmp.eq.s32.totalorder %s22, 0
      %p43 = por %p41, %p42
      %p44 = scmp.ne.s32.totalorder %s30, %s31
      %p45 = scmp.eq.s32.totalorder %s23, 1
      %p46 = por %p44, %p45
      %p48 = scmp.ne.s32.totalorder %s31, %s47
      %p49 = scmp.eq.s32.totalorder %s23, 0
      %p50 = por %p48, %p49
      %s52 = sadd.s32 %s51, 1
      %p55 = scmp.eq.s32.totalorder %s17, 1
      %p56 = scmp.ne.s32.totalorder %s51, %s53
      %p57 = scmp.eq.s32.totalorder %s17, 0
      %p58 = por %p56, %p57
      %p59 = scmp.ne.s32.totalorder %s51, %s53
      %p60 = scmp.eq.s32.totalorder %s22, 1
      %p61 = por %p59, %p60
      %p62 = scmp.ne.s32.totalorder %s53, %s54
      %p63 = scmp.eq.s32.totalorder %s22, 0
      %p64 = por %p62, %p63
      %p65 = scmp.ne.s32.totalorder %s53, %s54
      %p66 = scmp.eq.s32.totalorder %s23, 1
      %p67 = por %p65, %p66
      %p69 = scmp.ne.s32.totalorder %s54, %s68
      %p70 = scmp.eq.s32.totalorder %s23, 0
      %p71 = por %p69, %p70
      %s73 = sadd.s32 %s72, 1
      %p76 = scmp.eq.s32.totalorder %s17, 1
      %p77 = scmp.ne.s32.totalorder %s72, %s74
      %p78 = scmp.eq.s32.totalorder %s17, 0
      %p79 = por %p77, %p78
      %p80 = scmp.ne.s32.totalorder %s72, %s74
      %p81 = scmp.eq.s32.totalorder %s22, 1
      %p82 = por %p80, %p81
      %p83 = scmp.ne.s32.totalorder %s74, %s75
      %p84 = scmp.eq.s32.totalorder %s22, 0
      %p85 = por %p83, %p84
      %p86 = scmp.ne.s32.totalorder %s74, %s75
      %p87 = scmp.eq.s32.totalorder %s23, 1
      %p88 = por %p86, %p87
      %p90 = scmp.ne.s32.totalorder %s75, %s89
      %p91 = scmp.eq.s32.totalorder %s23, 0
      %p92 = por %p90, %p91
      %s94 = sadd.s32 %s93, 1
      %p97 = scmp.eq.s32.totalorder %s17, 1
      %p98 = scmp.ne.s32.totalorder %s93, %s95
      %p99 = scmp.eq.s32.totalorder %s17, 0
      %p100 = por %p98, %p99
      %p101 = scmp.ne.s32.totalorder %s93, %s95
      %p102 = scmp.eq.s32.totalorder %s22, 1
      %p103 = por %p101, %p102
      %p104 = scmp.ne.s32.totalorder %s95, %s96
      %p105 = scmp.eq.s32.totalorder %s22, 0
      %p106 = por %p104, %p105
      %p107 = scmp.ne.s32.totalorder %s95, %s96
      %p108 = scmp.eq.s32.totalorder %s23, 1
      %p109 = por %p107, %p108
      %p111 = scmp.ne.s32.totalorder %s96, %s110
      %p112 = scmp.eq.s32.totalorder %s23, 0
      %p113 = por %p111, %p112
      %s115 = sadd.s32 %s114, 1
      %p118 = scmp.eq.s32.totalorder %s17, 1
      %p119 = scmp.ne.s32.totalorder %s114, %s116
      %p120 = scmp.eq.s32.totalorder %s17, 0
      %p121 = por %p119, %p120
      %p122 = scmp.ne.s32.totalorder %s114, %s116
      %p123 = scmp.eq.s32.totalorder %s22, 1
      %p124 = por %p122, %p123
      %p125 = scmp.ne.s32.totalorder %s116, %s117
      %p126 = scmp.eq.s32.totalorder %s22, 0
      %p127 = por %p125, %p126
      %p128 = scmp.ne.s32.totalorder %s116, %s117
      %p129 = scmp.eq.s32.totalorder %s23, 1
      %p130 = por %p128, %p129
      %p132 = scmp.ne.s32.totalorder %s117, %s131
      %p133 = scmp.eq.s32.totalorder %s23, 0
      %p134 = por %p132, %p133
      %s136 = sadd.s32 %s135, 1
      %p139 = scmp.eq.s32.totalorder %s17, 1
      %p140 = scmp.ne.s32.totalorder %s135, %s137
      %p141 = scmp.eq.s32.totalorder %s17, 0
      %p142 = por %p140, %p141
      %p143 = scmp.ne.s32.totalorder %s135, %s137
      %p144 = scmp.eq.s32.totalorder %s22, 1
      %p145 = por %p143, %p144
      %p146 = scmp.ne.s32.totalorder %s137, %s138
      %p147 = scmp.eq.s32.totalorder %s22, 0
      %p148 = por %p146, %p147
      %p149 = scmp.ne.s32.totalorder %s137, %s138
      %p150 = scmp.eq.s32.totalorder %s23, 1
      %p151 = por %p149, %p150
      %p153 = scmp.ne.s32.totalorder %s138, %s152
      %p154 = scmp.eq.s32.totalorder %s23, 0
      %p155 = por %p153, %p154
      %s157 = sadd.s32 %s156, 1
      %p160 = scmp.eq.s32.totalorder %s17, 1
      %p161 = scmp.ne.s32.totalorder %s156, %s158
      %p162 = scmp.eq.s32.totalorder %s17, 0
      %p163 = por %p161, %p162
      %p164 = scmp.ne.s32.totalorder %s156, %s158
      %p165 = scmp.eq.s32.totalorder %s22, 1
      %p166 = por %p164, %p165
      %p167 = scmp.ne.s32.totalorder %s158, %s159
      %p168 = scmp.eq.s32.totalorder %s22, 0
      %p169 = por %p167, %p168
      %p170 = scmp.ne.s32.totalorder %s158, %s159
      %p171 = scmp.eq.s32.totalorder %s23, 1
      %p172 = por %p170, %p171
      %p174 = scmp.ne.s32.totalorder %s159, %s173
      %p175 = scmp.eq.s32.totalorder %s23, 0
      %p176 = por %p174, %p175
      %s178 = sadd.s32 %s177, 1
      %p181 = scmp.eq.s32.totalorder %s17, 1
      %p182 = scmp.ne.s32.totalorder %s177, %s179
      %p183 = scmp.eq.s32.totalorder %s17, 0
      %p184 = por %p182, %p183
      %p185 = scmp.ne.s32.totalorder %s177, %s179
      %p186 = scmp.eq.s32.totalorder %s22, 1
      %p187 = por %p185, %p186
      %p188 = scmp.ne.s32.totalorder %s179, %s180
      %p189 = scmp.eq.s32.totalorder %s22, 0
      %p190 = por %p188, %p189
      %p191 = scmp.ne.s32.totalorder %s179, %s180
      %p192 = scmp.eq.s32.totalorder %s23, 1
      %p193 = por %p191, %p192
      %p195 = scmp.ne.s32.totalorder %s180, %s194
      %p196 = scmp.eq.s32.totalorder %s23, 0
      %p197 = por %p195, %p196
      %s199 = sadd.s32 %s198, 1
      %p202 = scmp.eq.s32.totalorder %s17, 1
      %p203 = scmp.ne.s32.totalorder %s198, %s200
      %p204 = scmp.eq.s32.totalorder %s17, 0
      %p205 = por %p203, %p204
      %p206 = scmp.ne.s32.totalorder %s198, %s200
      %p207 = scmp.eq.s32.totalorder %s22, 1
      %p208 = por %p206, %p207
      %p209 = scmp.ne.s32.totalorder %s200, %s201
      %p210 = scmp.eq.s32.totalorder %s22, 0
      %p211 = por %p209, %p210
      %p212 = scmp.ne.s32.totalorder %s200, %s201
      %p213 = scmp.eq.s32.totalorder %s23, 1
      %p214 = por %p212, %p213
      %p216 = scmp.ne.s32.totalorder %s201, %s215
      %p217 = scmp.eq.s32.totalorder %s23, 0
      %p218 = por %p216, %p217
      %s220 = sadd.s32 %s219, 1
      %p223 = scmp.eq.s32.totalorder %s17, 1
      %p224 = scmp.ne.s32.totalorder %s219, %s221
      %p225 = scmp.eq.s32.totalorder %s17, 0
      %p226 = por %p224, %p225
      %p227 = scmp.ne.s32.totalorder %s219, %s221
      %p228 = scmp.eq.s32.totalorder %s22, 1
      %p229 = por %p227, %p228
      %p230 = scmp.ne.s32.totalorder %s221, %s222
      %p231 = scmp.eq.s32.totalorder %s22, 0
      %p232 = por %p230, %p231
      %p233 = scmp.ne.s32.totalorder %s221, %s222
      %p234 = scmp.eq.s32.totalorder %s23, 1
      %p235 = por %p233, %p234
      %p237 = scmp.ne.s32.totalorder %s222, %s236
      %p238 = scmp.eq.s32.totalorder %s23, 0
      %p239 = por %p237, %p238
      %s240 = ssub.s32 %s17, %s24
      %p241 = scmp.eq.s32.totalorder %s240, 0
      %s243 = sadd.s32 %s242, 1
      %s244 = scalar_select %p241, %s242, %s243
      %p247 = pneg %p241
      %p248 = scmp.eq.s32.totalorder %s17, 1
      %p249 = por %p247, %p248
      %p250 = scmp.ne.s32.totalorder %s242, %s245
      %p251 = scmp.eq.s32.totalorder %s17, 0
      %p252 = por %p250, %p251
      %p253 = scmp.ne.s32.totalorder %s242, %s245
      %p254 = scmp.eq.s32.totalorder %s22, 1
      %p255 = por %p253, %p254
      %p256 = scmp.ne.s32.totalorder %s245, %s246
      %p257 = scmp.eq.s32.totalorder %s22, 0
      %p258 = por %p256, %p257
      %p259 = scmp.ne.s32.totalorder %s245, %s246
      %p260 = scmp.eq.s32.totalorder %s23, 1
      %p261 = por %p259, %p260
      %p263 = scmp.ne.s32.totalorder %s246, %s262
      %p264 = scmp.eq.s32.totalorder %s23, 0
      %p265 = por %p263, %p264
      %p266 = scmp.le.s32.totalorder 1, %s17
      %p267 = scmp.lt.s32.totalorder %s17, 3
      %p268 = pnand %p266, %p267
      %p269 = pneg %p268
      // Predicated region
      $region9: #{danet_head_forward.1} parent=5 // pred_check
        _
      $region10: #{danet_head_forward.1} parent=5 // pred_check_branch
        %271 = sbr.rel (%p268) target = $region12
      $region11: #{danet_head_forward.1} parent=5 // pred_region
        %s272 = ssub.s32 %s17, 1
        // Predicated region
        $region13: #{danet_head_forward.1} parent=11 // pred_check
          %p273 = pneg %p64
        $region14: #{danet_head_forward.1} parent=11 // pred_check_branch
          %275 = sbr.rel (%p273) target = $region16
        $region15: #{danet_head_forward.1} parent=11 // pred_region
          _
        $region16: #{danet_head_forward.1} parent=11 // pred_fallthru
          _
        // Predicated region
        $region17: #{danet_head_forward.1} parent=11 // pred_check
          %p276 = pneg %p85
        $region18: #{danet_head_forward.1} parent=11 // pred_check_branch
          %278 = sbr.rel (%p276) target = $region20
        $region19: #{danet_head_forward.1} parent=11 // pred_region
          _
        $region20: #{danet_head_forward.1} parent=11 // pred_fallthru
          _
        // Predicated region
        $region21: #{danet_head_forward.1} parent=11 // pred_check
          %p279 = pneg %p106
        $region22: #{danet_head_forward.1} parent=11 // pred_check_branch
          %281 = sbr.rel (%p279) target = $region24
        $region23: #{danet_head_forward.1} parent=11 // pred_region
          _
        $region24: #{danet_head_forward.1} parent=11 // pred_fallthru
          _
        // Predicated region
        $region25: #{danet_head_forward.1} parent=11 // pred_check
          %p282 = pneg %p127
        $region26: #{danet_head_forward.1} parent=11 // pred_check_branch
          %284 = sbr.rel (%p282) target = $region28
        $region27: #{danet_head_forward.1} parent=11 // pred_region
          _
        $region28: #{danet_head_forward.1} parent=11 // pred_fallthru
          _
        // Predicated region
        $region29: #{danet_head_forward.1} parent=11 // pred_check
          %p285 = pneg %p148
        $region30: #{danet_head_forward.1} parent=11 // pred_check_branch
          %287 = sbr.rel (%p285) target = $region32
        $region31: #{danet_head_forward.1} parent=11 // pred_region
          _
        $region32: #{danet_head_forward.1} parent=11 // pred_fallthru
          _
        // Predicated region
        $region33: #{danet_head_forward.1} parent=11 // pred_check
          %p288 = pneg %p169
        $region34: #{danet_head_forward.1} parent=11 // pred_check_branch
          %290 = sbr.rel (%p288) target = $region36
        $region35: #{danet_head_forward.1} parent=11 // pred_region
          _
        $region36: #{danet_head_forward.1} parent=11 // pred_fallthru
          _
        // Predicated region
        $region37: #{danet_head_forward.1} parent=11 // pred_check
          %p291 = pneg %p190
        $region38: #{danet_head_forward.1} parent=11 // pred_check_branch
          %293 = sbr.rel (%p291) target = $region40
        $region39: #{danet_head_forward.1} parent=11 // pred_region
          _
        $region40: #{danet_head_forward.1} parent=11 // pred_fallthru
          _
        // Predicated region
        $region41: #{danet_head_forward.1} parent=11 // pred_check
          %p294 = pneg %p211
        $region42: #{danet_head_forward.1} parent=11 // pred_check_branch
          %296 = sbr.rel (%p294) target = $region44
        $region43: #{danet_head_forward.1} parent=11 // pred_region
          _
        $region44: #{danet_head_forward.1} parent=11 // pred_fallthru
          _
        // Predicated region
        $region45: #{danet_head_forward.1} parent=11 // pred_check
          %p297 = pneg %p232
        $region46: #{danet_head_forward.1} parent=11 // pred_check_branch
          %299 = sbr.rel (%p297) target = $region48
        $region47: #{danet_head_forward.1} parent=11 // pred_region
          %s301 = ssub.s32 16, 16
          %302 = vsyncadd [#allocation7], %s301
          %s304 = sshll.u32 %s9, 4
          %s305 = int_to_ptr.vmem [resolvable:$true] %s304
          %307 = dma.vmem_to_smem %s305, 16, [#allocation6], [#allocation7]
        $region48: #{danet_head_forward.1} parent=11 // pred_fallthru
          _
      $region12: #{danet_head_forward.1} parent=5 // pred_fallthru
        _
      %p308 = scmp.lt.s32.totalorder %s17, 2
      // Predicated region
      $region49: #{danet_head_forward.1} parent=5 // pred_check
        %p309 = pneg %p308
      $region50: #{danet_head_forward.1} parent=5 // pred_check_branch
        %311 = sbr.rel (%p309) target = $region52
      $region51: #{danet_head_forward.1} parent=5 // pred_region
        // Predicated region
        $region53: #{danet_head_forward.1} parent=51 // pred_check
          %p312 = pneg %p37
        $region54: #{danet_head_forward.1} parent=51 // pred_check_branch
          %314 = sbr.rel (%p312) target = $region56
        $region55: #{danet_head_forward.1} parent=51 // pred_region
          %p315 = scmp.lt.s32.totalorder %s17, 1
          %s316 = scalar_select %p315, %s17, 1
          %s317 = smul.addr %s316, 8
          %s318 = smul.addr %s317, 8
          %s319 = scalar_lea.vmem %s0, %s318
        $region56: #{danet_head_forward.1} parent=51 // pred_fallthru
          _
      $region52: #{danet_head_forward.1} parent=5 // pred_fallthru
        _
      %p320 = scmp.le.s32.totalorder 1, %s17
      %p321 = scmp.lt.s32.totalorder %s17, 3
      %p322 = pnand %p320, %p321
      %p323 = pneg %p322
      // Predicated region
      $region57: #{danet_head_forward.1} parent=5 // pred_check
        _
      $region58: #{danet_head_forward.1} parent=5 // pred_check_branch
        %325 = sbr.rel (%p322) target = $region60
      $region59: #{danet_head_forward.1} parent=5 // pred_region
        %s326 = ssub.s32 %s17, 1
        // Predicated region
        $region61: #{danet_head_forward.1} parent=59 // pred_check
          %p327 = pneg %p232
        $region62: #{danet_head_forward.1} parent=59 // pred_check_branch
          %329 = sbr.rel (%p327) target = $region64
        $region63: #{danet_head_forward.1} parent=59 // pred_region
          %330 = dma.done [#allocation7], 16
        $region64: #{danet_head_forward.1} parent=59 // pred_fallthru
          _
        %331 = sfence
        %p332 = scmp.lt.s32.totalorder %s22, 1
        %s333 = scalar_select %p332, %s22, 1
        %s334 = smul.addr %s333, 8
        %s335 = smul.addr %s334, 8
        %s336 = scalar_lea.vmem %s0, %s335
        %p337 = pneg %p43
        %p338 = pneg %p40
        %p339 = pneg %p64
        %p340 = pneg %p61
        %p341 = pneg %p85
        %p342 = pneg %p82
        %p343 = pneg %p106
        %p344 = pneg %p103
        %p345 = pneg %p127
        %p346 = pneg %p124
        %p347 = pneg %p148
        %p348 = pneg %p145
        %p349 = pneg %p169
        %p350 = pneg %p166
        %p351 = pneg %p190
        %p352 = pneg %p187
        %p353 = pneg %p211
        %p354 = pneg %p208
        %p355 = pneg %p232
        %p356 = pneg %p229
        %p357 = pneg %p258
        %p358 = pneg %p255
        %p359 = scmp.lt.s32.totalorder %s22, 1
        %s360 = scalar_select %p359, %s22, 1
        %s361 = smul.addr %s360, 8
        %s362 = smul.addr %s361, 8
        %s363 = scalar_lea.vmem %s10, %s362
        %p364 = scmp.lt.s32.totalorder %s22, 1
        %s365 = scalar_select %p364, %s22, 1
        %s366 = smul.addr %s365, 8
        %s367 = smul.addr %s366, 8
        %s368 = scalar_lea.vmem %s0, %s367
        %p369 = scmp.lt.s32.totalorder %s22, 1
        %s370 = scalar_select %p369, %s22, 1
        %s371 = smul.addr %s370, 8
        %s372 = smul.addr %s371, 8
        %s373 = scalar_lea.vmem %s10, %s372
        %v375 = vld [vmem:[%s8] sm:$0x3f]
        %s376 = sld [smem:[#allocation6]]
        %s377 = sld [smem:[#allocation6 + $0x1]]
        %v378 = vld [vmem:[%s368] sm:$0xff]
        %v379 = vld [vmem:[%s368 + $0x8] sm:$0xff]
        %v380 = vld [vmem:[%s368 + $0x10] sm:$0xff]
        %v381 = vld [vmem:[%s368 + $0x18] sm:$0xff]
        %v382 = vld [vmem:[%s368 + $0x20] sm:$0xff]
        %v383 = vld [vmem:[%s368 + $0x28] sm:$0xff]
        %v384 = vld [vmem:[%s368 + $0x30] sm:$0xff]
        %v385 = vld [vmem:[%s368 + $0x38] sm:$0xff]
        %vm386 = vcmask 523264
        %387 = vst.msk [vmem:[#allocation2] sm:$0xff] %vm386, 0.0
        %vm388 = vcmask 517120
        %389 = vst.msk [vmem:[#allocation2 + $0x8] sm:$0x3] %vm388, 0.0
        %390 = vst.msk [vmem:[#allocation2 + $0x10] sm:$0xff] %vm386, 0.0
        %391 = vst.msk [vmem:[#allocation2 + $0x18] sm:$0x3] %vm388, 0.0
        %392 = vst.msk [vmem:[#allocation2 + $0x20] sm:$0xff] %vm386, 0.0
        %393 = vst.msk [vmem:[#allocation2 + $0x28] sm:$0x3] %vm388, 0.0
        %394 = vst.msk [vmem:[#allocation2 + $0x30] sm:$0xff] %vm386, 0.0
        %395 = vst.msk [vmem:[#allocation2 + $0x38] sm:$0x3] %vm388, 0.0
        %396 = vst.msk [vmem:[#allocation2 + $0x40] sm:$0xff] %vm386, 0.0
        %397 = vst.msk [vmem:[#allocation2 + $0x48] sm:$0x3] %vm388, 0.0
        %398 = vst.msk [vmem:[#allocation2 + $0x50] sm:$0xff] %vm386, 0.0
        %399 = vst.msk [vmem:[#allocation2 + $0x58] sm:$0x3] %vm388, 0.0
        %400 = vst.msk [vmem:[#allocation2 + $0x60] sm:$0xff] %vm386, 0.0
        %401 = vst.msk [vmem:[#allocation2 + $0x68] sm:$0x3] %vm388, 0.0
        %402 = vst.msk [vmem:[#allocation2 + $0x70] sm:$0xff] %vm386, 0.0
        %403 = vst.msk [vmem:[#allocation2 + $0x78] sm:$0x3] %vm388, 0.0
        %404 = vst.msk [vmem:[#allocation2 + $0x80] sm:$0xff] %vm386, 0.0
        %405 = vst.msk [vmem:[#allocation2 + $0x88] sm:$0x3] %vm388, 0.0
        %406 = vst.msk [vmem:[#allocation2 + $0x90] sm:$0xff] %vm386, 0.0
        %407 = vst.msk [vmem:[#allocation2 + $0x98] sm:$0x3] %vm388, 0.0
        %s408 = scalar_lea.vmem [#allocation2], 16
        %409 = vst.msk [vmem:[%s408 + $0x1] sm:$0xff] %vm386, %v378
        %s410 = scalar_lea.vmem [#allocation2], 32
        %411 = vst.msk [vmem:[%s410 + $0x1] sm:$0xff] %vm386, %v379
        %s412 = scalar_lea.vmem [#allocation2], 48
        %413 = vst.msk [vmem:[%s412 + $0x1] sm:$0xff] %vm386, %v380
        %s414 = scalar_lea.vmem [#allocation2], 64
        %415 = vst.msk [vmem:[%s414 + $0x1] sm:$0xff] %vm386, %v381
        %s416 = scalar_lea.vmem [#allocation2], 80
        %417 = vst.msk [vmem:[%s416 + $0x1] sm:$0xff] %vm386, %v382
        %s418 = scalar_lea.vmem [#allocation2], 96
        %419 = vst.msk [vmem:[%s418 + $0x1] sm:$0xff] %vm386, %v383
        %s420 = scalar_lea.vmem [#allocation2], 112
        %421 = vst.msk [vmem:[%s420 + $0x1] sm:$0xff] %vm386, %v384
        %s422 = scalar_lea.vmem [#allocation2], 128
        %423 = vst.msk [vmem:[%s422 + $0x1] sm:$0xff] %vm386, %v385
        %v424 = vld [vmem:[#allocation2] sm:$0xff]
        %v425 = vld [vmem:[#allocation2 + $0x8] sm:$0x3]
        %v426 = vld [vmem:[#allocation2 + $0x10] sm:$0xff]
        %v427 = vld [vmem:[#allocation2 + $0x18] sm:$0x3]
        %v428 = vld [vmem:[#allocation2 + $0x20] sm:$0xff]
        %v429 = vld [vmem:[#allocation2 + $0x28] sm:$0x3]
        %v430 = vld [vmem:[#allocation2 + $0x30] sm:$0xff]
        %v431 = vld [vmem:[#allocation2 + $0x38] sm:$0x3]
        %v432 = vld [vmem:[#allocation2 + $0x40] sm:$0xff]
        %v433 = vld [vmem:[#allocation2 + $0x48] sm:$0x3]
        %v434 = vld [vmem:[#allocation2 + $0x50] sm:$0xff]
        %v435 = vld [vmem:[#allocation2 + $0x58] sm:$0x3]
        %v436 = vld [vmem:[#allocation2 + $0x60] sm:$0xff]
        %v437 = vld [vmem:[#allocation2 + $0x68] sm:$0x3]
        %v438 = vld [vmem:[#allocation2 + $0x70] sm:$0xff]
        %v439 = vld [vmem:[#allocation2 + $0x78] sm:$0x3]
        %v440 = vld [vmem:[#allocation2 + $0x80] sm:$0xff]
        %v441 = vld [vmem:[#allocation2 + $0x88] sm:$0x3]
        %v442 = vld [vmem:[#allocation2 + $0x90] sm:$0xff]
        %v443 = vld [vmem:[#allocation2 + $0x98] sm:$0x3]
        %v444 = vpack.c.bf16 %v426, %v424
        %v445 = vpack.c.bf16 %v430, %v428
        %v446 = vpack.c.bf16 %v434, %v432
        %v447 = vpack.c.bf16 %v438, %v436
        %v452 = vunpack.c.l.b16 %v444
        %v453 = vunpack.c.h.b16 %v444
        %v454 = vunpack.c.l.b16 %v445
        %v455 = vunpack.c.h.b16 %v445
        %v456 = vunpack.c.l.b16 %v446
        %v457 = vunpack.c.h.b16 %v446
        %v458 = vunpack.c.l.b16 %v447
        %v459 = vunpack.c.h.b16 %v447
        %v460 = vpack.c.b16 %v452, %v452
        %v461 = vpack.c.b16 %v453, %v453
        %v462 = vpack.c.b16 %v454, %v454
        %v463 = vpack.c.b16 %v455, %v455
        %v464 = vpack.c.b16 %v456, %v456
        %v465 = vpack.c.b16 %v457, %v457
        %v466 = vpack.c.b16 %v458, %v458
        %v467 = vpack.c.b16 %v459, %v459
        %vm476 = vcmask 519168
        %477 = vst.msk [vmem:[#allocation3] sm:$0xf] %vm476, %v460
        %478 = vst.msk [vmem:[#allocation3 + $0x14] sm:$0xf] %vm476, %v461
        %479 = vst.msk [vmem:[#allocation3 + $0x28] sm:$0xf] %vm476, %v462
        %480 = vst.msk [vmem:[#allocation3 + $0x3c] sm:$0xf] %vm476, %v463
        %481 = vst.msk [vmem:[#allocation3 + $0x50] sm:$0xf] %vm476, %v464
        %482 = vst.msk [vmem:[#allocation3 + $0x64] sm:$0xf] %vm476, %v465
        %483 = vst.msk [vmem:[#allocation3 + $0x78] sm:$0xf] %vm476, %v466
        %484 = vst.msk [vmem:[#allocation3 + $0x8c] sm:$0xf] %vm476, %v467
        %vm501 = vcmask 1046528
        %v502 = vrot.slane %v424, 1
        %v503 = vrot.slane %v425, 1
        %v504 = vsel %vm501, %v502, %v503
        %v505 = vrot.slane %v426, 1
        %v506 = vrot.slane %v427, 1
        %v507 = vsel %vm501, %v505, %v506
        %v508 = vrot.slane %v428, 1
        %v509 = vrot.slane %v429, 1
        %v510 = vsel %vm501, %v508, %v509
        %v511 = vrot.slane %v430, 1
        %v512 = vrot.slane %v431, 1
        %v513 = vsel %vm501, %v511, %v512
        %v514 = vrot.slane %v432, 1
        %v515 = vrot.slane %v433, 1
        %v516 = vsel %vm501, %v514, %v515
        %v517 = vrot.slane %v434, 1
        %v518 = vrot.slane %v435, 1
        %v519 = vsel %vm501, %v517, %v518
        %v520 = vrot.slane %v436, 1
        %v521 = vrot.slane %v437, 1
        %v522 = vsel %vm501, %v520, %v521
        %v523 = vrot.slane %v438, 1
        %v524 = vrot.slane %v439, 1
        %v525 = vsel %vm501, %v523, %v524
        %v534 = vpack.c.bf16 %v507, %v504
        %v535 = vpack.c.bf16 %v513, %v510
        %v536 = vpack.c.bf16 %v519, %v516
        %v537 = vpack.c.bf16 %v525, %v522
        %v542 = vunpack.c.l.b16 %v534
        %v543 = vunpack.c.h.b16 %v534
        %v544 = vunpack.c.l.b16 %v535
        %v545 = vunpack.c.h.b16 %v535
        %v546 = vunpack.c.l.b16 %v536
        %v547 = vunpack.c.h.b16 %v536
        %v548 = vunpack.c.l.b16 %v537
        %v549 = vunpack.c.h.b16 %v537
        %v550 = vpack.c.b16 %v542, %v542
        %v551 = vpack.c.b16 %v543, %v543
        %v552 = vpack.c.b16 %v544, %v544
        %v553 = vpack.c.b16 %v545, %v545
        %v554 = vpack.c.b16 %v546, %v546
        %v555 = vpack.c.b16 %v547, %v547
        %v556 = vpack.c.b16 %v548, %v548
        %v557 = vpack.c.b16 %v549, %v549
        %558 = vrot.lane.b32.xlu0 %v550, 64
        %v559 = vpop.permute.xlu0 %558
        %560 = vrot.lane.b32.xlu0 %v551, 64
        %v561 = vpop.permute.xlu0 %560
        %562 = vrot.lane.b32.xlu0 %v552, 64
        %v563 = vpop.permute.xlu0 %562
        %564 = vrot.lane.b32.xlu0 %v553, 64
        %v565 = vpop.permute.xlu0 %564
        %566 = vrot.lane.b32.xlu0 %v554, 64
        %v567 = vpop.permute.xlu0 %566
        %568 = vrot.lane.b32.xlu0 %v555, 64
        %v569 = vpop.permute.xlu0 %568
        %570 = vrot.lane.b32.xlu0 %v556, 64
        %v571 = vpop.permute.xlu0 %570
        %572 = vrot.lane.b32.xlu0 %v557, 64
        %v573 = vpop.permute.xlu0 %572
        %vm582 = vcmask 1043968
        %583 = vst.msk [vmem:[#allocation3] sm:$0xf] %vm582, %v559
        %584 = vst.msk [vmem:[#allocation3 + $0x14] sm:$0xf] %vm582, %v561
        %585 = vst.msk [vmem:[#allocation3 + $0x28] sm:$0xf] %vm582, %v563
        %586 = vst.msk [vmem:[#allocation3 + $0x3c] sm:$0xf] %vm582, %v565
        %587 = vst.msk [vmem:[#allocation3 + $0x50] sm:$0xf] %vm582, %v567
        %588 = vst.msk [vmem:[#allocation3 + $0x64] sm:$0xf] %vm582, %v569
        %589 = vst.msk [vmem:[#allocation3 + $0x78] sm:$0xf] %vm582, %v571
        %590 = vst.msk [vmem:[#allocation3 + $0x8c] sm:$0xf] %vm582, %v573
        %vm591 = vcmask 1045504
        %v592 = vrot.slane %v424, 2
        %v593 = vrot.slane %v425, 2
        %v594 = vsel %vm591, %v592, %v593
        %v595 = vrot.slane %v426, 2
        %v596 = vrot.slane %v427, 2
        %v597 = vsel %vm591, %v595, %v596
        %v598 = vrot.slane %v428, 2
        %v599 = vrot.slane %v429, 2
        %v600 = vsel %vm591, %v598, %v599
        %v601 = vrot.slane %v430, 2
        %v602 = vrot.slane %v431, 2
        %v603 = vsel %vm591, %v601, %v602
        %v604 = vrot.slane %v432, 2
        %v605 = vrot.slane %v433, 2
        %v606 = vsel %vm591, %v604, %v605
        %v607 = vrot.slane %v434, 2
        %v608 = vrot.slane %v435, 2
        %v609 = vsel %vm591, %v607, %v608
        %v610 = vrot.slane %v436, 2
        %v611 = vrot.slane %v437, 2
        %v612 = vsel %vm591, %v610, %v611
        %v613 = vrot.slane %v438, 2
        %v614 = vrot.slane %v439, 2
        %v615 = vsel %vm591, %v613, %v614
        %v624 = vpack.c.bf16 %v597, %v594
        %v625 = vpack.c.bf16 %v603, %v600
        %v626 = vpack.c.bf16 %v609, %v606
        %v627 = vpack.c.bf16 %v615, %v612
        %v632 = vunpack.c.l.b16 %v624
        %v633 = vunpack.c.h.b16 %v624
        %v634 = vunpack.c.l.b16 %v625
        %v635 = vunpack.c.h.b16 %v625
        %v636 = vunpack.c.l.b16 %v626
        %v637 = vunpack.c.h.b16 %v626
        %v638 = vunpack.c.l.b16 %v627
        %v639 = vunpack.c.h.b16 %v627
        %v640 = vpack.c.b16 %v632, %v632
        %v641 = vpack.c.b16 %v633, %v633
        %v642 = vpack.c.b16 %v634, %v634
        %v643 = vpack.c.b16 %v635, %v635
        %v644 = vpack.c.b16 %v636, %v636
        %v645 = vpack.c.b16 %v637, %v637
        %v646 = vpack.c.b16 %v638, %v638
        %v647 = vpack.c.b16 %v639, %v639
        %656 = vst.msk [vmem:[#allocation3 + $0x4] sm:$0xf] %vm476, %v640
        %657 = vst.msk [vmem:[#allocation3 + $0x18] sm:$0xf] %vm476, %v641
        %658 = vst.msk [vmem:[#allocation3 + $0x2c] sm:$0xf] %vm476, %v642
        %659 = vst.msk [vmem:[#allocation3 + $0x40] sm:$0xf] %vm476, %v643
        %660 = vst.msk [vmem:[#allocation3 + $0x54] sm:$0xf] %vm476, %v644
        %661 = vst.msk [vmem:[#allocation3 + $0x68] sm:$0xf] %vm476, %v645
        %662 = vst.msk [vmem:[#allocation3 + $0x7c] sm:$0xf] %vm476, %v646
        %663 = vst.msk [vmem:[#allocation3 + $0x90] sm:$0xf] %vm476, %v647
        %v664 = vpack.c.bf16 %v428, %v426
        %v665 = vpack.c.bf16 %v432, %v430
        %v666 = vpack.c.bf16 %v436, %v434
        %v667 = vpack.c.bf16 %v440, %v438
        %v672 = vunpack.c.l.b16 %v664
        %v673 = vunpack.c.h.b16 %v664
        %v674 = vunpack.c.l.b16 %v665
        %v675 = vunpack.c.h.b16 %v665
        %v676 = vunpack.c.l.b16 %v666
        %v677 = vunpack.c.h.b16 %v666
        %v678 = vunpack.c.l.b16 %v667
        %v679 = vunpack.c.h.b16 %v667
        %v680 = vpack.c.b16 %v672, %v672
        %v681 = vpack.c.b16 %v673, %v673
        %v682 = vpack.c.b16 %v674, %v674
        %v683 = vpack.c.b16 %v675, %v675
        %v684 = vpack.c.b16 %v676, %v676
        %v685 = vpack.c.b16 %v677, %v677
        %v686 = vpack.c.b16 %v678, %v678
        %v687 = vpack.c.b16 %v679, %v679
        %688 = vrot.lane.b32.xlu0 %v680, 64
        %v689 = vpop.permute.xlu0 %688
        %690 = vrot.lane.b32.xlu0 %v681, 64
        %v691 = vpop.permute.xlu0 %690
        %692 = vrot.lane.b32.xlu0 %v682, 64
        %v693 = vpop.permute.xlu0 %692
        %694 = vrot.lane.b32.xlu0 %v683, 64
        %v695 = vpop.permute.xlu0 %694
        %696 = vrot.lane.b32.xlu0 %v684, 64
        %v697 = vpop.permute.xlu0 %696
        %698 = vrot.lane.b32.xlu0 %v685, 64
        %v699 = vpop.permute.xlu0 %698
        %700 = vrot.lane.b32.xlu0 %v686, 64
        %v701 = vpop.permute.xlu0 %700
        %702 = vrot.lane.b32.xlu0 %v687, 64
        %v703 = vpop.permute.xlu0 %702
        %712 = vst.msk [vmem:[#allocation3 + $0x4] sm:$0xf] %vm582, %v689
        %713 = vst.msk [vmem:[#allocation3 + $0x18] sm:$0xf] %vm582, %v691
        %714 = vst.msk [vmem:[#allocation3 + $0x2c] sm:$0xf] %vm582, %v693
        %715 = vst.msk [vmem:[#allocation3 + $0x40] sm:$0xf] %vm582, %v695
        %716 = vst.msk [vmem:[#allocation3 + $0x54] sm:$0xf] %vm582, %v697
        %717 = vst.msk [vmem:[#allocation3 + $0x68] sm:$0xf] %vm582, %v699
        %718 = vst.msk [vmem:[#allocation3 + $0x7c] sm:$0xf] %vm582, %v701
        %719 = vst.msk [vmem:[#allocation3 + $0x90] sm:$0xf] %vm582, %v703
        %v722 = vrot.slane %v440, 1
        %v723 = vrot.slane %v441, 1
        %v724 = vsel %vm501, %v722, %v723
        %v726 = vpack.c.bf16 %v510, %v507
        %v727 = vpack.c.bf16 %v516, %v513
        %v728 = vpack.c.bf16 %v522, %v519
        %v729 = vpack.c.bf16 %v724, %v525
        %v734 = vunpack.c.l.b16 %v726
        %v735 = vunpack.c.h.b16 %v726
        %v736 = vunpack.c.l.b16 %v727
        %v737 = vunpack.c.h.b16 %v727
        %v738 = vunpack.c.l.b16 %v728
        %v739 = vunpack.c.h.b16 %v728
        %v740 = vunpack.c.l.b16 %v729
        %v741 = vunpack.c.h.b16 %v729
        %v742 = vpack.c.b16 %v734, %v734
        %v743 = vpack.c.b16 %v735, %v735
        %v744 = vpack.c.b16 %v736, %v736
        %v745 = vpack.c.b16 %v737, %v737
        %v746 = vpack.c.b16 %v738, %v738
        %v747 = vpack.c.b16 %v739, %v739
        %v748 = vpack.c.b16 %v740, %v740
        %v749 = vpack.c.b16 %v741, %v741
        %758 = vst.msk [vmem:[#allocation3 + $0x8] sm:$0xf] %vm476, %v742
        %759 = vst.msk [vmem:[#allocation3 + $0x1c] sm:$0xf] %vm476, %v743
        %760 = vst.msk [vmem:[#allocation3 + $0x30] sm:$0xf] %vm476, %v744
        %761 = vst.msk [vmem:[#allocation3 + $0x44] sm:$0xf] %vm476, %v745
        %762 = vst.msk [vmem:[#allocation3 + $0x58] sm:$0xf] %vm476, %v746
        %763 = vst.msk [vmem:[#allocation3 + $0x6c] sm:$0xf] %vm476, %v747
        %764 = vst.msk [vmem:[#allocation3 + $0x80] sm:$0xf] %vm476, %v748
        %765 = vst.msk [vmem:[#allocation3 + $0x94] sm:$0xf] %vm476, %v749
        %v766 = vrot.slane %v440, 2
        %v767 = vrot.slane %v441, 2
        %v768 = vsel %vm591, %v766, %v767
        %v770 = vpack.c.bf16 %v600, %v597
        %v771 = vpack.c.bf16 %v606, %v603
        %v772 = vpack.c.bf16 %v612, %v609
        %v773 = vpack.c.bf16 %v768, %v615
        %v778 = vunpack.c.l.b16 %v770
        %v779 = vunpack.c.h.b16 %v770
        %v780 = vunpack.c.l.b16 %v771
        %v781 = vunpack.c.h.b16 %v771
        %v782 = vunpack.c.l.b16 %v772
        %v783 = vunpack.c.h.b16 %v772
        %v784 = vunpack.c.l.b16 %v773
        %v785 = vunpack.c.h.b16 %v773
        %v786 = vpack.c.b16 %v778, %v778
        %v787 = vpack.c.b16 %v779, %v779
        %v788 = vpack.c.b16 %v780, %v780
        %v789 = vpack.c.b16 %v781, %v781
        %v790 = vpack.c.b16 %v782, %v782
        %v791 = vpack.c.b16 %v783, %v783
        %v792 = vpack.c.b16 %v784, %v784
        %v793 = vpack.c.b16 %v785, %v785
        %794 = vrot.lane.b32.xlu0 %v786, 64
        %v795 = vpop.permute.xlu0 %794
        %796 = vrot.lane.b32.xlu0 %v787, 64
        %v797 = vpop.permute.xlu0 %796
        %798 = vrot.lane.b32.xlu0 %v788, 64
        %v799 = vpop.permute.xlu0 %798
        %800 = vrot.lane.b32.xlu0 %v789, 64
        %v801 = vpop.permute.xlu0 %800
        %802 = vrot.lane.b32.xlu0 %v790, 64
        %v803 = vpop.permute.xlu0 %802
        %804 = vrot.lane.b32.xlu0 %v791, 64
        %v805 = vpop.permute.xlu0 %804
        %806 = vrot.lane.b32.xlu0 %v792, 64
        %v807 = vpop.permute.xlu0 %806
        %808 = vrot.lane.b32.xlu0 %v793, 64
        %v809 = vpop.permute.xlu0 %808
        %818 = vst.msk [vmem:[#allocation3 + $0x8] sm:$0xf] %vm582, %v795
        %819 = vst.msk [vmem:[#allocation3 + $0x1c] sm:$0xf] %vm582, %v797
        %820 = vst.msk [vmem:[#allocation3 + $0x30] sm:$0xf] %vm582, %v799
        %821 = vst.msk [vmem:[#allocation3 + $0x44] sm:$0xf] %vm582, %v801
        %822 = vst.msk [vmem:[#allocation3 + $0x58] sm:$0xf] %vm582, %v803
        %823 = vst.msk [vmem:[#allocation3 + $0x6c] sm:$0xf] %vm582, %v805
        %824 = vst.msk [vmem:[#allocation3 + $0x80] sm:$0xf] %vm582, %v807
        %825 = vst.msk [vmem:[#allocation3 + $0x94] sm:$0xf] %vm582, %v809
        %v826 = vpack.c.bf16 %v442, %v440
        %v828 = vunpack.c.l.b16 %v826
        %v829 = vunpack.c.h.b16 %v826
        %v830 = vpack.c.b16 %v828, %v828
        %v831 = vpack.c.b16 %v829, %v829
        %834 = vst.msk [vmem:[#allocation3 + $0xc] sm:$0xf] %vm476, %v462
        %835 = vst.msk [vmem:[#allocation3 + $0x20] sm:$0xf] %vm476, %v463
        %836 = vst.msk [vmem:[#allocation3 + $0x34] sm:$0xf] %vm476, %v464
        %837 = vst.msk [vmem:[#allocation3 + $0x48] sm:$0xf] %vm476, %v465
        %838 = vst.msk [vmem:[#allocation3 + $0x5c] sm:$0xf] %vm476, %v466
        %839 = vst.msk [vmem:[#allocation3 + $0x70] sm:$0xf] %vm476, %v467
        %840 = vst.msk [vmem:[#allocation3 + $0x84] sm:$0xf] %vm476, %v830
        %841 = vst.msk [vmem:[#allocation3 + $0x98] sm:$0xf] %vm476, %v831
        %v844 = vrot.slane %v442, 1
        %v845 = vrot.slane %v443, 1
        %v846 = vsel %vm501, %v844, %v845
        %v848 = vpack.c.bf16 %v846, %v724
        %v850 = vunpack.c.l.b16 %v848
        %v851 = vunpack.c.h.b16 %v848
        %v852 = vpack.c.b16 %v850, %v850
        %v853 = vpack.c.b16 %v851, %v851
        %854 = vrot.lane.b32.xlu0 %v852, 64
        %v855 = vpop.permute.xlu0 %854
        %856 = vrot.lane.b32.xlu0 %v853, 64
        %v857 = vpop.permute.xlu0 %856
        %860 = vst.msk [vmem:[#allocation3 + $0xc] sm:$0xf] %vm582, %v563
        %861 = vst.msk [vmem:[#allocation3 + $0x20] sm:$0xf] %vm582, %v565
        %862 = vst.msk [vmem:[#allocation3 + $0x34] sm:$0xf] %vm582, %v567
        %863 = vst.msk [vmem:[#allocation3 + $0x48] sm:$0xf] %vm582, %v569
        %864 = vst.msk [vmem:[#allocation3 + $0x5c] sm:$0xf] %vm582, %v571
        %865 = vst.msk [vmem:[#allocation3 + $0x70] sm:$0xf] %vm582, %v573
        %866 = vst.msk [vmem:[#allocation3 + $0x84] sm:$0xf] %vm582, %v855
        %867 = vst.msk [vmem:[#allocation3 + $0x98] sm:$0xf] %vm582, %v857
        %v868 = vrot.slane %v442, 2
        %v869 = vrot.slane %v443, 2
        %v870 = vsel %vm591, %v868, %v869
        %v872 = vpack.c.bf16 %v870, %v768
        %v874 = vunpack.c.l.b16 %v872
        %v875 = vunpack.c.h.b16 %v872
        %v876 = vpack.c.b16 %v874, %v874
        %v877 = vpack.c.b16 %v875, %v875
        %880 = vst.msk [vmem:[#allocation3 + $0x10] sm:$0xf] %vm476, %v642
        %881 = vst.msk [vmem:[#allocation3 + $0x24] sm:$0xf] %vm476, %v643
        %882 = vst.msk [vmem:[#allocation3 + $0x38] sm:$0xf] %vm476, %v644
        %883 = vst.msk [vmem:[#allocation3 + $0x4c] sm:$0xf] %vm476, %v645
        %884 = vst.msk [vmem:[#allocation3 + $0x60] sm:$0xf] %vm476, %v646
        %885 = vst.msk [vmem:[#allocation3 + $0x74] sm:$0xf] %vm476, %v647
        %886 = vst.msk [vmem:[#allocation3 + $0x88] sm:$0xf] %vm476, %v876
        %887 = vst.msk [vmem:[#allocation3 + $0x9c] sm:$0xf] %vm476, %v877
        %v888 = vld [vmem:[#allocation3] sm:$0xff]
        %v889 = vld [vmem:[#allocation3 + $0x8] sm:$0xff]
        %v890 = vld [vmem:[#allocation3 + $0x10] sm:$0xf]
        %v891 = vld [vmem:[#allocation3 + $0x14] sm:$0xff]
        %v892 = vld [vmem:[#allocation3 + $0x1c] sm:$0xff]
        %v893 = vld [vmem:[#allocation3 + $0x24] sm:$0xf]
        %v894 = vld [vmem:[#allocation3 + $0x28] sm:$0xff]
        %v895 = vld [vmem:[#allocation3 + $0x30] sm:$0xff]
        %v896 = vld [vmem:[#allocation3 + $0x38] sm:$0xf]
        %v897 = vld [vmem:[#allocation3 + $0x3c] sm:$0xff]
        %v898 = vld [vmem:[#allocation3 + $0x44] sm:$0xff]
        %v899 = vld [vmem:[#allocation3 + $0x4c] sm:$0xf]
        %v900 = vld [vmem:[#allocation3 + $0x50] sm:$0xff]
        %v901 = vld [vmem:[#allocation3 + $0x58] sm:$0xff]
        %v902 = vld [vmem:[#allocation3 + $0x60] sm:$0xf]
        %v903 = vld [vmem:[#allocation3 + $0x64] sm:$0xff]
        %v904 = vld [vmem:[#allocation3 + $0x6c] sm:$0xff]
        %v905 = vld [vmem:[#allocation3 + $0x74] sm:$0xf]
        %v906 = vld [vmem:[#allocation3 + $0x78] sm:$0xff]
        %v907 = vld [vmem:[#allocation3 + $0x80] sm:$0xff]
        %v908 = vld [vmem:[#allocation3 + $0x88] sm:$0xf]
        %v909 = vld [vmem:[#allocation3 + $0x8c] sm:$0xff]
        %v910 = vld [vmem:[#allocation3 + $0x94] sm:$0xff]
        %v911 = vld [vmem:[#allocation3 + $0x9c] sm:$0xf]
        %v912 = vld [vmem:[%s1] sm:$0xf]
        %v913 = vld [vmem:[%s1 + $0x4] sm:$0xf]
        %v914 = vld [vmem:[%s1 + $0x8] sm:$0xf]
        %v915 = vld [vmem:[%s1 + $0xc] sm:$0xf]
        %v916 = vld [vmem:[%s1 + $0x10] sm:$0xf]
        %v917 = vld [vmem:[%s1 + $0x14] sm:$0xf]
        %v918 = vld [vmem:[%s1 + $0x18] sm:$0xf]
        %v919 = vld [vmem:[%s1 + $0x1c] sm:$0xf]
        %v920 = vld [vmem:[%s1 + $0x20] sm:$0xf]
        %v921 = vld [vmem:[%s1 + $0x24] sm:$0xf]
        %v922 = vld [vmem:[%s1 + $0x28] sm:$0xf]
        %v923 = vld [vmem:[%s1 + $0x2c] sm:$0xf]
        %v924 = vld [vmem:[%s1 + $0x30] sm:$0xf]
        %v925 = vld [vmem:[%s1 + $0x34] sm:$0xf]
        %v926 = vld [vmem:[%s1 + $0x38] sm:$0xf]
        %v927 = vld [vmem:[%s1 + $0x3c] sm:$0xf]
        %v928 = vld [vmem:[%s1 + $0x40] sm:$0xf]
        %v929 = vld [vmem:[%s1 + $0x44] sm:$0xf]
        %v930 = vld [vmem:[%s1 + $0x48] sm:$0xf]
        %v931 = vld [vmem:[%s1 + $0x4c] sm:$0xf]
        %v932 = vld [vmem:[%s1 + $0x50] sm:$0xf]
        %v933 = vld [vmem:[%s1 + $0x54] sm:$0xf]
        %v934 = vld [vmem:[%s1 + $0x58] sm:$0xf]
        %v935 = vld [vmem:[%s1 + $0x5c] sm:$0xf]
        %v936 = vld [vmem:[%s1 + $0x60] sm:$0xf]
        %v937 = vld [vmem:[%s1 + $0x64] sm:$0xf]
        %v938 = vld [vmem:[%s1 + $0x68] sm:$0xf]
        %v939 = vld [vmem:[%s1 + $0x6c] sm:$0xf]
        %v940 = vld [vmem:[%s1 + $0x70] sm:$0xf]
        %v941 = vld [vmem:[%s1 + $0x74] sm:$0xf]
        %v942 = vld [vmem:[%s1 + $0x78] sm:$0xf]
        %v943 = vld [vmem:[%s1 + $0x7c] sm:$0xf]
        %v944 = vld [vmem:[%s1 + $0x80] sm:$0xf]
        %v945 = vld [vmem:[%s1 + $0x84] sm:$0xf]
        %v946 = vld [vmem:[%s1 + $0x88] sm:$0xf]
        %v947 = vld [vmem:[%s1 + $0x8c] sm:$0xf]
        %v948 = vld [vmem:[%s1 + $0x90] sm:$0xf]
        %v949 = vld [vmem:[%s1 + $0x94] sm:$0xf]
        %v950 = vld [vmem:[%s1 + $0x98] sm:$0xf]
        %v951 = vld [vmem:[%s1 + $0x9c] sm:$0xf]
        %v952 = vld [vmem:[%s1 + $0xa0] sm:$0xf]
        %v953 = vld [vmem:[%s1 + $0xa4] sm:$0xf]
        %v954 = vld [vmem:[%s1 + $0xa8] sm:$0xf]
        %v955 = vld [vmem:[%s1 + $0xac] sm:$0xf]
        %v956 = vld [vmem:[%s1 + $0xb0] sm:$0xf]
        %v957 = vld [vmem:[%s1 + $0xb4] sm:$0xf]
        %v958 = vld [vmem:[%s1 + $0xb8] sm:$0xf]
        %v959 = vld [vmem:[%s1 + $0xbc] sm:$0xf]
        %v960 = vld [vmem:[%s1 + $0xc0] sm:$0xf]
        %v961 = vld [vmem:[%s1 + $0xc4] sm:$0xf]
        %v962 = vld [vmem:[%s1 + $0xc8] sm:$0xf]
        %v963 = vld [vmem:[%s1 + $0xcc] sm:$0xf]
        %v964 = vld [vmem:[%s1 + $0xd0] sm:$0xf]
        %v965 = vld [vmem:[%s1 + $0xd4] sm:$0xf]
        %v966 = vld [vmem:[%s1 + $0xd8] sm:$0xf]
        %v967 = vld [vmem:[%s1 + $0xdc] sm:$0xf]
        %v968 = vld [vmem:[%s1 + $0xe0] sm:$0xf]
        %v969 = vld [vmem:[%s1 + $0xe4] sm:$0xf]
        %v970 = vld [vmem:[%s1 + $0xe8] sm:$0xf]
        %v971 = vld [vmem:[%s1 + $0xec] sm:$0xf]
        %v972 = vld [vmem:[%s1 + $0xf0] sm:$0xf]
        %v973 = vld [vmem:[%s1 + $0xf4] sm:$0xf]
        %v974 = vld [vmem:[%s1 + $0xf8] sm:$0xf]
        %v975 = vld [vmem:[%s1 + $0xfc] sm:$0xf]
        %v976 = vld [vmem:[%s1 + $0x100] sm:$0xf]
        %v977 = vld [vmem:[%s1 + $0x104] sm:$0xf]
        %v978 = vld [vmem:[%s1 + $0x108] sm:$0xf]
        %v979 = vld [vmem:[%s1 + $0x10c] sm:$0xf]
        %v980 = vld [vmem:[%s1 + $0x110] sm:$0xf]
        %v981 = vld [vmem:[%s1 + $0x114] sm:$0xf]
        %v982 = vld [vmem:[%s1 + $0x118] sm:$0xf]
        %v983 = vld [vmem:[%s1 + $0x11c] sm:$0xf]
        %v984 = vlaneseq
        %v985 = vshrl.u32 %v984, 7
        %v986 = vsub.s32 0, %v985
        %v987 = vrot.slane %v375, %v986
        %v1012 = vunpack.c.l.b16 %v888
        %v1013 = vunpack.c.h.b16 %v888
        %v1014 = vunpack.c.l.b16 %v889
        %v1015 = vunpack.c.h.b16 %v889
        %v1016 = vunpack.c.l.b16 %v890
        %v1017 = vunpack.c.l.b16 %v891
        %v1018 = vunpack.c.h.b16 %v891
        %v1019 = vunpack.c.l.b16 %v892
        %v1020 = vunpack.c.h.b16 %v892
        %v1021 = vunpack.c.l.b16 %v893
        %v1022 = vunpack.c.l.b16 %v894
        %v1023 = vunpack.c.h.b16 %v894
        %v1024 = vunpack.c.l.b16 %v895
        %v1025 = vunpack.c.h.b16 %v895
        %v1026 = vunpack.c.l.b16 %v896
        %v1027 = vunpack.c.l.b16 %v897
        %v1028 = vunpack.c.h.b16 %v897
        %v1029 = vunpack.c.l.b16 %v898
        %v1030 = vunpack.c.h.b16 %v898
        %v1031 = vunpack.c.l.b16 %v899
        %v1032 = vunpack.c.l.b16 %v900
        %v1033 = vunpack.c.h.b16 %v900
        %v1034 = vunpack.c.l.b16 %v901
        %v1035 = vunpack.c.h.b16 %v901
        %v1036 = vunpack.c.l.b16 %v902
        %v1037 = vunpack.c.l.b16 %v903
        %v1038 = vunpack.c.h.b16 %v903
        %v1039 = vunpack.c.l.b16 %v904
        %v1040 = vunpack.c.h.b16 %v904
        %v1041 = vunpack.c.l.b16 %v905
        %v1042 = vunpack.c.l.b16 %v906
        %v1043 = vunpack.c.h.b16 %v906
        %v1044 = vunpack.c.l.b16 %v907
        %v1045 = vunpack.c.h.b16 %v907
        %v1046 = vunpack.c.l.b16 %v908
        %v1047 = vunpack.c.l.b16 %v909
        %v1048 = vunpack.c.h.b16 %v909
        %v1049 = vunpack.c.l.b16 %v910
        %v1050 = vunpack.c.h.b16 %v910
        %v1051 = vunpack.c.l.b16 %v911
        %v1052 = vpack.c.b16 %v1017, %v1012
        %v1053 = vpack.c.b16 %v1018, %v1013
        %v1054 = vpack.c.b16 %v1019, %v1014
        %v1055 = vpack.c.b16 %v1020, %v1015
        %v1056 = vpack.c.b16 %v1021, %v1016
        %v1057 = vpack.c.b16 %v1027, %v1022
        %v1058 = vpack.c.b16 %v1028, %v1023
        %v1059 = vpack.c.b16 %v1029, %v1024
        %v1060 = vpack.c.b16 %v1030, %v1025
        %v1061 = vpack.c.b16 %v1031, %v1026
        %v1062 = vpack.c.b16 %v1037, %v1032
        %v1063 = vpack.c.b16 %v1038, %v1033
        %v1064 = vpack.c.b16 %v1039, %v1034
        %v1065 = vpack.c.b16 %v1040, %v1035
        %v1066 = vpack.c.b16 %v1041, %v1036
        %v1067 = vpack.c.b16 %v1047, %v1042
        %v1068 = vpack.c.b16 %v1048, %v1043
        %v1069 = vpack.c.b16 %v1049, %v1044
        %v1070 = vpack.c.b16 %v1050, %v1045
        %v1071 = vpack.c.b16 %v1051, %v1046
        %v1160 = vunpack.c.l.b16 %v912
        %v1161 = vunpack.c.l.b16 %v913
        %v1162 = vunpack.c.l.b16 %v914
        %v1163 = vunpack.c.l.b16 %v915
        %v1164 = vunpack.c.l.b16 %v916
        %v1165 = vunpack.c.l.b16 %v917
        %v1166 = vunpack.c.l.b16 %v918
        %v1167 = vunpack.c.l.b16 %v919
        %v1168 = vunpack.c.l.b16 %v920
        %v1169 = vunpack.c.l.b16 %v921
        %v1170 = vunpack.c.l.b16 %v922
        %v1171 = vunpack.c.l.b16 %v923
        %v1172 = vunpack.c.l.b16 %v924
        %v1173 = vunpack.c.l.b16 %v925
        %v1174 = vunpack.c.l.b16 %v926
        %v1175 = vunpack.c.l.b16 %v927
        %v1176 = vunpack.c.l.b16 %v928
        %v1177 = vunpack.c.l.b16 %v929
        %v1178 = vunpack.c.l.b16 %v930
        %v1179 = vunpack.c.l.b16 %v931
        %v1180 = vunpack.c.l.b16 %v932
        %v1181 = vunpack.c.l.b16 %v933
        %v1182 = vunpack.c.l.b16 %v934
        %v1183 = vunpack.c.l.b16 %v935
        %v1184 = vunpack.c.l.b16 %v936
        %v1185 = vunpack.c.l.b16 %v937
        %v1186 = vunpack.c.l.b16 %v938
        %v1187 = vunpack.c.l.b16 %v939
        %v1188 = vunpack.c.l.b16 %v940
        %v1189 = vunpack.c.l.b16 %v941
        %v1190 = vunpack.c.l.b16 %v942
        %v1191 = vunpack.c.l.b16 %v943
        %v1192 = vunpack.c.l.b16 %v944
        %v1193 = vunpack.c.l.b16 %v945
        %v1194 = vunpack.c.l.b16 %v946
        %v1195 = vunpack.c.l.b16 %v947
        %v1196 = vunpack.c.l.b16 %v948
        %v1197 = vunpack.c.l.b16 %v949
        %v1198 = vunpack.c.l.b16 %v950
        %v1199 = vunpack.c.l.b16 %v951
        %v1200 = vunpack.c.l.b16 %v952
        %v1201 = vunpack.c.l.b16 %v953
        %v1202 = vunpack.c.l.b16 %v954
        %v1203 = vunpack.c.l.b16 %v955
        %v1204 = vunpack.c.l.b16 %v956
        %v1205 = vunpack.c.l.b16 %v957
        %v1206 = vunpack.c.l.b16 %v958
        %v1207 = vunpack.c.l.b16 %v959
        %v1208 = vunpack.c.l.b16 %v960
        %v1209 = vunpack.c.l.b16 %v961
        %v1210 = vunpack.c.l.b16 %v962
        %v1211 = vunpack.c.l.b16 %v963
        %v1212 = vunpack.c.l.b16 %v964
        %v1213 = vunpack.c.l.b16 %v965
        %v1214 = vunpack.c.l.b16 %v966
        %v1215 = vunpack.c.l.b16 %v967
        %v1216 = vunpack.c.l.b16 %v968
        %v1217 = vunpack.c.l.b16 %v969
        %v1218 = vunpack.c.l.b16 %v970
        %v1219 = vunpack.c.l.b16 %v971
        %v1220 = vunpack.c.l.b16 %v972
        %v1221 = vunpack.c.l.b16 %v973
        %v1222 = vunpack.c.l.b16 %v974
        %v1223 = vunpack.c.l.b16 %v975
        %v1224 = vunpack.c.l.b16 %v976
        %v1225 = vunpack.c.l.b16 %v977
        %v1226 = vunpack.c.l.b16 %v978
        %v1227 = vunpack.c.l.b16 %v979
        %v1228 = vunpack.c.l.b16 %v980
        %v1229 = vunpack.c.l.b16 %v981
        %v1230 = vunpack.c.l.b16 %v982
        %v1231 = vunpack.c.l.b16 %v983
        %v1232 = vpack.c.b16 %v1161, %v1160
        %v1233 = vpack.c.b16 %v1163, %v1162
        %v1234 = vpack.c.b16 %v1165, %v1164
        %v1235 = vpack.c.b16 %v1167, %v1166
        %v1236 = vpack.c.b16 %v1169, %v1168
        %v1237 = vpack.c.b16 %v1171, %v1170
        %v1238 = vpack.c.b16 %v1173, %v1172
        %v1239 = vpack.c.b16 %v1175, %v1174
        %v1240 = vpack.c.b16 %v1177, %v1176
        %v1241 = vpack.c.b16 %v1179, %v1178
        %v1242 = vpack.c.b16 %v1181, %v1180
        %v1243 = vpack.c.b16 %v1183, %v1182
        %v1244 = vpack.c.b16 %v1185, %v1184
        %v1245 = vpack.c.b16 %v1187, %v1186
        %v1246 = vpack.c.b16 %v1189, %v1188
        %v1247 = vpack.c.b16 %v1191, %v1190
        %v1248 = vpack.c.b16 %v1193, %v1192
        %v1249 = vpack.c.b16 %v1195, %v1194
        %v1250 = vpack.c.b16 %v1197, %v1196
        %v1251 = vpack.c.b16 %v1199, %v1198
        %v1252 = vpack.c.b16 %v1201, %v1200
        %v1253 = vpack.c.b16 %v1203, %v1202
        %v1254 = vpack.c.b16 %v1205, %v1204
        %v1255 = vpack.c.b16 %v1207, %v1206
        %v1256 = vpack.c.b16 %v1209, %v1208
        %v1257 = vpack.c.b16 %v1211, %v1210
        %v1258 = vpack.c.b16 %v1213, %v1212
        %v1259 = vpack.c.b16 %v1215, %v1214
        %v1260 = vpack.c.b16 %v1217, %v1216
        %v1261 = vpack.c.b16 %v1219, %v1218
        %v1262 = vpack.c.b16 %v1221, %v1220
        %v1263 = vpack.c.b16 %v1223, %v1222
        %v1264 = vpack.c.b16 %v1225, %v1224
        %v1265 = vpack.c.b16 %v1227, %v1226
        %v1266 = vpack.c.b16 %v1229, %v1228
        %v1267 = vpack.c.b16 %v1231, %v1230
        %v1305 = vsel %vm386, %v1056, 0
        %v1308 = vsel %vm386, %v1061, 0
        %v1311 = vsel %vm386, %v1066, 0
        %v1314 = vsel %vm386, %v1071, 0
        %1316 = vmatprep.subr.bf16.mxu0 0
        %1317 = vmatpush1.bf16.msra.mxu0 %v1239
        %1318 = vmatprep.subr.bf16.mxu0 0
        %1319 = vmatpush1.bf16.msra.mxu0 %v1238
        %1320 = vmatprep.subr.bf16.mxu0 0
        %1321 = vmatpush1.bf16.msra.mxu0 %v1237
        %1322 = vmatprep.subr.bf16.mxu0 0
        %1323 = vmatpush1.bf16.msra.mxu0 %v1236
        %1324 = vmatprep.subr.bf16.mxu0 0
        %1325 = vmatpush1.bf16.msra.mxu0 %v1235
        %1326 = vmatprep.subr.bf16.mxu0 0
        %1327 = vmatpush1.bf16.msra.mxu0 %v1234
        %1328 = vmatprep.subr.bf16.mxu0 0
        %1329 = vmatpush1.bf16.msra.mxu0 %v1233
        %1330 = vmatprep.subr.bf16.mxu0 0
        %1331 = vmatpush1.bf16.msra.mxu0 %v1232
        %1332 = vmatprep.subr.bf16.mxu0 0
        %1333 = vmatpush2.bf16.msra.mxu0 %v1247
        %1334 = vmatprep.subr.bf16.mxu0 0
        %1335 = vmatpush2.bf16.msra.mxu0 %v1246
        %1336 = vmatprep.subr.bf16.mxu0 0
        %1337 = vmatpush2.bf16.msra.mxu0 %v1245
        %1338 = vmatprep.subr.bf16.mxu0 0
        %1339 = vmatpush2.bf16.msra.mxu0 %v1244
        %1340 = vmatprep.subr.bf16.mxu0 0
        %1341 = vmatpush2.bf16.msra.mxu0 %v1243
        %1342 = vmatprep.subr.bf16.mxu0 0
        %1343 = vmatpush2.bf16.msra.mxu0 %v1242
        %1344 = vmatprep.subr.bf16.mxu0 0
        %1345 = vmatpush2.bf16.msra.mxu0 %v1241
        %1346 = vmatprep.subr.bf16.mxu0 0
        %1347 = vmatpush2.bf16.msra.mxu0 %v1240
        %1348 = vmatprep.mubr.bf16.mxu0 %v1053
        %1349 = vmatmul.mubr.bf16.gmra.mxu0 %v1052
        %v1350 = vpop.f32.mrf.mxu0
        %v1351 = vadd.f32 %v987, %v1350
        %v1352 = vpop.f32.mrf.mxu0
        %v1353 = vpop.f32.mrf.mxu0
        %v1354 = vadd.f32 %v987, %v1353
        %v1355 = vpop.f32.mrf.mxu0
        %1356 = vmatprep.mubr.bf16.mxu0 %v1058
        %1357 = vmatmul.mubr.bf16.gmra.mxu0 %v1057
        %v1358 = vpop.f32.mrf.mxu0
        %v1359 = vadd.f32 %v987, %v1358
        %v1360 = vpop.f32.mrf.mxu0
        %v1361 = vpop.f32.mrf.mxu0
        %v1362 = vadd.f32 %v987, %v1361
        %v1363 = vpop.f32.mrf.mxu0
        %1364 = vmatprep.mubr.bf16.mxu0 %v1063
        %1365 = vmatmul.mubr.bf16.gmra.mxu0 %v1062
        %v1366 = vpop.f32.mrf.mxu0
        %v1367 = vadd.f32 %v987, %v1366
        %v1368 = vpop.f32.mrf.mxu0
        %v1369 = vpop.f32.mrf.mxu0
        %v1370 = vadd.f32 %v987, %v1369
        %v1371 = vpop.f32.mrf.mxu0
        %1372 = vmatprep.mubr.bf16.mxu0 %v1068
        %1373 = vmatmul.mubr.bf16.gmra.mxu0 %v1067
        %v1374 = vpop.f32.mrf.mxu0
        %v1375 = vadd.f32 %v987, %v1374
        %v1376 = vpop.f32.mrf.mxu0
        %v1377 = vpop.f32.mrf.mxu0
        %v1378 = vadd.f32 %v987, %v1377
        %v1379 = vpop.f32.mrf.mxu0
        %1380 = vdwg.mxu0
        %1381 = vmatprep.subr.bf16.mxu0 0
        %1382 = vmatpush1.bf16.msra.mxu0 %v1255
        %1383 = vmatprep.subr.bf16.mxu0 0
        %1384 = vmatpush1.bf16.msra.mxu0 %v1254
        %1385 = vmatprep.subr.bf16.mxu0 0
        %1386 = vmatpush1.bf16.msra.mxu0 %v1253
        %1387 = vmatprep.subr.bf16.mxu0 0
        %1388 = vmatpush1.bf16.msra.mxu0 %v1252
        %1389 = vmatprep.subr.bf16.mxu0 0
        %1390 = vmatpush1.bf16.msra.mxu0 %v1251
        %1391 = vmatprep.subr.bf16.mxu0 0
        %1392 = vmatpush1.bf16.msra.mxu0 %v1250
        %1393 = vmatprep.subr.bf16.mxu0 0
        %1394 = vmatpush1.bf16.msra.mxu0 %v1249
        %1395 = vmatprep.subr.bf16.mxu0 0
        %1396 = vmatpush1.bf16.msra.mxu0 %v1248
        %1397 = vmatprep.subr.bf16.mxu0 0
        %1398 = vmatpush2.bf16.msra.mxu0 %v1263
        %1399 = vmatprep.subr.bf16.mxu0 0
        %1400 = vmatpush2.bf16.msra.mxu0 %v1262
        %1401 = vmatprep.subr.bf16.mxu0 0
        %1402 = vmatpush2.bf16.msra.mxu0 %v1261
        %1403 = vmatprep.subr.bf16.mxu0 0
        %1404 = vmatpush2.bf16.msra.mxu0 %v1260
        %1405 = vmatprep.subr.bf16.mxu0 0
        %1406 = vmatpush2.bf16.msra.mxu0 %v1259
        %1407 = vmatprep.subr.bf16.mxu0 0
        %1408 = vmatpush2.bf16.msra.mxu0 %v1258
        %1409 = vmatprep.subr.bf16.mxu0 0
        %1410 = vmatpush2.bf16.msra.mxu0 %v1257
        %1411 = vmatprep.subr.bf16.mxu0 0
        %1412 = vmatpush2.bf16.msra.mxu0 %v1256
        %1413 = vmatprep.mubr.bf16.mxu0 %v1055
        %1414 = vmatmul.mubr.bf16.gmra.mxu0 %v1054
        %v1415 = vpop.f32.mrf.mxu0
        %v1416 = vadd.f32 %v1351, %v1415
        %v1417 = vpop.f32.mrf.mxu0
        %v1418 = vpop.f32.mrf.mxu0
        %v1419 = vadd.f32 %v1354, %v1418
        %v1420 = vpop.f32.mrf.mxu0
        %1421 = vmatprep.mubr.bf16.mxu0 %v1060
        %1422 = vmatmul.mubr.bf16.gmra.mxu0 %v1059
        %v1423 = vpop.f32.mrf.mxu0
        %v1424 = vadd.f32 %v1359, %v1423
        %v1425 = vpop.f32.mrf.mxu0
        %v1426 = vpop.f32.mrf.mxu0
        %v1427 = vadd.f32 %v1362, %v1426
        %v1428 = vpop.f32.mrf.mxu0
        %1429 = vmatprep.mubr.bf16.mxu0 %v1065
        %1430 = vmatmul.mubr.bf16.gmra.mxu0 %v1064
        %v1431 = vpop.f32.mrf.mxu0
        %v1432 = vadd.f32 %v1367, %v1431
        %v1433 = vpop.f32.mrf.mxu0
        %v1434 = vpop.f32.mrf.mxu0
        %v1435 = vadd.f32 %v1370, %v1434
        %v1436 = vpop.f32.mrf.mxu0
        %1437 = vmatprep.mubr.bf16.mxu0 %v1070
        %1438 = vmatmul.mubr.bf16.gmra.mxu0 %v1069
        %v1439 = vpop.f32.mrf.mxu0
        %v1440 = vadd.f32 %v1375, %v1439
        %v1441 = vpop.f32.mrf.mxu0
        %v1442 = vpop.f32.mrf.mxu0
        %v1443 = vadd.f32 %v1378, %v1442
        %v1444 = vpop.f32.mrf.mxu0
        %1445 = vdwg.mxu0
        %1446 = vmatprep.subr.bf16.mxu0 0
        %1447 = vmatpush1.bf16.msra.mxu0 0
        %1448 = vmatprep.subr.bf16.mxu0 0
        %1449 = vmatpush1.bf16.msra.mxu0 0
        %1450 = vmatprep.subr.bf16.mxu0 0
        %1451 = vmatpush1.bf16.msra.mxu0 0
        %1452 = vmatprep.subr.bf16.mxu0 0
        %1453 = vmatpush1.bf16.msra.mxu0 0
        %1454 = vmatprep.subr.bf16.mxu0 0
        %1455 = vmatpush1.bf16.msra.mxu0 %v1267
        %1456 = vmatprep.subr.bf16.mxu0 0
        %1457 = vmatpush1.bf16.msra.mxu0 %v1266
        %1458 = vmatprep.subr.bf16.mxu0 0
        %1459 = vmatpush1.bf16.msra.mxu0 %v1265
        %1460 = vmatprep.subr.bf16.mxu0 0
        %1461 = vmatpush1.bf16.msra.mxu0 %v1264
        %1462 = vmatprep.subr.bf16.mxu0 0
        %1463 = vmatpush2.bf16.msra.mxu0 0
        %1464 = vmatprep.subr.bf16.mxu0 0
        %1465 = vmatpush2.bf16.msra.mxu0 0
        %1466 = vmatprep.subr.bf16.mxu0 0
        %1467 = vmatpush2.bf16.msra.mxu0 0
        %1468 = vmatprep.subr.bf16.mxu0 0
        %1469 = vmatpush2.bf16.msra.mxu0 0
        %1470 = vmatprep.subr.bf16.mxu0 0
        %1471 = vmatpush2.bf16.msra.mxu0 0
        %1472 = vmatprep.subr.bf16.mxu0 0
        %1473 = vmatpush2.bf16.msra.mxu0 0
        %1474 = vmatprep.subr.bf16.mxu0 0
        %1475 = vmatpush2.bf16.msra.mxu0 0
        %1476 = vmatprep.subr.bf16.mxu0 0
        %1477 = vmatpush2.bf16.msra.mxu0 0
        %1478 = vmatprep.mubr.bf16.mxu0 0
        %1479 = vmatmul.mubr.bf16.gmra.mxu0 %v1305
        %v1480 = vpop.f32.mrf.mxu0
        %v1481 = vadd.f32 %v1416, %v1480
        %v1482 = vpop.f32.mrf.mxu0
        %v1483 = vpop.f32.mrf.mxu0
        %v1484 = vadd.f32 %v1419, %v1483
        %v1485 = vpop.f32.mrf.mxu0
        %1486 = vmatprep.mubr.bf16.mxu0 0
        %1487 = vmatmul.mubr.bf16.gmra.mxu0 %v1308
        %v1488 = vpop.f32.mrf.mxu0
        %v1489 = vadd.f32 %v1424, %v1488
        %v1490 = vpop.f32.mrf.mxu0
        %v1491 = vpop.f32.mrf.mxu0
        %v1492 = vadd.f32 %v1427, %v1491
        %v1493 = vpop.f32.mrf.mxu0
        %1494 = vmatprep.mubr.bf16.mxu0 0
        %1495 = vmatmul.mubr.bf16.gmra.mxu0 %v1311
        %v1496 = vpop.f32.mrf.mxu0
        %v1497 = vadd.f32 %v1432, %v1496
        %v1498 = vpop.f32.mrf.mxu0
        %v1499 = vpop.f32.mrf.mxu0
        %v1500 = vadd.f32 %v1435, %v1499
        %v1501 = vpop.f32.mrf.mxu0
        %1502 = vmatprep.mubr.bf16.mxu0 0
        %1503 = vmatmul.mubr.bf16.gmra.mxu0 %v1314
        %v1504 = vpop.f32.mrf.mxu0
        %v1505 = vadd.f32 %v1440, %v1504
        %v1506 = vpop.f32.mrf.mxu0
        %v1507 = vpop.f32.mrf.mxu0
        %v1508 = vadd.f32 %v1443, %v1507
        %v1509 = vpop.f32.mrf.mxu0
        %1510 = vdwg.mxu0
        %v1511 = vmax.f32 %v1481, 0.0
        %v1512 = vmax.f32 %v1484, 0.0
        %v1513 = vmax.f32 %v1489, 0.0
        %v1514 = vmax.f32 %v1492, 0.0
        %v1515 = vmax.f32 %v1497, 0.0
        %v1516 = vmax.f32 %v1500, 0.0
        %v1517 = vmax.f32 %v1505, 0.0
        %v1518 = vmax.f32 %v1508, 0.0
        %v1519 = vpack.c.bf16 %v1512, %v1511
        %v1520 = vpack.c.bf16 %v1514, %v1513
        %v1521 = vpack.c.bf16 %v1516, %v1515
        %v1522 = vpack.c.bf16 %v1518, %v1517
        %v1523 = vld [vmem:[%s5] sm:$0xf]
        %v1524 = vld [vmem:[%s5 + $0x4] sm:$0xf]
        %v1525 = vlaneseq
        %v1526 = vshrl.u32 %v1525, 7
        %v1527 = vsub.s32 4, %v1526
        %v1528 = vrot.slane %v375, %v1527
        %v1531 = vunpack.c.l.b16 %v1523
        %v1532 = vunpack.c.l.b16 %v1524
        %v1533 = vpack.c.b16 %v1532, %v1531
        %vm1535 = vcmask 130048
        %v1537 = vsel %vm1535, %v1519, 0
        %v1540 = vsel %vm1535, %v1520, 0
        %v1543 = vsel %vm1535, %v1521, 0
        %v1546 = vsel %vm1535, %v1522, 0
        %1548 = vmatprep.subr.bf16.mxu0 0
        %1549 = vmatpush1.bf16.msra.mxu0 0
        %1550 = vmatprep.subr.bf16.mxu0 0
        %1551 = vmatpush1.bf16.msra.mxu0 0
        %1552 = vmatprep.subr.bf16.mxu0 0
        %1553 = vmatpush1.bf16.msra.mxu0 0
        %1554 = vmatprep.subr.bf16.mxu0 0
        %1555 = vmatpush1.bf16.msra.mxu0 0
        %1556 = vmatprep.subr.bf16.mxu0 0
        %1557 = vmatpush1.bf16.msra.mxu0 0
        %1558 = vmatprep.subr.bf16.mxu0 0
        %1559 = vmatpush1.bf16.msra.mxu0 0
        %1560 = vmatprep.subr.bf16.mxu0 0
        %1561 = vmatpush1.bf16.msra.mxu0 0
        %1562 = vmatprep.subr.bf16.mxu0 0
        %1563 = vmatpush1.bf16.msra.mxu0 %v1533
        %1564 = vmatprep.subr.bf16.mxu0 0
        %1565 = vmatpush2.bf16.msra.mxu0 0
        %1566 = vmatprep.subr.bf16.mxu0 0
        %1567 = vmatpush2.bf16.msra.mxu0 0
        %1568 = vmatprep.subr.bf16.mxu0 0
        %1569 = vmatpush2.bf16.msra.mxu0 0
        %1570 = vmatprep.subr.bf16.mxu0 0
        %1571 = vmatpush2.bf16.msra.mxu0 0
        %1572 = vmatprep.subr.bf16.mxu0 0
        %1573 = vmatpush2.bf16.msra.mxu0 0
        %1574 = vmatprep.subr.bf16.mxu0 0
        %1575 = vmatpush2.bf16.msra.mxu0 0
        %1576 = vmatprep.subr.bf16.mxu0 0
        %1577 = vmatpush2.bf16.msra.mxu0 0
        %1578 = vmatprep.subr.bf16.mxu0 0
        %1579 = vmatpush2.bf16.msra.mxu0 0
        %1580 = vmatprep.mubr.bf16.mxu0 0
        %1581 = vmatmul.mubr.bf16.gmra.mxu0 %v1537
        %v1582 = vpop.f32.mrf.mxu0
        %v1583 = vadd.f32 %v1528, %v1582
        %v1584 = vpop.f32.mrf.mxu0
        %v1585 = vpop.f32.mrf.mxu0
        %v1586 = vadd.f32 %v1528, %v1585
        %v1587 = vpop.f32.mrf.mxu0
        %1588 = vmatprep.mubr.bf16.mxu0 0
        %1589 = vmatmul.mubr.bf16.gmra.mxu0 %v1540
        %v1590 = vpop.f32.mrf.mxu0
        %v1591 = vadd.f32 %v1528, %v1590
        %v1592 = vpop.f32.mrf.mxu0
        %v1593 = vpop.f32.mrf.mxu0
        %v1594 = vadd.f32 %v1528, %v1593
        %v1595 = vpop.f32.mrf.mxu0
        %1596 = vmatprep.mubr.bf16.mxu0 0
        %1597 = vmatmul.mubr.bf16.gmra.mxu0 %v1543
        %v1598 = vpop.f32.mrf.mxu0
        %v1599 = vadd.f32 %v1528, %v1598
        %v1600 = vpop.f32.mrf.mxu0
        %v1601 = vpop.f32.mrf.mxu0
        %v1602 = vadd.f32 %v1528, %v1601
        %v1603 = vpop.f32.mrf.mxu0
        %1604 = vmatprep.mubr.bf16.mxu0 0
        %1605 = vmatmul.mubr.bf16.gmra.mxu0 %v1546
        %v1606 = vpop.f32.mrf.mxu0
        %v1607 = vadd.f32 %v1528, %v1606
        %v1608 = vpop.f32.mrf.mxu0
        %v1609 = vpop.f32.mrf.mxu0
        %v1610 = vadd.f32 %v1528, %v1609
        %v1611 = vpop.f32.mrf.mxu0
        %1612 = vdwg.mxu0
        %1621 = vrot.lane.b32.xlu0 %v1583, 126
        %v1622 = vpop.permute.xlu0 %1621
        %1623 = vrot.lane.b32.xlu0 %v1586, 126
        %v1624 = vpop.permute.xlu0 %1623
        %1625 = vrot.lane.b32.xlu0 %v1591, 126
        %v1626 = vpop.permute.xlu0 %1625
        %1627 = vrot.lane.b32.xlu0 %v1594, 126
        %v1628 = vpop.permute.xlu0 %1627
        %1629 = vrot.lane.b32.xlu0 %v1599, 126
        %v1630 = vpop.permute.xlu0 %1629
        %1631 = vrot.lane.b32.xlu0 %v1602, 126
        %v1632 = vpop.permute.xlu0 %1631
        %1633 = vrot.lane.b32.xlu0 %v1607, 126
        %v1634 = vpop.permute.xlu0 %1633
        %1635 = vrot.lane.b32.xlu0 %v1610, 126
        %v1636 = vpop.permute.xlu0 %1635
        %vm1637 = vcmask 15360
        %v1638 = vsel %vm1637, %v1583, 0
        %v1640 = vsel %vm1637, %v1586, 0
        %v1642 = vsel %vm1637, %v1591, 0
        %v1644 = vsel %vm1637, %v1594, 0
        %v1646 = vsel %vm1637, %v1599, 0
        %v1648 = vsel %vm1637, %v1602, 0
        %v1650 = vsel %vm1637, %v1607, 0
        %v1652 = vsel %vm1637, %v1610, 0
        %v1654 = vsel %vm1637, %v1622, 0
        %v1656 = vsel %vm1637, %v1624, 0
        %v1658 = vsel %vm1637, %v1626, 0
        %v1660 = vsel %vm1637, %v1628, 0
        %v1662 = vsel %vm1637, %v1630, 0
        %v1664 = vsel %vm1637, %v1632, 0
        %v1666 = vsel %vm1637, %v1634, 0
        %v1668 = vsel %vm1637, %v1636, 0
        %1670 = vmatprep.subr.mxu0 0.0
        %1671 = vmatpush1.xpose.msra.mxu0 0.0
        %1672 = vmatprep.subr.mxu0 0.0
        %1673 = vmatpush1.xpose.msra.mxu0 0.0
        %1674 = vmatprep.subr.mxu0 0.0
        %1675 = vmatpush1.xpose.msra.mxu0 0.0
        %1676 = vmatprep.subr.mxu0 0.0
        %1677 = vmatpush1.xpose.msra.mxu0 0.0
        %1678 = vmatprep.subr.mxu0 0.0
        %1679 = vmatpush1.xpose.msra.mxu0 0.0
        %1680 = vmatprep.subr.mxu0 0.0
        %1681 = vmatpush1.xpose.msra.mxu0 0.0
        %1682 = vmatprep.subr.mxu0 0.0
        %1683 = vmatpush1.xpose.msra.mxu0 0.0
        %1684 = vmatprep.subr.mxu0 0.0
        %1685 = vmatpush1.xpose.msra.mxu0 0.0
        %1686 = vmatprep.subr.mxu0 0.0
        %1687 = vmatpush1.xpose.msra.mxu0 %v1668
        %1688 = vmatprep.subr.mxu0 0.0
        %1689 = vmatpush1.xpose.msra.mxu0 %v1666
        %1690 = vmatprep.subr.mxu0 0.0
        %1691 = vmatpush1.xpose.msra.mxu0 %v1664
        %1692 = vmatprep.subr.mxu0 0.0
        %1693 = vmatpush1.xpose.msra.mxu0 %v1662
        %1694 = vmatprep.subr.mxu0 0.0
        %1695 = vmatpush1.xpose.msra.mxu0 %v1660
        %1696 = vmatprep.subr.mxu0 0.0
        %1697 = vmatpush1.xpose.msra.mxu0 %v1658
        %1698 = vmatprep.subr.mxu0 0.0
        %1699 = vmatpush1.xpose.msra.mxu0 %v1656
        %1700 = vmatprep.subr.mxu0 0.0
        %1701 = vmatpush1.xpose.msra.mxu0 %v1654
        %1702 = vmatprep.subr.mxu0 0.0
        %1703 = vmatpush2.xpose.msra.mxu0 0.0
        %1704 = vmatprep.subr.mxu0 0.0
        %1705 = vmatpush2.xpose.msra.mxu0 0.0
        %1706 = vmatprep.subr.mxu0 0.0
        %1707 = vmatpush2.xpose.msra.mxu0 0.0
        %1708 = vmatprep.subr.mxu0 0.0
        %1709 = vmatpush2.xpose.msra.mxu0 0.0
        %1710 = vmatprep.subr.mxu0 0.0
        %1711 = vmatpush2.xpose.msra.mxu0 0.0
        %1712 = vmatprep.subr.mxu0 0.0
        %1713 = vmatpush2.xpose.msra.mxu0 0.0
        %1714 = vmatprep.subr.mxu0 0.0
        %1715 = vmatpush2.xpose.msra.mxu0 0.0
        %1716 = vmatprep.subr.mxu0 0.0
        %1717 = vmatpush2.xpose.msra.mxu0 0.0
        %1718 = vmatprep.subr.mxu0 0.0
        %1719 = vmatpush2.xpose.msra.mxu0 0.0
        %1720 = vmatprep.subr.mxu0 0.0
        %1721 = vmatpush2.xpose.msra.mxu0 0.0
        %1722 = vmatprep.subr.mxu0 0.0
        %1723 = vmatpush2.xpose.msra.mxu0 0.0
        %1724 = vmatprep.subr.mxu0 0.0
        %1725 = vmatpush2.xpose.msra.mxu0 0.0
        %1726 = vmatprep.subr.mxu0 0.0
        %1727 = vmatpush2.xpose.msra.mxu0 0.0
        %1728 = vmatprep.subr.mxu0 0.0
        %1729 = vmatpush2.xpose.msra.mxu0 0.0
        %1730 = vmatprep.subr.mxu0 0.0
        %1731 = vmatpush2.xpose.msra.mxu0 0.0
        %1732 = vmatprep.subr.mxu0 0.0
        %1733 = vmatpush2.xpose.msra.mxu0 0.0
        %1734 = vmatprep.mubr.f32.mxu0 0.0
        %1735 = vmatmul.mubr.f32.gmra.mxu0 %v1638
        %v1736 = vpop.f32.mrf.mxu0
        %v1737 = vadd.f32 0.0, %v1736
        %v1738 = vpop.f32.mrf.mxu0
        %1739 = vmatprep.mubr.f32.mxu0 0.0
        %1740 = vmatmul.mubr.f32.gmra.mxu0 %v1640
        %v1741 = vpop.f32.mrf.mxu0
        %v1742 = vadd.f32 0.0, %v1741
        %v1743 = vpop.f32.mrf.mxu0
        %1744 = vmatprep.mubr.f32.mxu0 0.0
        %1745 = vmatmul.mubr.f32.gmra.mxu0 %v1642
        %v1746 = vpop.f32.mrf.mxu0
        %v1747 = vadd.f32 0.0, %v1746
        %v1748 = vpop.f32.mrf.mxu0
        %1749 = vmatprep.mubr.f32.mxu0 0.0
        %1750 = vmatmul.mubr.f32.gmra.mxu0 %v1644
        %v1751 = vpop.f32.mrf.mxu0
        %v1752 = vadd.f32 0.0, %v1751
        %v1753 = vpop.f32.mrf.mxu0
        %1754 = vmatprep.mubr.f32.mxu0 0.0
        %1755 = vmatmul.mubr.f32.gmra.mxu0 %v1646
        %v1756 = vpop.f32.mrf.mxu0
        %v1757 = vadd.f32 0.0, %v1756
        %v1758 = vpop.f32.mrf.mxu0
        %1759 = vmatprep.mubr.f32.mxu0 0.0
        %1760 = vmatmul.mubr.f32.gmra.mxu0 %v1648
        %v1761 = vpop.f32.mrf.mxu0
        %v1762 = vadd.f32 0.0, %v1761
        %v1763 = vpop.f32.mrf.mxu0
        %1764 = vmatprep.mubr.f32.mxu0 0.0
        %1765 = vmatmul.mubr.f32.gmra.mxu0 %v1650
        %v1766 = vpop.f32.mrf.mxu0
        %v1767 = vadd.f32 0.0, %v1766
        %v1768 = vpop.f32.mrf.mxu0
        %1769 = vmatprep.mubr.f32.mxu0 0.0
        %1770 = vmatmul.mubr.f32.gmra.mxu0 %v1652
        %v1771 = vpop.f32.mrf.mxu0
        %v1772 = vadd.f32 0.0, %v1771
        %v1773 = vpop.f32.mrf.mxu0
        %1774 = vdwg.mxu0
        %v1775 = vsel %vm386, %v1737, -inf
        %1776 = vmax.xlane.f32.xlu0 %v1775
        %v1777 = vpop.xlane.xlu0 %1776
        %v1778 = vsel %vm386, %v1742, -inf
        %1779 = vmax.xlane.f32.xlu0 %v1778
        %v1780 = vpop.xlane.xlu0 %1779
        %v1781 = vsel %vm386, %v1747, -inf
        %1782 = vmax.xlane.f32.xlu0 %v1781
        %v1783 = vpop.xlane.xlu0 %1782
        %v1784 = vsel %vm386, %v1752, -inf
        %1785 = vmax.xlane.f32.xlu0 %v1784
        %v1786 = vpop.xlane.xlu0 %1785
        %v1787 = vsel %vm386, %v1757, -inf
        %1788 = vmax.xlane.f32.xlu0 %v1787
        %v1789 = vpop.xlane.xlu0 %1788
        %v1790 = vsel %vm386, %v1762, -inf
        %1791 = vmax.xlane.f32.xlu0 %v1790
        %v1792 = vpop.xlane.xlu0 %1791
        %v1793 = vsel %vm386, %v1767, -inf
        %1794 = vmax.xlane.f32.xlu0 %v1793
        %v1795 = vpop.xlane.xlu0 %1794
        %v1796 = vsel %vm386, %v1772, -inf
        %1797 = vmax.xlane.f32.xlu0 %v1796
        %v1798 = vpop.xlane.xlu0 %1797
        %v1799 = vsub.f32 %v1737, %v1777
        %v1800 = vsub.f32 %v1742, %v1780
        %v1801 = vsub.f32 %v1747, %v1783
        %v1802 = vsub.f32 %v1752, %v1786
        %v1803 = vsub.f32 %v1757, %v1789
        %v1804 = vsub.f32 %v1762, %v1792
        %v1805 = vsub.f32 %v1767, %v1795
        %v1806 = vsub.f32 %v1772, %v1798
        %v1807 = vmul.f32 %v1799, 1.442695
        %v1808 = vpow.pop %v1807
        %v1809 = vmul.f32 %v1800, 1.442695
        %v1810 = vpow.pop %v1809
        %v1811 = vmul.f32 %v1801, 1.442695
        %v1812 = vpow.pop %v1811
        %v1813 = vmul.f32 %v1802, 1.442695
        %v1814 = vpow.pop %v1813
        %v1815 = vmul.f32 %v1803, 1.442695
        %v1816 = vpow.pop %v1815
        %v1817 = vmul.f32 %v1804, 1.442695
        %v1818 = vpow.pop %v1817
        %v1819 = vmul.f32 %v1805, 1.442695
        %v1820 = vpow.pop %v1819
        %v1821 = vmul.f32 %v1806, 1.442695
        %v1822 = vpow.pop %v1821
        %v1823 = vsel %vm386, %v1808, 0.0
        %1824 = vadd.xlane.f32.xlu0 %v1823
        %v1825 = vpop.xlane.xlu0 %1824
        %v1826 = vsel %vm386, %v1810, 0.0
        %1827 = vadd.xlane.f32.xlu0 %v1826
        %v1828 = vpop.xlane.xlu0 %1827
        %v1829 = vsel %vm386, %v1812, 0.0
        %1830 = vadd.xlane.f32.xlu0 %v1829
        %v1831 = vpop.xlane.xlu0 %1830
        %v1832 = vsel %vm386, %v1814, 0.0
        %1833 = vadd.xlane.f32.xlu0 %v1832
        %v1834 = vpop.xlane.xlu0 %1833
        %v1835 = vsel %vm386, %v1816, 0.0
        %1836 = vadd.xlane.f32.xlu0 %v1835
        %v1837 = vpop.xlane.xlu0 %1836
        %v1838 = vsel %vm386, %v1818, 0.0
        %1839 = vadd.xlane.f32.xlu0 %v1838
        %v1840 = vpop.xlane.xlu0 %1839
        %v1841 = vsel %vm386, %v1820, 0.0
        %1842 = vadd.xlane.f32.xlu0 %v1841
        %v1843 = vpop.xlane.xlu0 %1842
        %v1844 = vsel %vm386, %v1822, 0.0
        %1845 = vadd.xlane.f32.xlu0 %v1844
        %v1846 = vpop.xlane.xlu0 %1845
        %v1847 = vrcp.pop %v1825
        %v1848 = vrcp.pop %v1828
        %v1849 = vrcp.pop %v1831
        %v1850 = vrcp.pop %v1834
        %v1851 = vrcp.pop %v1837
        %v1852 = vrcp.pop %v1840
        %v1853 = vrcp.pop %v1843
        %v1854 = vrcp.pop %v1846
        %v1855 = vmul.f32 %v1808, %v1847
        %v1856 = vmul.f32 %v1810, %v1848
        %v1857 = vmul.f32 %v1812, %v1849
        %v1858 = vmul.f32 %v1814, %v1850
        %v1859 = vmul.f32 %v1816, %v1851
        %v1860 = vmul.f32 %v1818, %v1852
        %v1861 = vmul.f32 %v1820, %v1853
        %v1862 = vmul.f32 %v1822, %v1854
        %1863 = vrot.lane.b32.xlu0 %v1583, 124
        %v1864 = vpop.permute.xlu0 %1863
        %1865 = vrot.lane.b32.xlu0 %v1586, 124
        %v1866 = vpop.permute.xlu0 %1865
        %1867 = vrot.lane.b32.xlu0 %v1591, 124
        %v1868 = vpop.permute.xlu0 %1867
        %1869 = vrot.lane.b32.xlu0 %v1594, 124
        %v1870 = vpop.permute.xlu0 %1869
        %1871 = vrot.lane.b32.xlu0 %v1599, 124
        %v1872 = vpop.permute.xlu0 %1871
        %1873 = vrot.lane.b32.xlu0 %v1602, 124
        %v1874 = vpop.permute.xlu0 %1873
        %1875 = vrot.lane.b32.xlu0 %v1607, 124
        %v1876 = vpop.permute.xlu0 %1875
        %1877 = vrot.lane.b32.xlu0 %v1610, 124
        %v1878 = vpop.permute.xlu0 %1877
        %v1888 = vsel %vm386, %v1855, 0
        %v1891 = vsel %vm386, %v1856, 0
        %v1894 = vsel %vm386, %v1857, 0
        %v1897 = vsel %vm386, %v1858, 0
        %v1900 = vsel %vm386, %v1859, 0
        %v1903 = vsel %vm386, %v1860, 0
        %v1906 = vsel %vm386, %v1861, 0
        %v1909 = vsel %vm386, %v1862, 0
        %1911 = vmatprep.subr.mxu0 0.0
        %1912 = vmatpush1.msra.mxu0 0.0
        %1913 = vmatprep.subr.mxu0 0.0
        %1914 = vmatpush1.msra.mxu0 0.0
        %1915 = vmatprep.subr.mxu0 0.0
        %1916 = vmatpush1.msra.mxu0 0.0
        %1917 = vmatprep.subr.mxu0 0.0
        %1918 = vmatpush1.msra.mxu0 0.0
        %1919 = vmatprep.subr.mxu0 0.0
        %1920 = vmatpush1.msra.mxu0 0.0
        %1921 = vmatprep.subr.mxu0 0.0
        %1922 = vmatpush1.msra.mxu0 0.0
        %1923 = vmatprep.subr.mxu0 0.0
        %1924 = vmatpush1.msra.mxu0 0.0
        %1925 = vmatprep.subr.mxu0 0.0
        %1926 = vmatpush1.msra.mxu0 0.0
        %1927 = vmatprep.subr.mxu0 0.0
        %1928 = vmatpush1.msra.mxu0 %v1878
        %1929 = vmatprep.subr.mxu0 0.0
        %1930 = vmatpush1.msra.mxu0 %v1876
        %1931 = vmatprep.subr.mxu0 0.0
        %1932 = vmatpush1.msra.mxu0 %v1874
        %1933 = vmatprep.subr.mxu0 0.0
        %1934 = vmatpush1.msra.mxu0 %v1872
        %1935 = vmatprep.subr.mxu0 0.0
        %1936 = vmatpush1.msra.mxu0 %v1870
        %1937 = vmatprep.subr.mxu0 0.0
        %1938 = vmatpush1.msra.mxu0 %v1868
        %1939 = vmatprep.subr.mxu0 0.0
        %1940 = vmatpush1.msra.mxu0 %v1866
        %1941 = vmatprep.subr.mxu0 0.0
        %1942 = vmatpush1.msra.mxu0 %v1864
        %1943 = vmatprep.subr.mxu0 0.0
        %1944 = vmatpush2.msra.mxu0 0.0
        %1945 = vmatprep.subr.mxu0 0.0
        %1946 = vmatpush2.msra.mxu0 0.0
        %1947 = vmatprep.subr.mxu0 0.0
        %1948 = vmatpush2.msra.mxu0 0.0
        %1949 = vmatprep.subr.mxu0 0.0
        %1950 = vmatpush2.msra.mxu0 0.0
        %1951 = vmatprep.subr.mxu0 0.0
        %1952 = vmatpush2.msra.mxu0 0.0
        %1953 = vmatprep.subr.mxu0 0.0
        %1954 = vmatpush2.msra.mxu0 0.0
        %1955 = vmatprep.subr.mxu0 0.0
        %1956 = vmatpush2.msra.mxu0 0.0
        %1957 = vmatprep.subr.mxu0 0.0
        %1958 = vmatpush2.msra.mxu0 0.0
        %1959 = vmatprep.subr.mxu0 0.0
        %1960 = vmatpush2.msra.mxu0 0.0
        %1961 = vmatprep.subr.mxu0 0.0
        %1962 = vmatpush2.msra.mxu0 0.0
        %1963 = vmatprep.subr.mxu0 0.0
        %1964 = vmatpush2.msra.mxu0 0.0
        %1965 = vmatprep.subr.mxu0 0.0
        %1966 = vmatpush2.msra.mxu0 0.0
        %1967 = vmatprep.subr.mxu0 0.0
        %1968 = vmatpush2.msra.mxu0 0.0
        %1969 = vmatprep.subr.mxu0 0.0
        %1970 = vmatpush2.msra.mxu0 0.0
        %1971 = vmatprep.subr.mxu0 0.0
        %1972 = vmatpush2.msra.mxu0 0.0
        %1973 = vmatprep.subr.mxu0 0.0
        %1974 = vmatpush2.msra.mxu0 0.0
        %1975 = vmatprep.mubr.f32.mxu0 0.0
        %1976 = vmatmul.mubr.f32.gmra.mxu0 %v1888
        %v1977 = vpop.f32.mrf.mxu0
        %v1978 = vadd.f32 0.0, %v1977
        %v1979 = vpop.f32.mrf.mxu0
        %1980 = vmatprep.mubr.f32.mxu0 0.0
        %1981 = vmatmul.mubr.f32.gmra.mxu0 %v1891
        %v1982 = vpop.f32.mrf.mxu0
        %v1983 = vadd.f32 0.0, %v1982
        %v1984 = vpop.f32.mrf.mxu0
        %1985 = vmatprep.mubr.f32.mxu0 0.0
        %1986 = vmatmul.mubr.f32.gmra.mxu0 %v1894
        %v1987 = vpop.f32.mrf.mxu0
        %v1988 = vadd.f32 0.0, %v1987
        %v1989 = vpop.f32.mrf.mxu0
        %1990 = vmatprep.mubr.f32.mxu0 0.0
        %1991 = vmatmul.mubr.f32.gmra.mxu0 %v1897
        %v1992 = vpop.f32.mrf.mxu0
        %v1993 = vadd.f32 0.0, %v1992
        %v1994 = vpop.f32.mrf.mxu0
        %1995 = vmatprep.mubr.f32.mxu0 0.0
        %1996 = vmatmul.mubr.f32.gmra.mxu0 %v1900
        %v1997 = vpop.f32.mrf.mxu0
        %v1998 = vadd.f32 0.0, %v1997
        %v1999 = vpop.f32.mrf.mxu0
        %2000 = vmatprep.mubr.f32.mxu0 0.0
        %2001 = vmatmul.mubr.f32.gmra.mxu0 %v1903
        %v2002 = vpop.f32.mrf.mxu0
        %v2003 = vadd.f32 0.0, %v2002
        %v2004 = vpop.f32.mrf.mxu0
        %2005 = vmatprep.mubr.f32.mxu0 0.0
        %2006 = vmatmul.mubr.f32.gmra.mxu0 %v1906
        %v2007 = vpop.f32.mrf.mxu0
        %v2008 = vadd.f32 0.0, %v2007
        %v2009 = vpop.f32.mrf.mxu0
        %2010 = vmatprep.mubr.f32.mxu0 0.0
        %2011 = vmatmul.mubr.f32.gmra.mxu0 %v1909
        %v2012 = vpop.f32.mrf.mxu0
        %v2013 = vadd.f32 0.0, %v2012
        %v2014 = vpop.f32.mrf.mxu0
        %2015 = vdwg.mxu0
        %v2016 = vstv %s376
        %v2017 = vmul.f32 %v2016, %v1978
        %v2018 = vmul.f32 %v2016, %v1983
        %v2019 = vmul.f32 %v2016, %v1988
        %v2020 = vmul.f32 %v2016, %v1993
        %v2021 = vmul.f32 %v2016, %v1998
        %v2022 = vmul.f32 %v2016, %v2003
        %v2023 = vmul.f32 %v2016, %v2008
        %v2024 = vmul.f32 %v2016, %v2013
        %v2025 = vadd.f32 %v2017, %v1511
        %v2026 = vadd.f32 %v2018, %v1512
        %v2027 = vadd.f32 %v2019, %v1513
        %v2028 = vadd.f32 %v2020, %v1514
        %v2029 = vadd.f32 %v2021, %v1515
        %v2030 = vadd.f32 %v2022, %v1516
        %v2031 = vadd.f32 %v2023, %v1517
        %v2032 = vadd.f32 %v2024, %v1518
        %2033 = vst.msk [vmem:[#allocation4] sm:$0xff] %vm1535, 0.0
        %vm2034 = vcmask 123904
        %2035 = vst.msk [vmem:[#allocation4 + $0x8] sm:$0x3] %vm2034, 0.0
        %2036 = vst.msk [vmem:[#allocation4 + $0x10] sm:$0xff] %vm1535, 0.0
        %2037 = vst.msk [vmem:[#allocation4 + $0x18] sm:$0x3] %vm2034, 0.0
        %2038 = vst.msk [vmem:[#allocation4 + $0x20] sm:$0xff] %vm1535, 0.0
        %2039 = vst.msk [vmem:[#allocation4 + $0x28] sm:$0x3] %vm2034, 0.0
        %2040 = vst.msk [vmem:[#allocation4 + $0x30] sm:$0xff] %vm1535, 0.0
        %2041 = vst.msk [vmem:[#allocation4 + $0x38] sm:$0x3] %vm2034, 0.0
        %2042 = vst.msk [vmem:[#allocation4 + $0x40] sm:$0xff] %vm1535, 0.0
        %2043 = vst.msk [vmem:[#allocation4 + $0x48] sm:$0x3] %vm2034, 0.0
        %2044 = vst.msk [vmem:[#allocation4 + $0x50] sm:$0xff] %vm1535, 0.0
        %2045 = vst.msk [vmem:[#allocation4 + $0x58] sm:$0x3] %vm2034, 0.0
        %2046 = vst.msk [vmem:[#allocation4 + $0x60] sm:$0xff] %vm1535, 0.0
        %2047 = vst.msk [vmem:[#allocation4 + $0x68] sm:$0x3] %vm2034, 0.0
        %2048 = vst.msk [vmem:[#allocation4 + $0x70] sm:$0xff] %vm1535, 0.0
        %2049 = vst.msk [vmem:[#allocation4 + $0x78] sm:$0x3] %vm2034, 0.0
        %2050 = vst.msk [vmem:[#allocation4 + $0x80] sm:$0xff] %vm1535, 0.0
        %2051 = vst.msk [vmem:[#allocation4 + $0x88] sm:$0x3] %vm2034, 0.0
        %2052 = vst.msk [vmem:[#allocation4 + $0x90] sm:$0xff] %vm1535, 0.0
        %2053 = vst.msk [vmem:[#allocation4 + $0x98] sm:$0x3] %vm2034, 0.0
        %s2054 = scalar_lea.vmem [#allocation4], 16
        %2055 = vst.msk [vmem:[%s2054 + $0x1] sm:$0xff] %vm1535, %v2025
        %s2056 = scalar_lea.vmem [#allocation4], 32
        %2057 = vst.msk [vmem:[%s2056 + $0x1] sm:$0xff] %vm1535, %v2026
        %s2058 = scalar_lea.vmem [#allocation4], 48
        %2059 = vst.msk [vmem:[%s2058 + $0x1] sm:$0xff] %vm1535, %v2027
        %s2060 = scalar_lea.vmem [#allocation4], 64
        %2061 = vst.msk [vmem:[%s2060 + $0x1] sm:$0xff] %vm1535, %v2028
        %s2062 = scalar_lea.vmem [#allocation4], 80
        %2063 = vst.msk [vmem:[%s2062 + $0x1] sm:$0xff] %vm1535, %v2029
        %s2064 = scalar_lea.vmem [#allocation4], 96
        %2065 = vst.msk [vmem:[%s2064 + $0x1] sm:$0xff] %vm1535, %v2030
        %s2066 = scalar_lea.vmem [#allocation4], 112
        %2067 = vst.msk [vmem:[%s2066 + $0x1] sm:$0xff] %vm1535, %v2031
        %s2068 = scalar_lea.vmem [#allocation4], 128
        %2069 = vst.msk [vmem:[%s2068 + $0x1] sm:$0xff] %vm1535, %v2032
        %v2070 = vld [vmem:[#allocation4] sm:$0xff]
        %v2071 = vld [vmem:[#allocation4 + $0x8] sm:$0x3]
        %v2072 = vld [vmem:[#allocation4 + $0x10] sm:$0xff]
        %v2073 = vld [vmem:[#allocation4 + $0x18] sm:$0x3]
        %v2074 = vld [vmem:[#allocation4 + $0x20] sm:$0xff]
        %v2075 = vld [vmem:[#allocation4 + $0x28] sm:$0x3]
        %v2076 = vld [vmem:[#allocation4 + $0x30] sm:$0xff]
        %v2077 = vld [vmem:[#allocation4 + $0x38] sm:$0x3]
        %v2078 = vld [vmem:[#allocation4 + $0x40] sm:$0xff]
        %v2079 = vld [vmem:[#allocation4 + $0x48] sm:$0x3]
        %v2080 = vld [vmem:[#allocation4 + $0x50] sm:$0xff]
        %v2081 = vld [vmem:[#allocation4 + $0x58] sm:$0x3]
        %v2082 = vld [vmem:[#allocation4 + $0x60] sm:$0xff]
        %v2083 = vld [vmem:[#allocation4 + $0x68] sm:$0x3]
        %v2084 = vld [vmem:[#allocation4 + $0x70] sm:$0xff]
        %v2085 = vld [vmem:[#allocation4 + $0x78] sm:$0x3]
        %v2086 = vld [vmem:[#allocation4 + $0x80] sm:$0xff]
        %v2087 = vld [vmem:[#allocation4 + $0x88] sm:$0x3]
        %v2088 = vld [vmem:[#allocation4 + $0x90] sm:$0xff]
        %v2089 = vld [vmem:[#allocation4 + $0x98] sm:$0x3]
        %v2090 = vpack.c.bf16 %v2072, %v2070
        %v2091 = vpack.c.bf16 %v2076, %v2074
        %v2092 = vpack.c.bf16 %v2080, %v2078
        %v2093 = vpack.c.bf16 %v2084, %v2082
        %v2098 = vunpack.c.l.b16 %v2090
        %v2099 = vunpack.c.h.b16 %v2090
        %v2100 = vunpack.c.l.b16 %v2091
        %v2101 = vunpack.c.h.b16 %v2091
        %v2102 = vunpack.c.l.b16 %v2092
        %v2103 = vunpack.c.h.b16 %v2092
        %v2104 = vunpack.c.l.b16 %v2093
        %v2105 = vunpack.c.h.b16 %v2093
        %v2106 = vpack.c.b16 %v2098, %v2098
        %v2107 = vpack.c.b16 %v2099, %v2099
        %v2108 = vpack.c.b16 %v2100, %v2100
        %v2109 = vpack.c.b16 %v2101, %v2101
        %v2110 = vpack.c.b16 %v2102, %v2102
        %v2111 = vpack.c.b16 %v2103, %v2103
        %v2112 = vpack.c.b16 %v2104, %v2104
        %v2113 = vpack.c.b16 %v2105, %v2105
        %vm2122 = vcmask 125952
        %2123 = vst.msk [vmem:[#allocation5] sm:$0xf] %vm2122, %v2106
        %2124 = vst.msk [vmem:[#allocation5 + $0x8] sm:$0xf] %vm2122, %v2107
        %2125 = vst.msk [vmem:[#allocation5 + $0x10] sm:$0xf] %vm2122, %v2108
        %2126 = vst.msk [vmem:[#allocation5 + $0x18] sm:$0xf] %vm2122, %v2109
        %2127 = vst.msk [vmem:[#allocation5 + $0x20] sm:$0xf] %vm2122, %v2110
        %2128 = vst.msk [vmem:[#allocation5 + $0x28] sm:$0xf] %vm2122, %v2111
        %2129 = vst.msk [vmem:[#allocation5 + $0x30] sm:$0xf] %vm2122, %v2112
        %2130 = vst.msk [vmem:[#allocation5 + $0x38] sm:$0xf] %vm2122, %v2113
        %v2147 = vrot.slane %v2070, 1
        %v2148 = vrot.slane %v2071, 1
        %v2149 = vsel %vm501, %v2147, %v2148
        %v2150 = vrot.slane %v2072, 1
        %v2151 = vrot.slane %v2073, 1
        %v2152 = vsel %vm501, %v2150, %v2151
        %v2153 = vrot.slane %v2074, 1
        %v2154 = vrot.slane %v2075, 1
        %v2155 = vsel %vm501, %v2153, %v2154
        %v2156 = vrot.slane %v2076, 1
        %v2157 = vrot.slane %v2077, 1
        %v2158 = vsel %vm501, %v2156, %v2157
        %v2159 = vrot.slane %v2078, 1
        %v2160 = vrot.slane %v2079, 1
        %v2161 = vsel %vm501, %v2159, %v2160
        %v2162 = vrot.slane %v2080, 1
        %v2163 = vrot.slane %v2081, 1
        %v2164 = vsel %vm501, %v2162, %v2163
        %v2165 = vrot.slane %v2082, 1
        %v2166 = vrot.slane %v2083, 1
        %v2167 = vsel %vm501, %v2165, %v2166
        %v2168 = vrot.slane %v2084, 1
        %v2169 = vrot.slane %v2085, 1
        %v2170 = vsel %vm501, %v2168, %v2169
        %v2179 = vpack.c.bf16 %v2152, %v2149
        %v2180 = vpack.c.bf16 %v2158, %v2155
        %v2181 = vpack.c.bf16 %v2164, %v2161
        %v2182 = vpack.c.bf16 %v2170, %v2167
        %v2187 = vunpack.c.l.b16 %v2179
        %v2188 = vunpack.c.h.b16 %v2179
        %v2189 = vunpack.c.l.b16 %v2180
        %v2190 = vunpack.c.h.b16 %v2180
        %v2191 = vunpack.c.l.b16 %v2181
        %v2192 = vunpack.c.h.b16 %v2181
        %v2193 = vunpack.c.l.b16 %v2182
        %v2194 = vunpack.c.h.b16 %v2182
        %v2195 = vpack.c.b16 %v2187, %v2187
        %v2196 = vpack.c.b16 %v2188, %v2188
        %v2197 = vpack.c.b16 %v2189, %v2189
        %v2198 = vpack.c.b16 %v2190, %v2190
        %v2199 = vpack.c.b16 %v2191, %v2191
        %v2200 = vpack.c.b16 %v2192, %v2192
        %v2201 = vpack.c.b16 %v2193, %v2193
        %v2202 = vpack.c.b16 %v2194, %v2194
        %2203 = vrot.lane.b32.xlu0 %v2195, 16
        %v2204 = vpop.permute.xlu0 %2203
        %2205 = vrot.lane.b32.xlu0 %v2196, 16
        %v2206 = vpop.permute.xlu0 %2205
        %2207 = vrot.lane.b32.xlu0 %v2197, 16
        %v2208 = vpop.permute.xlu0 %2207
        %2209 = vrot.lane.b32.xlu0 %v2198, 16
        %v2210 = vpop.permute.xlu0 %2209
        %2211 = vrot.lane.b32.xlu0 %v2199, 16
        %v2212 = vpop.permute.xlu0 %2211
        %2213 = vrot.lane.b32.xlu0 %v2200, 16
        %v2214 = vpop.permute.xlu0 %2213
        %2215 = vrot.lane.b32.xlu0 %v2201, 16
        %v2216 = vpop.permute.xlu0 %2215
        %2217 = vrot.lane.b32.xlu0 %v2202, 16
        %v2218 = vpop.permute.xlu0 %2217
        %vm2227 = vcmask 257152
        %2228 = vst.msk [vmem:[#allocation5] sm:$0xf] %vm2227, %v2204
        %2229 = vst.msk [vmem:[#allocation5 + $0x8] sm:$0xf] %vm2227, %v2206
        %2230 = vst.msk [vmem:[#allocation5 + $0x10] sm:$0xf] %vm2227, %v2208
        %2231 = vst.msk [vmem:[#allocation5 + $0x18] sm:$0xf] %vm2227, %v2210
        %2232 = vst.msk [vmem:[#allocation5 + $0x20] sm:$0xf] %vm2227, %v2212
        %2233 = vst.msk [vmem:[#allocation5 + $0x28] sm:$0xf] %vm2227, %v2214
        %2234 = vst.msk [vmem:[#allocation5 + $0x30] sm:$0xf] %vm2227, %v2216
        %2235 = vst.msk [vmem:[#allocation5 + $0x38] sm:$0xf] %vm2227, %v2218
        %v2236 = vrot.slane %v2070, 2
        %v2237 = vrot.slane %v2071, 2
        %v2238 = vsel %vm591, %v2236, %v2237
        %v2239 = vrot.slane %v2072, 2
        %v2240 = vrot.slane %v2073, 2
        %v2241 = vsel %vm591, %v2239, %v2240
        %v2242 = vrot.slane %v2074, 2
        %v2243 = vrot.slane %v2075, 2
        %v2244 = vsel %vm591, %v2242, %v2243
        %v2245 = vrot.slane %v2076, 2
        %v2246 = vrot.slane %v2077, 2
        %v2247 = vsel %vm591, %v2245, %v2246
        %v2248 = vrot.slane %v2078, 2
        %v2249 = vrot.slane %v2079, 2
        %v2250 = vsel %vm591, %v2248, %v2249
        %v2251 = vrot.slane %v2080, 2
        %v2252 = vrot.slane %v2081, 2
        %v2253 = vsel %vm591, %v2251, %v2252
        %v2254 = vrot.slane %v2082, 2
        %v2255 = vrot.slane %v2083, 2
        %v2256 = vsel %vm591, %v2254, %v2255
        %v2257 = vrot.slane %v2084, 2
        %v2258 = vrot.slane %v2085, 2
        %v2259 = vsel %vm591, %v2257, %v2258
        %v2268 = vpack.c.bf16 %v2241, %v2238
        %v2269 = vpack.c.bf16 %v2247, %v2244
        %v2270 = vpack.c.bf16 %v2253, %v2250
        %v2271 = vpack.c.bf16 %v2259, %v2256
        %v2276 = vunpack.c.l.b16 %v2268
        %v2277 = vunpack.c.h.b16 %v2268
        %v2278 = vunpack.c.l.b16 %v2269
        %v2279 = vunpack.c.h.b16 %v2269
        %v2280 = vunpack.c.l.b16 %v2270
        %v2281 = vunpack.c.h.b16 %v2270
        %v2282 = vunpack.c.l.b16 %v2271
        %v2283 = vunpack.c.h.b16 %v2271
        %v2284 = vpack.c.b16 %v2276, %v2276
        %v2285 = vpack.c.b16 %v2277, %v2277
        %v2286 = vpack.c.b16 %v2278, %v2278
        %v2287 = vpack.c.b16 %v2279, %v2279
        %v2288 = vpack.c.b16 %v2280, %v2280
        %v2289 = vpack.c.b16 %v2281, %v2281
        %v2290 = vpack.c.b16 %v2282, %v2282
        %v2291 = vpack.c.b16 %v2283, %v2283
        %2292 = vrot.lane.b32.xlu0 %v2284, 32
        %v2293 = vpop.permute.xlu0 %2292
        %2294 = vrot.lane.b32.xlu0 %v2285, 32
        %v2295 = vpop.permute.xlu0 %2294
        %2296 = vrot.lane.b32.xlu0 %v2286, 32
        %v2297 = vpop.permute.xlu0 %2296
        %2298 = vrot.lane.b32.xlu0 %v2287, 32
        %v2299 = vpop.permute.xlu0 %2298
        %2300 = vrot.lane.b32.xlu0 %v2288, 32
        %v2301 = vpop.permute.xlu0 %2300
        %2302 = vrot.lane.b32.xlu0 %v2289, 32
        %v2303 = vpop.permute.xlu0 %2302
        %2304 = vrot.lane.b32.xlu0 %v2290, 32
        %v2305 = vpop.permute.xlu0 %2304
        %2306 = vrot.lane.b32.xlu0 %v2291, 32
        %v2307 = vpop.permute.xlu0 %2306
        %vm2316 = vcmask 388352
        %2317 = vst.msk [vmem:[#allocation5] sm:$0xf] %vm2316, %v2293
        %2318 = vst.msk [vmem:[#allocation5 + $0x8] sm:$0xf] %vm2316, %v2295
        %2319 = vst.msk [vmem:[#allocation5 + $0x10] sm:$0xf] %vm2316, %v2297
        %2320 = vst.msk [vmem:[#allocation5 + $0x18] sm:$0xf] %vm2316, %v2299
        %2321 = vst.msk [vmem:[#allocation5 + $0x20] sm:$0xf] %vm2316, %v2301
        %2322 = vst.msk [vmem:[#allocation5 + $0x28] sm:$0xf] %vm2316, %v2303
        %2323 = vst.msk [vmem:[#allocation5 + $0x30] sm:$0xf] %vm2316, %v2305
        %2324 = vst.msk [vmem:[#allocation5 + $0x38] sm:$0xf] %vm2316, %v2307
        %v2325 = vpack.c.bf16 %v2074, %v2072
        %v2326 = vpack.c.bf16 %v2078, %v2076
        %v2327 = vpack.c.bf16 %v2082, %v2080
        %v2328 = vpack.c.bf16 %v2086, %v2084
        %v2333 = vunpack.c.l.b16 %v2325
        %v2334 = vunpack.c.h.b16 %v2325
        %v2335 = vunpack.c.l.b16 %v2326
        %v2336 = vunpack.c.h.b16 %v2326
        %v2337 = vunpack.c.l.b16 %v2327
        %v2338 = vunpack.c.h.b16 %v2327
        %v2339 = vunpack.c.l.b16 %v2328
        %v2340 = vunpack.c.h.b16 %v2328
        %v2341 = vpack.c.b16 %v2333, %v2333
        %v2342 = vpack.c.b16 %v2334, %v2334
        %v2343 = vpack.c.b16 %v2335, %v2335
        %v2344 = vpack.c.b16 %v2336, %v2336
        %v2345 = vpack.c.b16 %v2337, %v2337
        %v2346 = vpack.c.b16 %v2338, %v2338
        %v2347 = vpack.c.b16 %v2339, %v2339
        %v2348 = vpack.c.b16 %v2340, %v2340
        %2349 = vrot.lane.b32.xlu0 %v2341, 48
        %v2350 = vpop.permute.xlu0 %2349
        %2351 = vrot.lane.b32.xlu0 %v2342, 48
        %v2352 = vpop.permute.xlu0 %2351
        %2353 = vrot.lane.b32.xlu0 %v2343, 48
        %v2354 = vpop.permute.xlu0 %2353
        %2355 = vrot.lane.b32.xlu0 %v2344, 48
        %v2356 = vpop.permute.xlu0 %2355
        %2357 = vrot.lane.b32.xlu0 %v2345, 48
        %v2358 = vpop.permute.xlu0 %2357
        %2359 = vrot.lane.b32.xlu0 %v2346, 48
        %v2360 = vpop.permute.xlu0 %2359
        %2361 = vrot.lane.b32.xlu0 %v2347, 48
        %v2362 = vpop.permute.xlu0 %2361
        %2363 = vrot.lane.b32.xlu0 %v2348, 48
        %v2364 = vpop.permute.xlu0 %2363
        %vm2373 = vcmask 519552
        %2374 = vst.msk [vmem:[#allocation5] sm:$0xf] %vm2373, %v2350
        %2375 = vst.msk [vmem:[#allocation5 + $0x8] sm:$0xf] %vm2373, %v2352
        %2376 = vst.msk [vmem:[#allocation5 + $0x10] sm:$0xf] %vm2373, %v2354
        %2377 = vst.msk [vmem:[#allocation5 + $0x18] sm:$0xf] %vm2373, %v2356
        %2378 = vst.msk [vmem:[#allocation5 + $0x20] sm:$0xf] %vm2373, %v2358
        %2379 = vst.msk [vmem:[#allocation5 + $0x28] sm:$0xf] %vm2373, %v2360
        %2380 = vst.msk [vmem:[#allocation5 + $0x30] sm:$0xf] %vm2373, %v2362
        %2381 = vst.msk [vmem:[#allocation5 + $0x38] sm:$0xf] %vm2373, %v2364
        %v2384 = vrot.slane %v2086, 1
        %v2385 = vrot.slane %v2087, 1
        %v2386 = vsel %vm501, %v2384, %v2385
        %v2388 = vpack.c.bf16 %v2155, %v2152
        %v2389 = vpack.c.bf16 %v2161, %v2158
        %v2390 = vpack.c.bf16 %v2167, %v2164
        %v2391 = vpack.c.bf16 %v2386, %v2170
        %v2396 = vunpack.c.l.b16 %v2388
        %v2397 = vunpack.c.h.b16 %v2388
        %v2398 = vunpack.c.l.b16 %v2389
        %v2399 = vunpack.c.h.b16 %v2389
        %v2400 = vunpack.c.l.b16 %v2390
        %v2401 = vunpack.c.h.b16 %v2390
        %v2402 = vunpack.c.l.b16 %v2391
        %v2403 = vunpack.c.h.b16 %v2391
        %v2404 = vpack.c.b16 %v2396, %v2396
        %v2405 = vpack.c.b16 %v2397, %v2397
        %v2406 = vpack.c.b16 %v2398, %v2398
        %v2407 = vpack.c.b16 %v2399, %v2399
        %v2408 = vpack.c.b16 %v2400, %v2400
        %v2409 = vpack.c.b16 %v2401, %v2401
        %v2410 = vpack.c.b16 %v2402, %v2402
        %v2411 = vpack.c.b16 %v2403, %v2403
        %2412 = vrot.lane.b32.xlu0 %v2404, 64
        %v2413 = vpop.permute.xlu0 %2412
        %2414 = vrot.lane.b32.xlu0 %v2405, 64
        %v2415 = vpop.permute.xlu0 %2414
        %2416 = vrot.lane.b32.xlu0 %v2406, 64
        %v2417 = vpop.permute.xlu0 %2416
        %2418 = vrot.lane.b32.xlu0 %v2407, 64
        %v2419 = vpop.permute.xlu0 %2418
        %2420 = vrot.lane.b32.xlu0 %v2408, 64
        %v2421 = vpop.permute.xlu0 %2420
        %2422 = vrot.lane.b32.xlu0 %v2409, 64
        %v2423 = vpop.permute.xlu0 %2422
        %2424 = vrot.lane.b32.xlu0 %v2410, 64
        %v2425 = vpop.permute.xlu0 %2424
        %2426 = vrot.lane.b32.xlu0 %v2411, 64
        %v2427 = vpop.permute.xlu0 %2426
        %vm2436 = vcmask 650752
        %2437 = vst.msk [vmem:[#allocation5] sm:$0xf] %vm2436, %v2413
        %2438 = vst.msk [vmem:[#allocation5 + $0x8] sm:$0xf] %vm2436, %v2415
        %2439 = vst.msk [vmem:[#allocation5 + $0x10] sm:$0xf] %vm2436, %v2417
        %2440 = vst.msk [vmem:[#allocation5 + $0x18] sm:$0xf] %vm2436, %v2419
        %2441 = vst.msk [vmem:[#allocation5 + $0x20] sm:$0xf] %vm2436, %v2421
        %2442 = vst.msk [vmem:[#allocation5 + $0x28] sm:$0xf] %vm2436, %v2423
        %2443 = vst.msk [vmem:[#allocation5 + $0x30] sm:$0xf] %vm2436, %v2425
        %2444 = vst.msk [vmem:[#allocation5 + $0x38] sm:$0xf] %vm2436, %v2427
        %v2445 = vrot.slane %v2086, 2
        %v2446 = vrot.slane %v2087, 2
        %v2447 = vsel %vm591, %v2445, %v2446
        %v2449 = vpack.c.bf16 %v2244, %v2241
        %v2450 = vpack.c.bf16 %v2250, %v2247
        %v2451 = vpack.c.bf16 %v2256, %v2253
        %v2452 = vpack.c.bf16 %v2447, %v2259
        %v2457 = vunpack.c.l.b16 %v2449
        %v2458 = vunpack.c.h.b16 %v2449
        %v2459 = vunpack.c.l.b16 %v2450
        %v2460 = vunpack.c.h.b16 %v2450
        %v2461 = vunpack.c.l.b16 %v2451
        %v2462 = vunpack.c.h.b16 %v2451
        %v2463 = vunpack.c.l.b16 %v2452
        %v2464 = vunpack.c.h.b16 %v2452
        %v2465 = vpack.c.b16 %v2457, %v2457
        %v2466 = vpack.c.b16 %v2458, %v2458
        %v2467 = vpack.c.b16 %v2459, %v2459
        %v2468 = vpack.c.b16 %v2460, %v2460
        %v2469 = vpack.c.b16 %v2461, %v2461
        %v2470 = vpack.c.b16 %v2462, %v2462
        %v2471 = vpack.c.b16 %v2463, %v2463
        %v2472 = vpack.c.b16 %v2464, %v2464
        %2473 = vrot.lane.b32.xlu0 %v2465, 80
        %v2474 = vpop.permute.xlu0 %2473
        %2475 = vrot.lane.b32.xlu0 %v2466, 80
        %v2476 = vpop.permute.xlu0 %2475
        %2477 = vrot.lane.b32.xlu0 %v2467, 80
        %v2478 = vpop.permute.xlu0 %2477
        %2479 = vrot.lane.b32.xlu0 %v2468, 80
        %v2480 = vpop.permute.xlu0 %2479
        %2481 = vrot.lane.b32.xlu0 %v2469, 80
        %v2482 = vpop.permute.xlu0 %2481
        %2483 = vrot.lane.b32.xlu0 %v2470, 80
        %v2484 = vpop.permute.xlu0 %2483
        %2485 = vrot.lane.b32.xlu0 %v2471, 80
        %v2486 = vpop.permute.xlu0 %2485
        %2487 = vrot.lane.b32.xlu0 %v2472, 80
        %v2488 = vpop.permute.xlu0 %2487
        %vm2497 = vcmask 781952
        %2498 = vst.msk [vmem:[#allocation5] sm:$0xf] %vm2497, %v2474
        %2499 = vst.msk [vmem:[#allocation5 + $0x8] sm:$0xf] %vm2497, %v2476
        %2500 = vst.msk [vmem:[#allocation5 + $0x10] sm:$0xf] %vm2497, %v2478
        %2501 = vst.msk [vmem:[#allocation5 + $0x18] sm:$0xf] %vm2497, %v2480
        %2502 = vst.msk [vmem:[#allocation5 + $0x20] sm:$0xf] %vm2497, %v2482
        %2503 = vst.msk [vmem:[#allocation5 + $0x28] sm:$0xf] %vm2497, %v2484
        %2504 = vst.msk [vmem:[#allocation5 + $0x30] sm:$0xf] %vm2497, %v2486
        %2505 = vst.msk [vmem:[#allocation5 + $0x38] sm:$0xf] %vm2497, %v2488
        %v2506 = vpack.c.bf16 %v2088, %v2086
        %v2508 = vunpack.c.l.b16 %v2506
        %v2509 = vunpack.c.h.b16 %v2506
        %v2510 = vpack.c.b16 %v2508, %v2508
        %v2511 = vpack.c.b16 %v2509, %v2509
        %2512 = vrot.lane.b32.xlu0 %v2108, 96
        %v2513 = vpop.permute.xlu0 %2512
        %2514 = vrot.lane.b32.xlu0 %v2109, 96
        %v2515 = vpop.permute.xlu0 %2514
        %2516 = vrot.lane.b32.xlu0 %v2110, 96
        %v2517 = vpop.permute.xlu0 %2516
        %2518 = vrot.lane.b32.xlu0 %v2111, 96
        %v2519 = vpop.permute.xlu0 %2518
        %2520 = vrot.lane.b32.xlu0 %v2112, 96
        %v2521 = vpop.permute.xlu0 %2520
        %2522 = vrot.lane.b32.xlu0 %v2113, 96
        %v2523 = vpop.permute.xlu0 %2522
        %2524 = vrot.lane.b32.xlu0 %v2510, 96
        %v2525 = vpop.permute.xlu0 %2524
        %2526 = vrot.lane.b32.xlu0 %v2511, 96
        %v2527 = vpop.permute.xlu0 %2526
        %vm2536 = vcmask 913152
        %2537 = vst.msk [vmem:[#allocation5] sm:$0xf] %vm2536, %v2513
        %2538 = vst.msk [vmem:[#allocation5 + $0x8] sm:$0xf] %vm2536, %v2515
        %2539 = vst.msk [vmem:[#allocation5 + $0x10] sm:$0xf] %vm2536, %v2517
        %2540 = vst.msk [vmem:[#allocation5 + $0x18] sm:$0xf] %vm2536, %v2519
        %2541 = vst.msk [vmem:[#allocation5 + $0x20] sm:$0xf] %vm2536, %v2521
        %2542 = vst.msk [vmem:[#allocation5 + $0x28] sm:$0xf] %vm2536, %v2523
        %2543 = vst.msk [vmem:[#allocation5 + $0x30] sm:$0xf] %vm2536, %v2525
        %2544 = vst.msk [vmem:[#allocation5 + $0x38] sm:$0xf] %vm2536, %v2527
        %v2547 = vrot.slane %v2088, 1
        %v2548 = vrot.slane %v2089, 1
        %v2549 = vsel %vm501, %v2547, %v2548
        %v2551 = vpack.c.bf16 %v2549, %v2386
        %v2553 = vunpack.c.l.b16 %v2551
        %v2554 = vunpack.c.h.b16 %v2551
        %v2555 = vpack.c.b16 %v2553, %v2553
        %v2556 = vpack.c.b16 %v2554, %v2554
        %2557 = vrot.lane.b32.xlu0 %v2197, 112
        %v2558 = vpop.permute.xlu0 %2557
        %2559 = vrot.lane.b32.xlu0 %v2198, 112
        %v2560 = vpop.permute.xlu0 %2559
        %2561 = vrot.lane.b32.xlu0 %v2199, 112
        %v2562 = vpop.permute.xlu0 %2561
        %2563 = vrot.lane.b32.xlu0 %v2200, 112
        %v2564 = vpop.permute.xlu0 %2563
        %2565 = vrot.lane.b32.xlu0 %v2201, 112
        %v2566 = vpop.permute.xlu0 %2565
        %2567 = vrot.lane.b32.xlu0 %v2202, 112
        %v2568 = vpop.permute.xlu0 %2567
        %2569 = vrot.lane.b32.xlu0 %v2555, 112
        %v2570 = vpop.permute.xlu0 %2569
        %2571 = vrot.lane.b32.xlu0 %v2556, 112
        %v2572 = vpop.permute.xlu0 %2571
        %vm2581 = vcmask 1044352
        %2582 = vst.msk [vmem:[#allocation5] sm:$0xf] %vm2581, %v2558
        %2583 = vst.msk [vmem:[#allocation5 + $0x8] sm:$0xf] %vm2581, %v2560
        %2584 = vst.msk [vmem:[#allocation5 + $0x10] sm:$0xf] %vm2581, %v2562
        %2585 = vst.msk [vmem:[#allocation5 + $0x18] sm:$0xf] %vm2581, %v2564
        %2586 = vst.msk [vmem:[#allocation5 + $0x20] sm:$0xf] %vm2581, %v2566
        %2587 = vst.msk [vmem:[#allocation5 + $0x28] sm:$0xf] %vm2581, %v2568
        %2588 = vst.msk [vmem:[#allocation5 + $0x30] sm:$0xf] %vm2581, %v2570
        %2589 = vst.msk [vmem:[#allocation5 + $0x38] sm:$0xf] %vm2581, %v2572
        %v2590 = vrot.slane %v2088, 2
        %v2591 = vrot.slane %v2089, 2
        %v2592 = vsel %vm591, %v2590, %v2591
        %v2594 = vpack.c.bf16 %v2592, %v2447
        %v2596 = vunpack.c.l.b16 %v2594
        %v2597 = vunpack.c.h.b16 %v2594
        %v2598 = vpack.c.b16 %v2596, %v2596
        %v2599 = vpack.c.b16 %v2597, %v2597
        %2608 = vst.msk [vmem:[#allocation5 + $0x4] sm:$0xf] %vm2122, %v2286
        %2609 = vst.msk [vmem:[#allocation5 + $0xc] sm:$0xf] %vm2122, %v2287
        %2610 = vst.msk [vmem:[#allocation5 + $0x14] sm:$0xf] %vm2122, %v2288
        %2611 = vst.msk [vmem:[#allocation5 + $0x1c] sm:$0xf] %vm2122, %v2289
        %2612 = vst.msk [vmem:[#allocation5 + $0x24] sm:$0xf] %vm2122, %v2290
        %2613 = vst.msk [vmem:[#allocation5 + $0x2c] sm:$0xf] %vm2122, %v2291
        %2614 = vst.msk [vmem:[#allocation5 + $0x34] sm:$0xf] %vm2122, %v2598
        %2615 = vst.msk [vmem:[#allocation5 + $0x3c] sm:$0xf] %vm2122, %v2599
        %v2616 = vld [vmem:[#allocation5] sm:$0xff]
        %v2617 = vld [vmem:[#allocation5 + $0x8] sm:$0xff]
        %v2618 = vld [vmem:[#allocation5 + $0x10] sm:$0xff]
        %v2619 = vld [vmem:[#allocation5 + $0x18] sm:$0xff]
        %v2620 = vld [vmem:[#allocation5 + $0x20] sm:$0xff]
        %v2621 = vld [vmem:[#allocation5 + $0x28] sm:$0xff]
        %v2622 = vld [vmem:[#allocation5 + $0x30] sm:$0xff]
        %v2623 = vld [vmem:[#allocation5 + $0x38] sm:$0xff]
        %v2624 = vld [vmem:[%s3] sm:$0xf]
        %v2625 = vld [vmem:[%s3 + $0x4] sm:$0xf]
        %v2626 = vld [vmem:[%s3 + $0x8] sm:$0xf]
        %v2627 = vld [vmem:[%s3 + $0xc] sm:$0xf]
        %v2628 = vld [vmem:[%s3 + $0x10] sm:$0xf]
        %v2629 = vld [vmem:[%s3 + $0x14] sm:$0xf]
        %v2630 = vld [vmem:[%s3 + $0x18] sm:$0xf]
        %v2631 = vld [vmem:[%s3 + $0x1c] sm:$0xf]
        %v2632 = vld [vmem:[%s3 + $0x20] sm:$0xf]
        %v2633 = vld [vmem:[%s3 + $0x24] sm:$0xf]
        %v2634 = vld [vmem:[%s3 + $0x28] sm:$0xf]
        %v2635 = vld [vmem:[%s3 + $0x2c] sm:$0xf]
        %v2636 = vld [vmem:[%s3 + $0x30] sm:$0xf]
        %v2637 = vld [vmem:[%s3 + $0x34] sm:$0xf]
        %v2638 = vld [vmem:[%s3 + $0x38] sm:$0xf]
        %v2639 = vld [vmem:[%s3 + $0x3c] sm:$0xf]
        %v2640 = vld [vmem:[%s3 + $0x40] sm:$0xf]
        %v2641 = vld [vmem:[%s3 + $0x44] sm:$0xf]
        %v2642 = vlaneseq
        %v2643 = vshrl.u32 %v2642, 7
        %v2644 = vsub.s32 2, %v2643
        %v2645 = vrot.slane %v375, %v2644
        %v2654 = vunpack.c.l.b16 %v2616
        %v2655 = vunpack.c.h.b16 %v2616
        %v2656 = vunpack.c.l.b16 %v2617
        %v2657 = vunpack.c.h.b16 %v2617
        %v2658 = vunpack.c.l.b16 %v2618
        %v2659 = vunpack.c.h.b16 %v2618
        %v2660 = vunpack.c.l.b16 %v2619
        %v2661 = vunpack.c.h.b16 %v2619
        %v2662 = vunpack.c.l.b16 %v2620
        %v2663 = vunpack.c.h.b16 %v2620
        %v2664 = vunpack.c.l.b16 %v2621
        %v2665 = vunpack.c.h.b16 %v2621
        %v2666 = vunpack.c.l.b16 %v2622
        %v2667 = vunpack.c.h.b16 %v2622
        %v2668 = vunpack.c.l.b16 %v2623
        %v2669 = vunpack.c.h.b16 %v2623
        %v2670 = vpack.c.b16 %v2656, %v2654
        %v2671 = vpack.c.b16 %v2657, %v2655
        %v2672 = vpack.c.b16 %v2660, %v2658
        %v2673 = vpack.c.b16 %v2661, %v2659
        %v2674 = vpack.c.b16 %v2664, %v2662
        %v2675 = vpack.c.b16 %v2665, %v2663
        %v2676 = vpack.c.b16 %v2668, %v2666
        %v2677 = vpack.c.b16 %v2669, %v2667
        %v2700 = vunpack.c.l.b16 %v2624
        %v2701 = vunpack.c.l.b16 %v2625
        %v2702 = vunpack.c.l.b16 %v2626
        %v2703 = vunpack.c.l.b16 %v2627
        %v2704 = vunpack.c.l.b16 %v2628
        %v2705 = vunpack.c.l.b16 %v2629
        %v2706 = vunpack.c.l.b16 %v2630
        %v2707 = vunpack.c.l.b16 %v2631
        %v2708 = vunpack.c.l.b16 %v2632
        %v2709 = vunpack.c.l.b16 %v2633
        %v2710 = vunpack.c.l.b16 %v2634
        %v2711 = vunpack.c.l.b16 %v2635
        %v2712 = vunpack.c.l.b16 %v2636
        %v2713 = vunpack.c.l.b16 %v2637
        %v2714 = vunpack.c.l.b16 %v2638
        %v2715 = vunpack.c.l.b16 %v2639
        %v2716 = vunpack.c.l.b16 %v2640
        %v2717 = vunpack.c.l.b16 %v2641
        %v2718 = vpack.c.b16 %v2701, %v2700
        %v2719 = vpack.c.b16 %v2703, %v2702
        %v2720 = vpack.c.b16 %v2705, %v2704
        %v2721 = vpack.c.b16 %v2707, %v2706
        %v2722 = vpack.c.b16 %v2709, %v2708
        %v2723 = vpack.c.b16 %v2711, %v2710
        %v2724 = vpack.c.b16 %v2713, %v2712
        %v2725 = vpack.c.b16 %v2715, %v2714
        %v2726 = vpack.c.b16 %v2717, %v2716
        %v2737 = vsel %vm1535, %v2671, 0
        %v2740 = vsel %vm1535, %v2673, 0
        %v2743 = vsel %vm1535, %v2675, 0
        %v2746 = vsel %vm1535, %v2677, 0
        %2748 = vmatprep.subr.bf16.mxu0 0
        %2749 = vmatpush1.bf16.msra.mxu0 %v2725
        %2750 = vmatprep.subr.bf16.mxu0 0
        %2751 = vmatpush1.bf16.msra.mxu0 %v2724
        %2752 = vmatprep.subr.bf16.mxu0 0
        %2753 = vmatpush1.bf16.msra.mxu0 %v2723
        %2754 = vmatprep.subr.bf16.mxu0 0
        %2755 = vmatpush1.bf16.msra.mxu0 %v2722
        %2756 = vmatprep.subr.bf16.mxu0 0
        %2757 = vmatpush1.bf16.msra.mxu0 %v2721
        %2758 = vmatprep.subr.bf16.mxu0 0
        %2759 = vmatpush1.bf16.msra.mxu0 %v2720
        %2760 = vmatprep.subr.bf16.mxu0 0
        %2761 = vmatpush1.bf16.msra.mxu0 %v2719
        %2762 = vmatprep.subr.bf16.mxu0 0
        %2763 = vmatpush1.bf16.msra.mxu0 %v2718
        %2764 = vmatprep.subr.bf16.mxu0 0
        %2765 = vmatpush2.bf16.msra.mxu0 0
        %2766 = vmatprep.subr.bf16.mxu0 0
        %2767 = vmatpush2.bf16.msra.mxu0 0
        %2768 = vmatprep.subr.bf16.mxu0 0
        %2769 = vmatpush2.bf16.msra.mxu0 0
        %2770 = vmatprep.subr.bf16.mxu0 0
        %2771 = vmatpush2.bf16.msra.mxu0 0
        %2772 = vmatprep.subr.bf16.mxu0 0
        %2773 = vmatpush2.bf16.msra.mxu0 0
        %2774 = vmatprep.subr.bf16.mxu0 0
        %2775 = vmatpush2.bf16.msra.mxu0 0
        %2776 = vmatprep.subr.bf16.mxu0 0
        %2777 = vmatpush2.bf16.msra.mxu0 0
        %2778 = vmatprep.subr.bf16.mxu0 0
        %2779 = vmatpush2.bf16.msra.mxu0 %v2726
        %2780 = vmatprep.mubr.bf16.mxu0 %v2737
        %2781 = vmatmul.mubr.bf16.gmra.mxu0 %v2670
        %v2782 = vpop.f32.mrf.mxu0
        %v2783 = vadd.f32 %v2645, %v2782
        %v2784 = vpop.f32.mrf.mxu0
        %v2785 = vpop.f32.mrf.mxu0
        %v2786 = vadd.f32 %v2645, %v2785
        %v2787 = vpop.f32.mrf.mxu0
        %2788 = vmatprep.mubr.bf16.mxu0 %v2740
        %2789 = vmatmul.mubr.bf16.gmra.mxu0 %v2672
        %v2790 = vpop.f32.mrf.mxu0
        %v2791 = vadd.f32 %v2645, %v2790
        %v2792 = vpop.f32.mrf.mxu0
        %v2793 = vpop.f32.mrf.mxu0
        %v2794 = vadd.f32 %v2645, %v2793
        %v2795 = vpop.f32.mrf.mxu0
        %2796 = vmatprep.mubr.bf16.mxu0 %v2743
        %2797 = vmatmul.mubr.bf16.gmra.mxu0 %v2674
        %v2798 = vpop.f32.mrf.mxu0
        %v2799 = vadd.f32 %v2645, %v2798
        %v2800 = vpop.f32.mrf.mxu0
        %v2801 = vpop.f32.mrf.mxu0
        %v2802 = vadd.f32 %v2645, %v2801
        %v2803 = vpop.f32.mrf.mxu0
        %2804 = vmatprep.mubr.bf16.mxu0 %v2746
        %2805 = vmatmul.mubr.bf16.gmra.mxu0 %v2676
        %v2806 = vpop.f32.mrf.mxu0
        %v2807 = vadd.f32 %v2645, %v2806
        %v2808 = vpop.f32.mrf.mxu0
        %v2809 = vpop.f32.mrf.mxu0
        %v2810 = vadd.f32 %v2645, %v2809
        %v2811 = vpop.f32.mrf.mxu0
        %2812 = vdwg.mxu0
        %v2813 = vmax.f32 %v2783, 0.0
        %v2814 = vmax.f32 %v2786, 0.0
        %v2815 = vmax.f32 %v2791, 0.0
        %v2816 = vmax.f32 %v2794, 0.0
        %v2817 = vmax.f32 %v2799, 0.0
        %v2818 = vmax.f32 %v2802, 0.0
        %v2819 = vmax.f32 %v2807, 0.0
        %v2820 = vmax.f32 %v2810, 0.0
        %2821 = vst.msk [vmem:[#allocation2] sm:$0xff] %vm386, 0.0
        %2822 = vst.msk [vmem:[#allocation2 + $0x8] sm:$0x3] %vm388, 0.0
        %2823 = vst.msk [vmem:[#allocation2 + $0x10] sm:$0xff] %vm386, 0.0
        %2824 = vst.msk [vmem:[#allocation2 + $0x18] sm:$0x3] %vm388, 0.0
        %2825 = vst.msk [vmem:[#allocation2 + $0x20] sm:$0xff] %vm386, 0.0
        %2826 = vst.msk [vmem:[#allocation2 + $0x28] sm:$0x3] %vm388, 0.0
        %2827 = vst.msk [vmem:[#allocation2 + $0x30] sm:$0xff] %vm386, 0.0
        %2828 = vst.msk [vmem:[#allocation2 + $0x38] sm:$0x3] %vm388, 0.0
        %2829 = vst.msk [vmem:[#allocation2 + $0x40] sm:$0xff] %vm386, 0.0
        %2830 = vst.msk [vmem:[#allocation2 + $0x48] sm:$0x3] %vm388, 0.0
        %2831 = vst.msk [vmem:[#allocation2 + $0x50] sm:$0xff] %vm386, 0.0
        %2832 = vst.msk [vmem:[#allocation2 + $0x58] sm:$0x3] %vm388, 0.0
        %2833 = vst.msk [vmem:[#allocation2 + $0x60] sm:$0xff] %vm386, 0.0
        %2834 = vst.msk [vmem:[#allocation2 + $0x68] sm:$0x3] %vm388, 0.0
        %2835 = vst.msk [vmem:[#allocation2 + $0x70] sm:$0xff] %vm386, 0.0
        %2836 = vst.msk [vmem:[#allocation2 + $0x78] sm:$0x3] %vm388, 0.0
        %2837 = vst.msk [vmem:[#allocation2 + $0x80] sm:$0xff] %vm386, 0.0
        %2838 = vst.msk [vmem:[#allocation2 + $0x88] sm:$0x3] %vm388, 0.0
        %2839 = vst.msk [vmem:[#allocation2 + $0x90] sm:$0xff] %vm386, 0.0
        %2840 = vst.msk [vmem:[#allocation2 + $0x98] sm:$0x3] %vm388, 0.0
        %2841 = vst.msk [vmem:[%s408 + $0x1] sm:$0xff] %vm386, %v378
        %2842 = vst.msk [vmem:[%s410 + $0x1] sm:$0xff] %vm386, %v379
        %2843 = vst.msk [vmem:[%s412 + $0x1] sm:$0xff] %vm386, %v380
        %2844 = vst.msk [vmem:[%s414 + $0x1] sm:$0xff] %vm386, %v381
        %2845 = vst.msk [vmem:[%s416 + $0x1] sm:$0xff] %vm386, %v382
        %2846 = vst.msk [vmem:[%s418 + $0x1] sm:$0xff] %vm386, %v383
        %2847 = vst.msk [vmem:[%s420 + $0x1] sm:$0xff] %vm386, %v384
        %2848 = vst.msk [vmem:[%s422 + $0x1] sm:$0xff] %vm386, %v385
        %v2849 = vld [vmem:[#allocation2] sm:$0xff]
        %v2850 = vld [vmem:[#allocation2 + $0x8] sm:$0x3]
        %v2851 = vld [vmem:[#allocation2 + $0x10] sm:$0xff]
        %v2852 = vld [vmem:[#allocation2 + $0x18] sm:$0x3]
        %v2853 = vld [vmem:[#allocation2 + $0x20] sm:$0xff]
        %v2854 = vld [vmem:[#allocation2 + $0x28] sm:$0x3]
        %v2855 = vld [vmem:[#allocation2 + $0x30] sm:$0xff]
        %v2856 = vld [vmem:[#allocation2 + $0x38] sm:$0x3]
        %v2857 = vld [vmem:[#allocation2 + $0x40] sm:$0xff]
        %v2858 = vld [vmem:[#allocation2 + $0x48] sm:$0x3]
        %v2859 = vld [vmem:[#allocation2 + $0x50] sm:$0xff]
        %v2860 = vld [vmem:[#allocation2 + $0x58] sm:$0x3]
        %v2861 = vld [vmem:[#allocation2 + $0x60] sm:$0xff]
        %v2862 = vld [vmem:[#allocation2 + $0x68] sm:$0x3]
        %v2863 = vld [vmem:[#allocation2 + $0x70] sm:$0xff]
        %v2864 = vld [vmem:[#allocation2 + $0x78] sm:$0x3]
        %v2865 = vld [vmem:[#allocation2 + $0x80] sm:$0xff]
        %v2866 = vld [vmem:[#allocation2 + $0x88] sm:$0x3]
        %v2867 = vld [vmem:[#allocation2 + $0x90] sm:$0xff]
        %v2868 = vld [vmem:[#allocation2 + $0x98] sm:$0x3]
        %v2869 = vpack.c.bf16 %v2851, %v2849
        %v2870 = vpack.c.bf16 %v2855, %v2853
        %v2871 = vpack.c.bf16 %v2859, %v2857
        %v2872 = vpack.c.bf16 %v2863, %v2861
        %v2877 = vunpack.c.l.b16 %v2869
        %v2878 = vunpack.c.h.b16 %v2869
        %v2879 = vunpack.c.l.b16 %v2870
        %v2880 = vunpack.c.h.b16 %v2870
        %v2881 = vunpack.c.l.b16 %v2871
        %v2882 = vunpack.c.h.b16 %v2871
        %v2883 = vunpack.c.l.b16 %v2872
        %v2884 = vunpack.c.h.b16 %v2872
        %v2885 = vpack.c.b16 %v2877, %v2877
        %v2886 = vpack.c.b16 %v2878, %v2878
        %v2887 = vpack.c.b16 %v2879, %v2879
        %v2888 = vpack.c.b16 %v2880, %v2880
        %v2889 = vpack.c.b16 %v2881, %v2881
        %v2890 = vpack.c.b16 %v2882, %v2882
        %v2891 = vpack.c.b16 %v2883, %v2883
        %v2892 = vpack.c.b16 %v2884, %v2884
        %2901 = vst.msk [vmem:[#allocation3] sm:$0xf] %vm476, %v2885
        %2902 = vst.msk [vmem:[#allocation3 + $0x14] sm:$0xf] %vm476, %v2886
        %2903 = vst.msk [vmem:[#allocation3 + $0x28] sm:$0xf] %vm476, %v2887
        %2904 = vst.msk [vmem:[#allocation3 + $0x3c] sm:$0xf] %vm476, %v2888
        %2905 = vst.msk [vmem:[#allocation3 + $0x50] sm:$0xf] %vm476, %v2889
        %2906 = vst.msk [vmem:[#allocation3 + $0x64] sm:$0xf] %vm476, %v2890
        %2907 = vst.msk [vmem:[#allocation3 + $0x78] sm:$0xf] %vm476, %v2891
        %2908 = vst.msk [vmem:[#allocation3 + $0x8c] sm:$0xf] %vm476, %v2892
        %v2925 = vrot.slane %v2849, 1
        %v2926 = vrot.slane %v2850, 1
        %v2927 = vsel %vm501, %v2925, %v2926
        %v2928 = vrot.slane %v2851, 1
        %v2929 = vrot.slane %v2852, 1
        %v2930 = vsel %vm501, %v2928, %v2929
        %v2931 = vrot.slane %v2853, 1
        %v2932 = vrot.slane %v2854, 1
        %v2933 = vsel %vm501, %v2931, %v2932
        %v2934 = vrot.slane %v2855, 1
        %v2935 = vrot.slane %v2856, 1
        %v2936 = vsel %vm501, %v2934, %v2935
        %v2937 = vrot.slane %v2857, 1
        %v2938 = vrot.slane %v2858, 1
        %v2939 = vsel %vm501, %v2937, %v2938
        %v2940 = vrot.slane %v2859, 1
        %v2941 = vrot.slane %v2860, 1
        %v2942 = vsel %vm501, %v2940, %v2941
        %v2943 = vrot.slane %v2861, 1
        %v2944 = vrot.slane %v2862, 1
        %v2945 = vsel %vm501, %v2943, %v2944
        %v2946 = vrot.slane %v2863, 1
        %v2947 = vrot.slane %v2864, 1
        %v2948 = vsel %vm501, %v2946, %v2947
        %v2957 = vpack.c.bf16 %v2930, %v2927
        %v2958 = vpack.c.bf16 %v2936, %v2933
        %v2959 = vpack.c.bf16 %v2942, %v2939
        %v2960 = vpack.c.bf16 %v2948, %v2945
        %v2965 = vunpack.c.l.b16 %v2957
        %v2966 = vunpack.c.h.b16 %v2957
        %v2967 = vunpack.c.l.b16 %v2958
        %v2968 = vunpack.c.h.b16 %v2958
        %v2969 = vunpack.c.l.b16 %v2959
        %v2970 = vunpack.c.h.b16 %v2959
        %v2971 = vunpack.c.l.b16 %v2960
        %v2972 = vunpack.c.h.b16 %v2960
        %v2973 = vpack.c.b16 %v2965, %v2965
        %v2974 = vpack.c.b16 %v2966, %v2966
        %v2975 = vpack.c.b16 %v2967, %v2967
        %v2976 = vpack.c.b16 %v2968, %v2968
        %v2977 = vpack.c.b16 %v2969, %v2969
        %v2978 = vpack.c.b16 %v2970, %v2970
        %v2979 = vpack.c.b16 %v2971, %v2971
        %v2980 = vpack.c.b16 %v2972, %v2972
        %2981 = vrot.lane.b32.xlu0 %v2973, 64
        %v2982 = vpop.permute.xlu0 %2981
        %2983 = vrot.lane.b32.xlu0 %v2974, 64
        %v2984 = vpop.permute.xlu0 %2983
        %2985 = vrot.lane.b32.xlu0 %v2975, 64
        %v2986 = vpop.permute.xlu0 %2985
        %2987 = vrot.lane.b32.xlu0 %v2976, 64
        %v2988 = vpop.permute.xlu0 %2987
        %2989 = vrot.lane.b32.xlu0 %v2977, 64
        %v2990 = vpop.permute.xlu0 %2989
        %2991 = vrot.lane.b32.xlu0 %v2978, 64
        %v2992 = vpop.permute.xlu0 %2991
        %2993 = vrot.lane.b32.xlu0 %v2979, 64
        %v2994 = vpop.permute.xlu0 %2993
        %2995 = vrot.lane.b32.xlu0 %v2980, 64
        %v2996 = vpop.permute.xlu0 %2995
        %3005 = vst.msk [vmem:[#allocation3] sm:$0xf] %vm582, %v2982
        %3006 = vst.msk [vmem:[#allocation3 + $0x14] sm:$0xf] %vm582, %v2984
        %3007 = vst.msk [vmem:[#allocation3 + $0x28] sm:$0xf] %vm582, %v2986
        %3008 = vst.msk [vmem:[#allocation3 + $0x3c] sm:$0xf] %vm582, %v2988
        %3009 = vst.msk [vmem:[#allocation3 + $0x50] sm:$0xf] %vm582, %v2990
        %3010 = vst.msk [vmem:[#allocation3 + $0x64] sm:$0xf] %vm582, %v2992
        %3011 = vst.msk [vmem:[#allocation3 + $0x78] sm:$0xf] %vm582, %v2994
        %3012 = vst.msk [vmem:[#allocation3 + $0x8c] sm:$0xf] %vm582, %v2996
        %v3013 = vrot.slane %v2849, 2
        %v3014 = vrot.slane %v2850, 2
        %v3015 = vsel %vm591, %v3013, %v3014
        %v3016 = vrot.slane %v2851, 2
        %v3017 = vrot.slane %v2852, 2
        %v3018 = vsel %vm591, %v3016, %v3017
        %v3019 = vrot.slane %v2853, 2
        %v3020 = vrot.slane %v2854, 2
        %v3021 = vsel %vm591, %v3019, %v3020
        %v3022 = vrot.slane %v2855, 2
        %v3023 = vrot.slane %v2856, 2
        %v3024 = vsel %vm591, %v3022, %v3023
        %v3025 = vrot.slane %v2857, 2
        %v3026 = vrot.slane %v2858, 2
        %v3027 = vsel %vm591, %v3025, %v3026
        %v3028 = vrot.slane %v2859, 2
        %v3029 = vrot.slane %v2860, 2
        %v3030 = vsel %vm591, %v3028, %v3029
        %v3031 = vrot.slane %v2861, 2
        %v3032 = vrot.slane %v2862, 2
        %v3033 = vsel %vm591, %v3031, %v3032
        %v3034 = vrot.slane %v2863, 2
        %v3035 = vrot.slane %v2864, 2
        %v3036 = vsel %vm591, %v3034, %v3035
        %v3045 = vpack.c.bf16 %v3018, %v3015
        %v3046 = vpack.c.bf16 %v3024, %v3021
        %v3047 = vpack.c.bf16 %v3030, %v3027
        %v3048 = vpack.c.bf16 %v3036, %v3033
        %v3053 = vunpack.c.l.b16 %v3045
        %v3054 = vunpack.c.h.b16 %v3045
        %v3055 = vunpack.c.l.b16 %v3046
        %v3056 = vunpack.c.h.b16 %v3046
        %v3057 = vunpack.c.l.b16 %v3047
        %v3058 = vunpack.c.h.b16 %v3047
        %v3059 = vunpack.c.l.b16 %v3048
        %v3060 = vunpack.c.h.b16 %v3048
        %v3061 = vpack.c.b16 %v3053, %v3053
        %v3062 = vpack.c.b16 %v3054, %v3054
        %v3063 = vpack.c.b16 %v3055, %v3055
        %v3064 = vpack.c.b16 %v3056, %v3056
        %v3065 = vpack.c.b16 %v3057, %v3057
        %v3066 = vpack.c.b16 %v3058, %v3058
        %v3067 = vpack.c.b16 %v3059, %v3059
        %v3068 = vpack.c.b16 %v3060, %v3060
        %3077 = vst.msk [vmem:[#allocation3 + $0x4] sm:$0xf] %vm476, %v3061
        %3078 = vst.msk [vmem:[#allocation3 + $0x18] sm:$0xf] %vm476, %v3062
        %3079 = vst.msk [vmem:[#allocation3 + $0x2c] sm:$0xf] %vm476, %v3063
        %3080 = vst.msk [vmem:[#allocation3 + $0x40] sm:$0xf] %vm476, %v3064
        %3081 = vst.msk [vmem:[#allocation3 + $0x54] sm:$0xf] %vm476, %v3065
        %3082 = vst.msk [vmem:[#allocation3 + $0x68] sm:$0xf] %vm476, %v3066
        %3083 = vst.msk [vmem:[#allocation3 + $0x7c] sm:$0xf] %vm476, %v3067
        %3084 = vst.msk [vmem:[#allocation3 + $0x90] sm:$0xf] %vm476, %v3068
        %v3085 = vpack.c.bf16 %v2853, %v2851
        %v3086 = vpack.c.bf16 %v2857, %v2855
        %v3087 = vpack.c.bf16 %v2861, %v2859
        %v3088 = vpack.c.bf16 %v2865, %v2863
        %v3093 = vunpack.c.l.b16 %v3085
        %v3094 = vunpack.c.h.b16 %v3085
        %v3095 = vunpack.c.l.b16 %v3086
        %v3096 = vunpack.c.h.b16 %v3086
        %v3097 = vunpack.c.l.b16 %v3087
        %v3098 = vunpack.c.h.b16 %v3087
        %v3099 = vunpack.c.l.b16 %v3088
        %v3100 = vunpack.c.h.b16 %v3088
        %v3101 = vpack.c.b16 %v3093, %v3093
        %v3102 = vpack.c.b16 %v3094, %v3094
        %v3103 = vpack.c.b16 %v3095, %v3095
        %v3104 = vpack.c.b16 %v3096, %v3096
        %v3105 = vpack.c.b16 %v3097, %v3097
        %v3106 = vpack.c.b16 %v3098, %v3098
        %v3107 = vpack.c.b16 %v3099, %v3099
        %v3108 = vpack.c.b16 %v3100, %v3100
        %3109 = vrot.lane.b32.xlu0 %v3101, 64
        %v3110 = vpop.permute.xlu0 %3109
        %3111 = vrot.lane.b32.xlu0 %v3102, 64
        %v3112 = vpop.permute.xlu0 %3111
        %3113 = vrot.lane.b32.xlu0 %v3103, 64
        %v3114 = vpop.permute.xlu0 %3113
        %3115 = vrot.lane.b32.xlu0 %v3104, 64
        %v3116 = vpop.permute.xlu0 %3115
        %3117 = vrot.lane.b32.xlu0 %v3105, 64
        %v3118 = vpop.permute.xlu0 %3117
        %3119 = vrot.lane.b32.xlu0 %v3106, 64
        %v3120 = vpop.permute.xlu0 %3119
        %3121 = vrot.lane.b32.xlu0 %v3107, 64
        %v3122 = vpop.permute.xlu0 %3121
        %3123 = vrot.lane.b32.xlu0 %v3108, 64
        %v3124 = vpop.permute.xlu0 %3123
        %3133 = vst.msk [vmem:[#allocation3 + $0x4] sm:$0xf] %vm582, %v3110
        %3134 = vst.msk [vmem:[#allocation3 + $0x18] sm:$0xf] %vm582, %v3112
        %3135 = vst.msk [vmem:[#allocation3 + $0x2c] sm:$0xf] %vm582, %v3114
        %3136 = vst.msk [vmem:[#allocation3 + $0x40] sm:$0xf] %vm582, %v3116
        %3137 = vst.msk [vmem:[#allocation3 + $0x54] sm:$0xf] %vm582, %v3118
        %3138 = vst.msk [vmem:[#allocation3 + $0x68] sm:$0xf] %vm582, %v3120
        %3139 = vst.msk [vmem:[#allocation3 + $0x7c] sm:$0xf] %vm582, %v3122
        %3140 = vst.msk [vmem:[#allocation3 + $0x90] sm:$0xf] %vm582, %v3124
        %v3143 = vrot.slane %v2865, 1
        %v3144 = vrot.slane %v2866, 1
        %v3145 = vsel %vm501, %v3143, %v3144
        %v3147 = vpack.c.bf16 %v2933, %v2930
        %v3148 = vpack.c.bf16 %v2939, %v2936
        %v3149 = vpack.c.bf16 %v2945, %v2942
        %v3150 = vpack.c.bf16 %v3145, %v2948
        %v3155 = vunpack.c.l.b16 %v3147
        %v3156 = vunpack.c.h.b16 %v3147
        %v3157 = vunpack.c.l.b16 %v3148
        %v3158 = vunpack.c.h.b16 %v3148
        %v3159 = vunpack.c.l.b16 %v3149
        %v3160 = vunpack.c.h.b16 %v3149
        %v3161 = vunpack.c.l.b16 %v3150
        %v3162 = vunpack.c.h.b16 %v3150
        %v3163 = vpack.c.b16 %v3155, %v3155
        %v3164 = vpack.c.b16 %v3156, %v3156
        %v3165 = vpack.c.b16 %v3157, %v3157
        %v3166 = vpack.c.b16 %v3158, %v3158
        %v3167 = vpack.c.b16 %v3159, %v3159
        %v3168 = vpack.c.b16 %v3160, %v3160
        %v3169 = vpack.c.b16 %v3161, %v3161
        %v3170 = vpack.c.b16 %v3162, %v3162
        %3179 = vst.msk [vmem:[#allocation3 + $0x8] sm:$0xf] %vm476, %v3163
        %3180 = vst.msk [vmem:[#allocation3 + $0x1c] sm:$0xf] %vm476, %v3164
        %3181 = vst.msk [vmem:[#allocation3 + $0x30] sm:$0xf] %vm476, %v3165
        %3182 = vst.msk [vmem:[#allocation3 + $0x44] sm:$0xf] %vm476, %v3166
        %3183 = vst.msk [vmem:[#allocation3 + $0x58] sm:$0xf] %vm476, %v3167
        %3184 = vst.msk [vmem:[#allocation3 + $0x6c] sm:$0xf] %vm476, %v3168
        %3185 = vst.msk [vmem:[#allocation3 + $0x80] sm:$0xf] %vm476, %v3169
        %3186 = vst.msk [vmem:[#allocation3 + $0x94] sm:$0xf] %vm476, %v3170
        %v3187 = vrot.slane %v2865, 2
        %v3188 = vrot.slane %v2866, 2
        %v3189 = vsel %vm591, %v3187, %v3188
        %v3191 = vpack.c.bf16 %v3021, %v3018
        %v3192 = vpack.c.bf16 %v3027, %v3024
        %v3193 = vpack.c.bf16 %v3033, %v3030
        %v3194 = vpack.c.bf16 %v3189, %v3036
        %v3199 = vunpack.c.l.b16 %v3191
        %v3200 = vunpack.c.h.b16 %v3191
        %v3201 = vunpack.c.l.b16 %v3192
        %v3202 = vunpack.c.h.b16 %v3192
        %v3203 = vunpack.c.l.b16 %v3193
        %v3204 = vunpack.c.h.b16 %v3193
        %v3205 = vunpack.c.l.b16 %v3194
        %v3206 = vunpack.c.h.b16 %v3194
        %v3207 = vpack.c.b16 %v3199, %v3199
        %v3208 = vpack.c.b16 %v3200, %v3200
        %v3209 = vpack.c.b16 %v3201, %v3201
        %v3210 = vpack.c.b16 %v3202, %v3202
        %v3211 = vpack.c.b16 %v3203, %v3203
        %v3212 = vpack.c.b16 %v3204, %v3204
        %v3213 = vpack.c.b16 %v3205, %v3205
        %v3214 = vpack.c.b16 %v3206, %v3206
        %3215 = vrot.lane.b32.xlu0 %v3207, 64
        %v3216 = vpop.permute.xlu0 %3215
        %3217 = vrot.lane.b32.xlu0 %v3208, 64
        %v3218 = vpop.permute.xlu0 %3217
        %3219 = vrot.lane.b32.xlu0 %v3209, 64
        %v3220 = vpop.permute.xlu0 %3219
        %3221 = vrot.lane.b32.xlu0 %v3210, 64
        %v3222 = vpop.permute.xlu0 %3221
        %3223 = vrot.lane.b32.xlu0 %v3211, 64
        %v3224 = vpop.permute.xlu0 %3223
        %3225 = vrot.lane.b32.xlu0 %v3212, 64
        %v3226 = vpop.permute.xlu0 %3225
        %3227 = vrot.lane.b32.xlu0 %v3213, 64
        %v3228 = vpop.permute.xlu0 %3227
        %3229 = vrot.lane.b32.xlu0 %v3214, 64
        %v3230 = vpop.permute.xlu0 %3229
        %3239 = vst.msk [vmem:[#allocation3 + $0x8] sm:$0xf] %vm582, %v3216
        %3240 = vst.msk [vmem:[#allocation3 + $0x1c] sm:$0xf] %vm582, %v3218
        %3241 = vst.msk [vmem:[#allocation3 + $0x30] sm:$0xf] %vm582, %v3220
        %3242 = vst.msk [vmem:[#allocation3 + $0x44] sm:$0xf] %vm582, %v3222
        %3243 = vst.msk [vmem:[#allocation3 + $0x58] sm:$0xf] %vm582, %v3224
        %3244 = vst.msk [vmem:[#allocation3 + $0x6c] sm:$0xf] %vm582, %v3226
        %3245 = vst.msk [vmem:[#allocation3 + $0x80] sm:$0xf] %vm582, %v3228
        %3246 = vst.msk [vmem:[#allocation3 + $0x94] sm:$0xf] %vm582, %v3230
        %v3247 = vpack.c.bf16 %v2867, %v2865
        %v3249 = vunpack.c.l.b16 %v3247
        %v3250 = vunpack.c.h.b16 %v3247
        %v3251 = vpack.c.b16 %v3249, %v3249
        %v3252 = vpack.c.b16 %v3250, %v3250
        %3255 = vst.msk [vmem:[#allocation3 + $0xc] sm:$0xf] %vm476, %v2887
        %3256 = vst.msk [vmem:[#allocation3 + $0x20] sm:$0xf] %vm476, %v2888
        %3257 = vst.msk [vmem:[#allocation3 + $0x34] sm:$0xf] %vm476, %v2889
        %3258 = vst.msk [vmem:[#allocation3 + $0x48] sm:$0xf] %vm476, %v2890
        %3259 = vst.msk [vmem:[#allocation3 + $0x5c] sm:$0xf] %vm476, %v2891
        %3260 = vst.msk [vmem:[#allocation3 + $0x70] sm:$0xf] %vm476, %v2892
        %3261 = vst.msk [vmem:[#allocation3 + $0x84] sm:$0xf] %vm476, %v3251
        %3262 = vst.msk [vmem:[#allocation3 + $0x98] sm:$0xf] %vm476, %v3252
        %v3265 = vrot.slane %v2867, 1
        %v3266 = vrot.slane %v2868, 1
        %v3267 = vsel %vm501, %v3265, %v3266
        %v3269 = vpack.c.bf16 %v3267, %v3145
        %v3271 = vunpack.c.l.b16 %v3269
        %v3272 = vunpack.c.h.b16 %v3269
        %v3273 = vpack.c.b16 %v3271, %v3271
        %v3274 = vpack.c.b16 %v3272, %v3272
        %3275 = vrot.lane.b32.xlu0 %v3273, 64
        %v3276 = vpop.permute.xlu0 %3275
        %3277 = vrot.lane.b32.xlu0 %v3274, 64
        %v3278 = vpop.permute.xlu0 %3277
        %3281 = vst.msk [vmem:[#allocation3 + $0xc] sm:$0xf] %vm582, %v2986
        %3282 = vst.msk [vmem:[#allocation3 + $0x20] sm:$0xf] %vm582, %v2988
        %3283 = vst.msk [vmem:[#allocation3 + $0x34] sm:$0xf] %vm582, %v2990
        %3284 = vst.msk [vmem:[#allocation3 + $0x48] sm:$0xf] %vm582, %v2992
        %3285 = vst.msk [vmem:[#allocation3 + $0x5c] sm:$0xf] %vm582, %v2994
        %3286 = vst.msk [vmem:[#allocation3 + $0x70] sm:$0xf] %vm582, %v2996
        %3287 = vst.msk [vmem:[#allocation3 + $0x84] sm:$0xf] %vm582, %v3276
        %3288 = vst.msk [vmem:[#allocation3 + $0x98] sm:$0xf] %vm582, %v3278
        %v3289 = vrot.slane %v2867, 2
        %v3290 = vrot.slane %v2868, 2
        %v3291 = vsel %vm591, %v3289, %v3290
        %v3293 = vpack.c.bf16 %v3291, %v3189
        %v3295 = vunpack.c.l.b16 %v3293
        %v3296 = vunpack.c.h.b16 %v3293
        %v3297 = vpack.c.b16 %v3295, %v3295
        %v3298 = vpack.c.b16 %v3296, %v3296
        %3301 = vst.msk [vmem:[#allocation3 + $0x10] sm:$0xf] %vm476, %v3063
        %3302 = vst.msk [vmem:[#allocation3 + $0x24] sm:$0xf] %vm476, %v3064
        %3303 = vst.msk [vmem:[#allocation3 + $0x38] sm:$0xf] %vm476, %v3065
        %3304 = vst.msk [vmem:[#allocation3 + $0x4c] sm:$0xf] %vm476, %v3066
        %3305 = vst.msk [vmem:[#allocation3 + $0x60] sm:$0xf] %vm476, %v3067
        %3306 = vst.msk [vmem:[#allocation3 + $0x74] sm:$0xf] %vm476, %v3068
        %3307 = vst.msk [vmem:[#allocation3 + $0x88] sm:$0xf] %vm476, %v3297
        %3308 = vst.msk [vmem:[#allocation3 + $0x9c] sm:$0xf] %vm476, %v3298
        %v3309 = vld [vmem:[#allocation3] sm:$0xff]
        %v3310 = vld [vmem:[#allocation3 + $0x8] sm:$0xff]
        %v3311 = vld [vmem:[#allocation3 + $0x10] sm:$0xf]
        %v3312 = vld [vmem:[#allocation3 + $0x14] sm:$0xff]
        %v3313 = vld [vmem:[#allocation3 + $0x1c] sm:$0xff]
        %v3314 = vld [vmem:[#allocation3 + $0x24] sm:$0xf]
        %v3315 = vld [vmem:[#allocation3 + $0x28] sm:$0xff]
        %v3316 = vld [vmem:[#allocation3 + $0x30] sm:$0xff]
        %v3317 = vld [vmem:[#allocation3 + $0x38] sm:$0xf]
        %v3318 = vld [vmem:[#allocation3 + $0x3c] sm:$0xff]
        %v3319 = vld [vmem:[#allocation3 + $0x44] sm:$0xff]
        %v3320 = vld [vmem:[#allocation3 + $0x4c] sm:$0xf]
        %v3321 = vld [vmem:[#allocation3 + $0x50] sm:$0xff]
        %v3322 = vld [vmem:[#allocation3 + $0x58] sm:$0xff]
        %v3323 = vld [vmem:[#allocation3 + $0x60] sm:$0xf]
        %v3324 = vld [vmem:[#allocation3 + $0x64] sm:$0xff]
        %v3325 = vld [vmem:[#allocation3 + $0x6c] sm:$0xff]
        %v3326 = vld [vmem:[#allocation3 + $0x74] sm:$0xf]
        %v3327 = vld [vmem:[#allocation3 + $0x78] sm:$0xff]
        %v3328 = vld [vmem:[#allocation3 + $0x80] sm:$0xff]
        %v3329 = vld [vmem:[#allocation3 + $0x88] sm:$0xf]
        %v3330 = vld [vmem:[#allocation3 + $0x8c] sm:$0xff]
        %v3331 = vld [vmem:[#allocation3 + $0x94] sm:$0xff]
        %v3332 = vld [vmem:[#allocation3 + $0x9c] sm:$0xf]
        %v3333 = vld [vmem:[%s2] sm:$0xf]
        %v3334 = vld [vmem:[%s2 + $0x4] sm:$0xf]
        %v3335 = vld [vmem:[%s2 + $0x8] sm:$0xf]
        %v3336 = vld [vmem:[%s2 + $0xc] sm:$0xf]
        %v3337 = vld [vmem:[%s2 + $0x10] sm:$0xf]
        %v3338 = vld [vmem:[%s2 + $0x14] sm:$0xf]
        %v3339 = vld [vmem:[%s2 + $0x18] sm:$0xf]
        %v3340 = vld [vmem:[%s2 + $0x1c] sm:$0xf]
        %v3341 = vld [vmem:[%s2 + $0x20] sm:$0xf]
        %v3342 = vld [vmem:[%s2 + $0x24] sm:$0xf]
        %v3343 = vld [vmem:[%s2 + $0x28] sm:$0xf]
        %v3344 = vld [vmem:[%s2 + $0x2c] sm:$0xf]
        %v3345 = vld [vmem:[%s2 + $0x30] sm:$0xf]
        %v3346 = vld [vmem:[%s2 + $0x34] sm:$0xf]
        %v3347 = vld [vmem:[%s2 + $0x38] sm:$0xf]
        %v3348 = vld [vmem:[%s2 + $0x3c] sm:$0xf]
        %v3349 = vld [vmem:[%s2 + $0x40] sm:$0xf]
        %v3350 = vld [vmem:[%s2 + $0x44] sm:$0xf]
        %v3351 = vld [vmem:[%s2 + $0x48] sm:$0xf]
        %v3352 = vld [vmem:[%s2 + $0x4c] sm:$0xf]
        %v3353 = vld [vmem:[%s2 + $0x50] sm:$0xf]
        %v3354 = vld [vmem:[%s2 + $0x54] sm:$0xf]
        %v3355 = vld [vmem:[%s2 + $0x58] sm:$0xf]
        %v3356 = vld [vmem:[%s2 + $0x5c] sm:$0xf]
        %v3357 = vld [vmem:[%s2 + $0x60] sm:$0xf]
        %v3358 = vld [vmem:[%s2 + $0x64] sm:$0xf]
        %v3359 = vld [vmem:[%s2 + $0x68] sm:$0xf]
        %v3360 = vld [vmem:[%s2 + $0x6c] sm:$0xf]
        %v3361 = vld [vmem:[%s2 + $0x70] sm:$0xf]
        %v3362 = vld [vmem:[%s2 + $0x74] sm:$0xf]
        %v3363 = vld [vmem:[%s2 + $0x78] sm:$0xf]
        %v3364 = vld [vmem:[%s2 + $0x7c] sm:$0xf]
        %v3365 = vld [vmem:[%s2 + $0x80] sm:$0xf]
        %v3366 = vld [vmem:[%s2 + $0x84] sm:$0xf]
        %v3367 = vld [vmem:[%s2 + $0x88] sm:$0xf]
        %v3368 = vld [vmem:[%s2 + $0x8c] sm:$0xf]
        %v3369 = vld [vmem:[%s2 + $0x90] sm:$0xf]
        %v3370 = vld [vmem:[%s2 + $0x94] sm:$0xf]
        %v3371 = vld [vmem:[%s2 + $0x98] sm:$0xf]
        %v3372 = vld [vmem:[%s2 + $0x9c] sm:$0xf]
        %v3373 = vld [vmem:[%s2 + $0xa0] sm:$0xf]
        %v3374 = vld [vmem:[%s2 + $0xa4] sm:$0xf]
        %v3375 = vld [vmem:[%s2 + $0xa8] sm:$0xf]
        %v3376 = vld [vmem:[%s2 + $0xac] sm:$0xf]
        %v3377 = vld [vmem:[%s2 + $0xb0] sm:$0xf]
        %v3378 = vld [vmem:[%s2 + $0xb4] sm:$0xf]
        %v3379 = vld [vmem:[%s2 + $0xb8] sm:$0xf]
        %v3380 = vld [vmem:[%s2 + $0xbc] sm:$0xf]
        %v3381 = vld [vmem:[%s2 + $0xc0] sm:$0xf]
        %v3382 = vld [vmem:[%s2 + $0xc4] sm:$0xf]
        %v3383 = vld [vmem:[%s2 + $0xc8] sm:$0xf]
        %v3384 = vld [vmem:[%s2 + $0xcc] sm:$0xf]
        %v3385 = vld [vmem:[%s2 + $0xd0] sm:$0xf]
        %v3386 = vld [vmem:[%s2 + $0xd4] sm:$0xf]
        %v3387 = vld [vmem:[%s2 + $0xd8] sm:$0xf]
        %v3388 = vld [vmem:[%s2 + $0xdc] sm:$0xf]
        %v3389 = vld [vmem:[%s2 + $0xe0] sm:$0xf]
        %v3390 = vld [vmem:[%s2 + $0xe4] sm:$0xf]
        %v3391 = vld [vmem:[%s2 + $0xe8] sm:$0xf]
        %v3392 = vld [vmem:[%s2 + $0xec] sm:$0xf]
        %v3393 = vld [vmem:[%s2 + $0xf0] sm:$0xf]
        %v3394 = vld [vmem:[%s2 + $0xf4] sm:$0xf]
        %v3395 = vld [vmem:[%s2 + $0xf8] sm:$0xf]
        %v3396 = vld [vmem:[%s2 + $0xfc] sm:$0xf]
        %v3397 = vld [vmem:[%s2 + $0x100] sm:$0xf]
        %v3398 = vld [vmem:[%s2 + $0x104] sm:$0xf]
        %v3399 = vld [vmem:[%s2 + $0x108] sm:$0xf]
        %v3400 = vld [vmem:[%s2 + $0x10c] sm:$0xf]
        %v3401 = vld [vmem:[%s2 + $0x110] sm:$0xf]
        %v3402 = vld [vmem:[%s2 + $0x114] sm:$0xf]
        %v3403 = vld [vmem:[%s2 + $0x118] sm:$0xf]
        %v3404 = vld [vmem:[%s2 + $0x11c] sm:$0xf]
        %v3405 = vlaneseq
        %v3406 = vshrl.u32 %v3405, 7
        %v3407 = vsub.s32 1, %v3406
        %v3408 = vrot.slane %v375, %v3407
        %v3433 = vunpack.c.l.b16 %v3309
        %v3434 = vunpack.c.h.b16 %v3309
        %v3435 = vunpack.c.l.b16 %v3310
        %v3436 = vunpack.c.h.b16 %v3310
        %v3437 = vunpack.c.l.b16 %v3311
        %v3438 = vunpack.c.l.b16 %v3312
        %v3439 = vunpack.c.h.b16 %v3312
        %v3440 = vunpack.c.l.b16 %v3313
        %v3441 = vunpack.c.h.b16 %v3313
        %v3442 = vunpack.c.l.b16 %v3314
        %v3443 = vunpack.c.l.b16 %v3315
        %v3444 = vunpack.c.h.b16 %v3315
        %v3445 = vunpack.c.l.b16 %v3316
        %v3446 = vunpack.c.h.b16 %v3316
        %v3447 = vunpack.c.l.b16 %v3317
        %v3448 = vunpack.c.l.b16 %v3318
        %v3449 = vunpack.c.h.b16 %v3318
        %v3450 = vunpack.c.l.b16 %v3319
        %v3451 = vunpack.c.h.b16 %v3319
        %v3452 = vunpack.c.l.b16 %v3320
        %v3453 = vunpack.c.l.b16 %v3321
        %v3454 = vunpack.c.h.b16 %v3321
        %v3455 = vunpack.c.l.b16 %v3322
        %v3456 = vunpack.c.h.b16 %v3322
        %v3457 = vunpack.c.l.b16 %v3323
        %v3458 = vunpack.c.l.b16 %v3324
        %v3459 = vunpack.c.h.b16 %v3324
        %v3460 = vunpack.c.l.b16 %v3325
        %v3461 = vunpack.c.h.b16 %v3325
        %v3462 = vunpack.c.l.b16 %v3326
        %v3463 = vunpack.c.l.b16 %v3327
        %v3464 = vunpack.c.h.b16 %v3327
        %v3465 = vunpack.c.l.b16 %v3328
        %v3466 = vunpack.c.h.b16 %v3328
        %v3467 = vunpack.c.l.b16 %v3329
        %v3468 = vunpack.c.l.b16 %v3330
        %v3469 = vunpack.c.h.b16 %v3330
        %v3470 = vunpack.c.l.b16 %v3331
        %v3471 = vunpack.c.h.b16 %v3331
        %v3472 = vunpack.c.l.b16 %v3332
        %v3473 = vpack.c.b16 %v3438, %v3433
        %v3474 = vpack.c.b16 %v3439, %v3434
        %v3475 = vpack.c.b16 %v3440, %v3435
        %v3476 = vpack.c.b16 %v3441, %v3436
        %v3477 = vpack.c.b16 %v3442, %v3437
        %v3478 = vpack.c.b16 %v3448, %v3443
        %v3479 = vpack.c.b16 %v3449, %v3444
        %v3480 = vpack.c.b16 %v3450, %v3445
        %v3481 = vpack.c.b16 %v3451, %v3446
        %v3482 = vpack.c.b16 %v3452, %v3447
        %v3483 = vpack.c.b16 %v3458, %v3453
        %v3484 = vpack.c.b16 %v3459, %v3454
        %v3485 = vpack.c.b16 %v3460, %v3455
        %v3486 = vpack.c.b16 %v3461, %v3456
        %v3487 = vpack.c.b16 %v3462, %v3457
        %v3488 = vpack.c.b16 %v3468, %v3463
        %v3489 = vpack.c.b16 %v3469, %v3464
        %v3490 = vpack.c.b16 %v3470, %v3465
        %v3491 = vpack.c.b16 %v3471, %v3466
        %v3492 = vpack.c.b16 %v3472, %v3467
        %v3581 = vunpack.c.l.b16 %v3333
        %v3582 = vunpack.c.l.b16 %v3334
        %v3583 = vunpack.c.l.b16 %v3335
        %v3584 = vunpack.c.l.b16 %v3336
        %v3585 = vunpack.c.l.b16 %v3337
        %v3586 = vunpack.c.l.b16 %v3338
        %v3587 = vunpack.c.l.b16 %v3339
        %v3588 = vunpack.c.l.b16 %v3340
        %v3589 = vunpack.c.l.b16 %v3341
        %v3590 = vunpack.c.l.b16 %v3342
        %v3591 = vunpack.c.l.b16 %v3343
        %v3592 = vunpack.c.l.b16 %v3344
        %v3593 = vunpack.c.l.b16 %v3345
        %v3594 = vunpack.c.l.b16 %v3346
        %v3595 = vunpack.c.l.b16 %v3347
        %v3596 = vunpack.c.l.b16 %v3348
        %v3597 = vunpack.c.l.b16 %v3349
        %v3598 = vunpack.c.l.b16 %v3350
        %v3599 = vunpack.c.l.b16 %v3351
        %v3600 = vunpack.c.l.b16 %v3352
        %v3601 = vunpack.c.l.b16 %v3353
        %v3602 = vunpack.c.l.b16 %v3354
        %v3603 = vunpack.c.l.b16 %v3355
        %v3604 = vunpack.c.l.b16 %v3356
        %v3605 = vunpack.c.l.b16 %v3357
        %v3606 = vunpack.c.l.b16 %v3358
        %v3607 = vunpack.c.l.b16 %v3359
        %v3608 = vunpack.c.l.b16 %v3360
        %v3609 = vunpack.c.l.b16 %v3361
        %v3610 = vunpack.c.l.b16 %v3362
        %v3611 = vunpack.c.l.b16 %v3363
        %v3612 = vunpack.c.l.b16 %v3364
        %v3613 = vunpack.c.l.b16 %v3365
        %v3614 = vunpack.c.l.b16 %v3366
        %v3615 = vunpack.c.l.b16 %v3367
        %v3616 = vunpack.c.l.b16 %v3368
        %v3617 = vunpack.c.l.b16 %v3369
        %v3618 = vunpack.c.l.b16 %v3370
        %v3619 = vunpack.c.l.b16 %v3371
        %v3620 = vunpack.c.l.b16 %v3372
        %v3621 = vunpack.c.l.b16 %v3373
        %v3622 = vunpack.c.l.b16 %v3374
        %v3623 = vunpack.c.l.b16 %v3375
        %v3624 = vunpack.c.l.b16 %v3376
        %v3625 = vunpack.c.l.b16 %v3377
        %v3626 = vunpack.c.l.b16 %v3378
        %v3627 = vunpack.c.l.b16 %v3379
        %v3628 = vunpack.c.l.b16 %v3380
        %v3629 = vunpack.c.l.b16 %v3381
        %v3630 = vunpack.c.l.b16 %v3382
        %v3631 = vunpack.c.l.b16 %v3383
        %v3632 = vunpack.c.l.b16 %v3384
        %v3633 = vunpack.c.l.b16 %v3385
        %v3634 = vunpack.c.l.b16 %v3386
        %v3635 = vunpack.c.l.b16 %v3387
        %v3636 = vunpack.c.l.b16 %v3388
        %v3637 = vunpack.c.l.b16 %v3389
        %v3638 = vunpack.c.l.b16 %v3390
        %v3639 = vunpack.c.l.b16 %v3391
        %v3640 = vunpack.c.l.b16 %v3392
        %v3641 = vunpack.c.l.b16 %v3393
        %v3642 = vunpack.c.l.b16 %v3394
        %v3643 = vunpack.c.l.b16 %v3395
        %v3644 = vunpack.c.l.b16 %v3396
        %v3645 = vunpack.c.l.b16 %v3397
        %v3646 = vunpack.c.l.b16 %v3398
        %v3647 = vunpack.c.l.b16 %v3399
        %v3648 = vunpack.c.l.b16 %v3400
        %v3649 = vunpack.c.l.b16 %v3401
        %v3650 = vunpack.c.l.b16 %v3402
        %v3651 = vunpack.c.l.b16 %v3403
        %v3652 = vunpack.c.l.b16 %v3404
        %v3653 = vpack.c.b16 %v3582, %v3581
        %v3654 = vpack.c.b16 %v3584, %v3583
        %v3655 = vpack.c.b16 %v3586, %v3585
        %v3656 = vpack.c.b16 %v3588, %v3587
        %v3657 = vpack.c.b16 %v3590, %v3589
        %v3658 = vpack.c.b16 %v3592, %v3591
        %v3659 = vpack.c.b16 %v3594, %v3593
        %v3660 = vpack.c.b16 %v3596, %v3595
        %v3661 = vpack.c.b16 %v3598, %v3597
        %v3662 = vpack.c.b16 %v3600, %v3599
        %v3663 = vpack.c.b16 %v3602, %v3601
        %v3664 = vpack.c.b16 %v3604, %v3603
        %v3665 = vpack.c.b16 %v3606, %v3605
        %v3666 = vpack.c.b16 %v3608, %v3607
        %v3667 = vpack.c.b16 %v3610, %v3609
        %v3668 = vpack.c.b16 %v3612, %v3611
        %v3669 = vpack.c.b16 %v3614, %v3613
        %v3670 = vpack.c.b16 %v3616, %v3615
        %v3671 = vpack.c.b16 %v3618, %v3617
        %v3672 = vpack.c.b16 %v3620, %v3619
        %v3673 = vpack.c.b16 %v3622, %v3621
        %v3674 = vpack.c.b16 %v3624, %v3623
        %v3675 = vpack.c.b16 %v3626, %v3625
        %v3676 = vpack.c.b16 %v3628, %v3627
        %v3677 = vpack.c.b16 %v3630, %v3629
        %v3678 = vpack.c.b16 %v3632, %v3631
        %v3679 = vpack.c.b16 %v3634, %v3633
        %v3680 = vpack.c.b16 %v3636, %v3635
        %v3681 = vpack.c.b16 %v3638, %v3637
        %v3682 = vpack.c.b16 %v3640, %v3639
        %v3683 = vpack.c.b16 %v3642, %v3641
        %v3684 = vpack.c.b16 %v3644, %v3643
        %v3685 = vpack.c.b16 %v3646, %v3645
        %v3686 = vpack.c.b16 %v3648, %v3647
        %v3687 = vpack.c.b16 %v3650, %v3649
        %v3688 = vpack.c.b16 %v3652, %v3651
        %v3726 = vsel %vm386, %v3477, 0
        %v3729 = vsel %vm386, %v3482, 0
        %v3732 = vsel %vm386, %v3487, 0
        %v3735 = vsel %vm386, %v3492, 0
        %3737 = vmatprep.subr.bf16.mxu0 0
        %3738 = vmatpush1.bf16.msra.mxu0 %v3660
        %3739 = vmatprep.subr.bf16.mxu0 0
        %3740 = vmatpush1.bf16.msra.mxu0 %v3659
        %3741 = vmatprep.subr.bf16.mxu0 0
        %3742 = vmatpush1.bf16.msra.mxu0 %v3658
        %3743 = vmatprep.subr.bf16.mxu0 0
        %3744 = vmatpush1.bf16.msra.mxu0 %v3657
        %3745 = vmatprep.subr.bf16.mxu0 0
        %3746 = vmatpush1.bf16.msra.mxu0 %v3656
        %3747 = vmatprep.subr.bf16.mxu0 0
        %3748 = vmatpush1.bf16.msra.mxu0 %v3655
        %3749 = vmatprep.subr.bf16.mxu0 0
        %3750 = vmatpush1.bf16.msra.mxu0 %v3654
        %3751 = vmatprep.subr.bf16.mxu0 0
        %3752 = vmatpush1.bf16.msra.mxu0 %v3653
        %3753 = vmatprep.subr.bf16.mxu0 0
        %3754 = vmatpush2.bf16.msra.mxu0 %v3668
        %3755 = vmatprep.subr.bf16.mxu0 0
        %3756 = vmatpush2.bf16.msra.mxu0 %v3667
        %3757 = vmatprep.subr.bf16.mxu0 0
        %3758 = vmatpush2.bf16.msra.mxu0 %v3666
        %3759 = vmatprep.subr.bf16.mxu0 0
        %3760 = vmatpush2.bf16.msra.mxu0 %v3665
        %3761 = vmatprep.subr.bf16.mxu0 0
        %3762 = vmatpush2.bf16.msra.mxu0 %v3664
        %3763 = vmatprep.subr.bf16.mxu0 0
        %3764 = vmatpush2.bf16.msra.mxu0 %v3663
        %3765 = vmatprep.subr.bf16.mxu0 0
        %3766 = vmatpush2.bf16.msra.mxu0 %v3662
        %3767 = vmatprep.subr.bf16.mxu0 0
        %3768 = vmatpush2.bf16.msra.mxu0 %v3661
        %3769 = vmatprep.mubr.bf16.mxu0 %v3474
        %3770 = vmatmul.mubr.bf16.gmra.mxu0 %v3473
        %v3771 = vpop.f32.mrf.mxu0
        %v3772 = vadd.f32 %v3408, %v3771
        %v3773 = vpop.f32.mrf.mxu0
        %v3774 = vpop.f32.mrf.mxu0
        %v3775 = vadd.f32 %v3408, %v3774
        %v3776 = vpop.f32.mrf.mxu0
        %3777 = vmatprep.mubr.bf16.mxu0 %v3479
        %3778 = vmatmul.mubr.bf16.gmra.mxu0 %v3478
        %v3779 = vpop.f32.mrf.mxu0
        %v3780 = vadd.f32 %v3408, %v3779
        %v3781 = vpop.f32.mrf.mxu0
        %v3782 = vpop.f32.mrf.mxu0
        %v3783 = vadd.f32 %v3408, %v3782
        %v3784 = vpop.f32.mrf.mxu0
        %3785 = vmatprep.mubr.bf16.mxu0 %v3484
        %3786 = vmatmul.mubr.bf16.gmra.mxu0 %v3483
        %v3787 = vpop.f32.mrf.mxu0
        %v3788 = vadd.f32 %v3408, %v3787
        %v3789 = vpop.f32.mrf.mxu0
        %v3790 = vpop.f32.mrf.mxu0
        %v3791 = vadd.f32 %v3408, %v3790
        %v3792 = vpop.f32.mrf.mxu0
        %3793 = vmatprep.mubr.bf16.mxu0 %v3489
        %3794 = vmatmul.mubr.bf16.gmra.mxu0 %v3488
        %v3795 = vpop.f32.mrf.mxu0
        %v3796 = vadd.f32 %v3408, %v3795
        %v3797 = vpop.f32.mrf.mxu0
        %v3798 = vpop.f32.mrf.mxu0
        %v3799 = vadd.f32 %v3408, %v3798
        %v3800 = vpop.f32.mrf.mxu0
        %3801 = vdwg.mxu0
        %3802 = vmatprep.subr.bf16.mxu0 0
        %3803 = vmatpush1.bf16.msra.mxu0 %v3676
        %3804 = vmatprep.subr.bf16.mxu0 0
        %3805 = vmatpush1.bf16.msra.mxu0 %v3675
        %3806 = vmatprep.subr.bf16.mxu0 0
        %3807 = vmatpush1.bf16.msra.mxu0 %v3674
        %3808 = vmatprep.subr.bf16.mxu0 0
        %3809 = vmatpush1.bf16.msra.mxu0 %v3673
        %3810 = vmatprep.subr.bf16.mxu0 0
        %3811 = vmatpush1.bf16.msra.mxu0 %v3672
        %3812 = vmatprep.subr.bf16.mxu0 0
        %3813 = vmatpush1.bf16.msra.mxu0 %v3671
        %3814 = vmatprep.subr.bf16.mxu0 0
        %3815 = vmatpush1.bf16.msra.mxu0 %v3670
        %3816 = vmatprep.subr.bf16.mxu0 0
        %3817 = vmatpush1.bf16.msra.mxu0 %v3669
        %3818 = vmatprep.subr.bf16.mxu0 0
        %3819 = vmatpush2.bf16.msra.mxu0 %v3684
        %3820 = vmatprep.subr.bf16.mxu0 0
        %3821 = vmatpush2.bf16.msra.mxu0 %v3683
        %3822 = vmatprep.subr.bf16.mxu0 0
        %3823 = vmatpush2.bf16.msra.mxu0 %v3682
        %3824 = vmatprep.subr.bf16.mxu0 0
        %3825 = vmatpush2.bf16.msra.mxu0 %v3681
        %3826 = vmatprep.subr.bf16.mxu0 0
        %3827 = vmatpush2.bf16.msra.mxu0 %v3680
        %3828 = vmatprep.subr.bf16.mxu0 0
        %3829 = vmatpush2.bf16.msra.mxu0 %v3679
        %3830 = vmatprep.subr.bf16.mxu0 0
        %3831 = vmatpush2.bf16.msra.mxu0 %v3678
        %3832 = vmatprep.subr.bf16.mxu0 0
        %3833 = vmatpush2.bf16.msra.mxu0 %v3677
        %3834 = vmatprep.mubr.bf16.mxu0 %v3476
        %3835 = vmatmul.mubr.bf16.gmra.mxu0 %v3475
        %v3836 = vpop.f32.mrf.mxu0
        %v3837 = vadd.f32 %v3772, %v3836
        %v3838 = vpop.f32.mrf.mxu0
        %v3839 = vpop.f32.mrf.mxu0
        %v3840 = vadd.f32 %v3775, %v3839
        %v3841 = vpop.f32.mrf.mxu0
        %3842 = vmatprep.mubr.bf16.mxu0 %v3481
        %3843 = vmatmul.mubr.bf16.gmra.mxu0 %v3480
        %v3844 = vpop.f32.mrf.mxu0
        %v3845 = vadd.f32 %v3780, %v3844
        %v3846 = vpop.f32.mrf.mxu0
        %v3847 = vpop.f32.mrf.mxu0
        %v3848 = vadd.f32 %v3783, %v3847
        %v3849 = vpop.f32.mrf.mxu0
        %3850 = vmatprep.mubr.bf16.mxu0 %v3486
        %3851 = vmatmul.mubr.bf16.gmra.mxu0 %v3485
        %v3852 = vpop.f32.mrf.mxu0
        %v3853 = vadd.f32 %v3788, %v3852
        %v3854 = vpop.f32.mrf.mxu0
        %v3855 = vpop.f32.mrf.mxu0
        %v3856 = vadd.f32 %v3791, %v3855
        %v3857 = vpop.f32.mrf.mxu0
        %3858 = vmatprep.mubr.bf16.mxu0 %v3491
        %3859 = vmatmul.mubr.bf16.gmra.mxu0 %v3490
        %v3860 = vpop.f32.mrf.mxu0
        %v3861 = vadd.f32 %v3796, %v3860
        %v3862 = vpop.f32.mrf.mxu0
        %v3863 = vpop.f32.mrf.mxu0
        %v3864 = vadd.f32 %v3799, %v3863
        %v3865 = vpop.f32.mrf.mxu0
        %3866 = vdwg.mxu0
        %3867 = vmatprep.subr.bf16.mxu0 0
        %3868 = vmatpush1.bf16.msra.mxu0 0
        %3869 = vmatprep.subr.bf16.mxu0 0
        %3870 = vmatpush1.bf16.msra.mxu0 0
        %3871 = vmatprep.subr.bf16.mxu0 0
        %3872 = vmatpush1.bf16.msra.mxu0 0
        %3873 = vmatprep.subr.bf16.mxu0 0
        %3874 = vmatpush1.bf16.msra.mxu0 0
        %3875 = vmatprep.subr.bf16.mxu0 0
        %3876 = vmatpush1.bf16.msra.mxu0 %v3688
        %3877 = vmatprep.subr.bf16.mxu0 0
        %3878 = vmatpush1.bf16.msra.mxu0 %v3687
        %3879 = vmatprep.subr.bf16.mxu0 0
        %3880 = vmatpush1.bf16.msra.mxu0 %v3686
        %3881 = vmatprep.subr.bf16.mxu0 0
        %3882 = vmatpush1.bf16.msra.mxu0 %v3685
        %3883 = vmatprep.subr.bf16.mxu0 0
        %3884 = vmatpush2.bf16.msra.mxu0 0
        %3885 = vmatprep.subr.bf16.mxu0 0
        %3886 = vmatpush2.bf16.msra.mxu0 0
        %3887 = vmatprep.subr.bf16.mxu0 0
        %3888 = vmatpush2.bf16.msra.mxu0 0
        %3889 = vmatprep.subr.bf16.mxu0 0
        %3890 = vmatpush2.bf16.msra.mxu0 0
        %3891 = vmatprep.subr.bf16.mxu0 0
        %3892 = vmatpush2.bf16.msra.mxu0 0
        %3893 = vmatprep.subr.bf16.mxu0 0
        %3894 = vmatpush2.bf16.msra.mxu0 0
        %3895 = vmatprep.subr.bf16.mxu0 0
        %3896 = vmatpush2.bf16.msra.mxu0 0
        %3897 = vmatprep.subr.bf16.mxu0 0
        %3898 = vmatpush2.bf16.msra.mxu0 0
        %3899 = vmatprep.mubr.bf16.mxu0 0
        %3900 = vmatmul.mubr.bf16.gmra.mxu0 %v3726
        %v3901 = vpop.f32.mrf.mxu0
        %v3902 = vadd.f32 %v3837, %v3901
        %v3903 = vpop.f32.mrf.mxu0
        %v3904 = vpop.f32.mrf.mxu0
        %v3905 = vadd.f32 %v3840, %v3904
        %v3906 = vpop.f32.mrf.mxu0
        %3907 = vmatprep.mubr.bf16.mxu0 0
        %3908 = vmatmul.mubr.bf16.gmra.mxu0 %v3729
        %v3909 = vpop.f32.mrf.mxu0
        %v3910 = vadd.f32 %v3845, %v3909
        %v3911 = vpop.f32.mrf.mxu0
        %v3912 = vpop.f32.mrf.mxu0
        %v3913 = vadd.f32 %v3848, %v3912
        %v3914 = vpop.f32.mrf.mxu0
        %3915 = vmatprep.mubr.bf16.mxu0 0
        %3916 = vmatmul.mubr.bf16.gmra.mxu0 %v3732
        %v3917 = vpop.f32.mrf.mxu0
        %v3918 = vadd.f32 %v3853, %v3917
        %v3919 = vpop.f32.mrf.mxu0
        %v3920 = vpop.f32.mrf.mxu0
        %v3921 = vadd.f32 %v3856, %v3920
        %v3922 = vpop.f32.mrf.mxu0
        %3923 = vmatprep.mubr.bf16.mxu0 0
        %3924 = vmatmul.mubr.bf16.gmra.mxu0 %v3735
        %v3925 = vpop.f32.mrf.mxu0
        %v3926 = vadd.f32 %v3861, %v3925
        %v3927 = vpop.f32.mrf.mxu0
        %v3928 = vpop.f32.mrf.mxu0
        %v3929 = vadd.f32 %v3864, %v3928
        %v3930 = vpop.f32.mrf.mxu0
        %3931 = vdwg.mxu0
        %v3932 = vmax.f32 %v3902, 0.0
        %v3933 = vmax.f32 %v3905, 0.0
        %v3934 = vmax.f32 %v3910, 0.0
        %v3935 = vmax.f32 %v3913, 0.0
        %v3936 = vmax.f32 %v3918, 0.0
        %v3937 = vmax.f32 %v3921, 0.0
        %v3938 = vmax.f32 %v3926, 0.0
        %v3939 = vmax.f32 %v3929, 0.0
        %3940 = vxpose.xlu0.b32.start [1/16] %v3932, 128
        %3941 = vxpose.xlu0.b32.cont [2/16] %v3933, 128
        %3942 = vxpose.xlu0.b32.cont [3/16] %v3934, 128
        %3943 = vxpose.xlu0.b32.cont [4/16] %v3935, 128
        %3944 = vxpose.xlu0.b32.cont [5/16] %v3936, 128
        %3945 = vxpose.xlu0.b32.cont [6/16] %v3937, 128
        %3946 = vxpose.xlu0.b32.cont [7/16] %v3938, 128
        %3947 = vxpose.xlu0.b32.cont [8/16] %v3939, 128
        %3948 = vxpose.xlu0.b32.cont [9/16] 0.0, 128
        %3949 = vxpose.xlu0.b32.cont [10/16] 0.0, 128
        %3950 = vxpose.xlu0.b32.cont [11/16] 0.0, 128
        %3951 = vxpose.xlu0.b32.cont [12/16] 0.0, 128
        %3952 = vxpose.xlu0.b32.cont [13/16] 0.0, 128
        %3953 = vxpose.xlu0.b32.cont [14/16] 0.0, 128
        %3954 = vxpose.xlu0.b32.cont [15/16] 0.0, 128
        %3955 = vxpose.xlu0.b32.end [16/16] 0.0, 128
        %v3956 = vpop.trf.xlu0
        %v3957 = vpop.trf.xlu0
        %v3958 = vpop.trf.xlu0
        %v3959 = vpop.trf.xlu0
        %v3960 = vpop.trf.xlu0
        %v3961 = vpop.trf.xlu0
        %v3962 = vpop.trf.xlu0
        %v3963 = vpop.trf.xlu0
        %v3964 = vpop.trf.xlu0
        %v3965 = vpop.trf.xlu0
        %v3966 = vpop.trf.xlu0
        %v3967 = vpop.trf.xlu0
        %v3968 = vpop.trf.xlu0
        %v3969 = vpop.trf.xlu0
        %v3970 = vpop.trf.xlu0
        %v3971 = vpop.trf.xlu0
        %v3973 = vsel %vm386, %v3956, 0
        %v3976 = vsel %vm386, %v3957, 0
        %3978 = vmatprep.subr.mxu0 0.0
        %3979 = vmatpush1.msra.mxu0 0.0
        %3980 = vmatprep.subr.mxu0 0.0
        %3981 = vmatpush1.msra.mxu0 0.0
        %3982 = vmatprep.subr.mxu0 0.0
        %3983 = vmatpush1.msra.mxu0 0.0
        %3984 = vmatprep.subr.mxu0 0.0
        %3985 = vmatpush1.msra.mxu0 0.0
        %3986 = vmatprep.subr.mxu0 0.0
        %3987 = vmatpush1.msra.mxu0 0.0
        %3988 = vmatprep.subr.mxu0 0.0
        %3989 = vmatpush1.msra.mxu0 0.0
        %3990 = vmatprep.subr.mxu0 0.0
        %3991 = vmatpush1.msra.mxu0 0.0
        %3992 = vmatprep.subr.mxu0 0.0
        %3993 = vmatpush1.msra.mxu0 0.0
        %3994 = vmatprep.subr.mxu0 0.0
        %3995 = vmatpush1.msra.mxu0 %v3939
        %3996 = vmatprep.subr.mxu0 0.0
        %3997 = vmatpush1.msra.mxu0 %v3938
        %3998 = vmatprep.subr.mxu0 0.0
        %3999 = vmatpush1.msra.mxu0 %v3937
        %4000 = vmatprep.subr.mxu0 0.0
        %4001 = vmatpush1.msra.mxu0 %v3936
        %4002 = vmatprep.subr.mxu0 0.0
        %4003 = vmatpush1.msra.mxu0 %v3935
        %4004 = vmatprep.subr.mxu0 0.0
        %4005 = vmatpush1.msra.mxu0 %v3934
        %4006 = vmatprep.subr.mxu0 0.0
        %4007 = vmatpush1.msra.mxu0 %v3933
        %4008 = vmatprep.subr.mxu0 0.0
        %4009 = vmatpush1.msra.mxu0 %v3932
        %4010 = vmatprep.subr.mxu0 0.0
        %4011 = vmatpush2.msra.mxu0 0.0
        %4012 = vmatprep.subr.mxu0 0.0
        %4013 = vmatpush2.msra.mxu0 0.0
        %4014 = vmatprep.subr.mxu0 0.0
        %4015 = vmatpush2.msra.mxu0 0.0
        %4016 = vmatprep.subr.mxu0 0.0
        %4017 = vmatpush2.msra.mxu0 0.0
        %4018 = vmatprep.subr.mxu0 0.0
        %4019 = vmatpush2.msra.mxu0 0.0
        %4020 = vmatprep.subr.mxu0 0.0
        %4021 = vmatpush2.msra.mxu0 0.0
        %4022 = vmatprep.subr.mxu0 0.0
        %4023 = vmatpush2.msra.mxu0 0.0
        %4024 = vmatprep.subr.mxu0 0.0
        %4025 = vmatpush2.msra.mxu0 0.0
        %4026 = vmatprep.subr.mxu0 0.0
        %4027 = vmatpush2.msra.mxu0 0.0
        %4028 = vmatprep.subr.mxu0 0.0
        %4029 = vmatpush2.msra.mxu0 0.0
        %4030 = vmatprep.subr.mxu0 0.0
        %4031 = vmatpush2.msra.mxu0 0.0
        %4032 = vmatprep.subr.mxu0 0.0
        %4033 = vmatpush2.msra.mxu0 0.0
        %4034 = vmatprep.subr.mxu0 0.0
        %4035 = vmatpush2.msra.mxu0 0.0
        %4036 = vmatprep.subr.mxu0 0.0
        %4037 = vmatpush2.msra.mxu0 0.0
        %4038 = vmatprep.subr.mxu0 0.0
        %4039 = vmatpush2.msra.mxu0 0.0
        %4040 = vmatprep.subr.mxu0 0.0
        %4041 = vmatpush2.msra.mxu0 0.0
        %4042 = vmatprep.mubr.f32.mxu0 0.0
        %4043 = vmatmul.mubr.f32.gmra.mxu0 %v3973
        %v4044 = vpop.f32.mrf.mxu0
        %v4045 = vadd.f32 0.0, %v4044
        %v4046 = vpop.f32.mrf.mxu0
        %4047 = vmatprep.mubr.f32.mxu0 0.0
        %4048 = vmatmul.mubr.f32.gmra.mxu0 %v3976
        %v4049 = vpop.f32.mrf.mxu0
        %v4050 = vadd.f32 0.0, %v4049
        %v4051 = vpop.f32.mrf.mxu0
        %4052 = vdwg.mxu0
        %v4053 = vsel %vm1535, %v4045, -inf
        %4054 = vmax.xlane.f32.xlu0 %v4053
        %v4055 = vpop.xlane.xlu0 %4054
        %v4056 = vsel %vm1535, %v4050, -inf
        %4057 = vmax.xlane.f32.xlu0 %v4056
        %v4058 = vpop.xlane.xlu0 %4057
        %v4059 = vsub.f32 %v4055, %v4045
        %v4060 = vsub.f32 %v4058, %v4050
        %v4061 = vsel %vm1535, %v4059, -inf
        %4062 = vmax.xlane.f32.xlu0 %v4061
        %v4063 = vpop.xlane.xlu0 %4062
        %v4064 = vsel %vm1535, %v4060, -inf
        %4065 = vmax.xlane.f32.xlu0 %v4064
        %v4066 = vpop.xlane.xlu0 %4065
        %v4067 = vsub.f32 %v4059, %v4063
        %v4068 = vsub.f32 %v4060, %v4066
        %v4069 = vmul.f32 %v4067, 1.442695
        %v4070 = vpow.pop %v4069
        %v4071 = vmul.f32 %v4068, 1.442695
        %v4072 = vpow.pop %v4071
        %v4073 = vsel %vm1535, %v4070, 0.0
        %4074 = vadd.xlane.f32.xlu0 %v4073
        %v4075 = vpop.xlane.xlu0 %4074
        %v4076 = vsel %vm1535, %v4072, 0.0
        %4077 = vadd.xlane.f32.xlu0 %v4076
        %v4078 = vpop.xlane.xlu0 %4077
        %v4079 = vrcp.pop %v4075
        %v4080 = vrcp.pop %v4078
        %v4081 = vmul.f32 %v4070, %v4079
        %v4082 = vmul.f32 %v4072, %v4080
        %v4084 = vsel %vm1535, %v3932, 0
        %v4087 = vsel %vm1535, %v3933, 0
        %v4090 = vsel %vm1535, %v3934, 0
        %v4093 = vsel %vm1535, %v3935, 0
        %v4096 = vsel %vm1535, %v3936, 0
        %v4099 = vsel %vm1535, %v3937, 0
        %v4102 = vsel %vm1535, %v3938, 0
        %v4105 = vsel %vm1535, %v3939, 0
        %v4108 = vsel %vm1535, %v4081, 0
        %v4111 = vsel %vm1535, %v4082, 0
        %4113 = vmatprep.subr.mxu0 0.0
        %4114 = vmatpush1.xpose.msra.mxu0 0.0
        %4115 = vmatprep.subr.mxu0 0.0
        %4116 = vmatpush1.xpose.msra.mxu0 0.0
        %4117 = vmatprep.subr.mxu0 0.0
        %4118 = vmatpush1.xpose.msra.mxu0 0.0
        %4119 = vmatprep.subr.mxu0 0.0
        %4120 = vmatpush1.xpose.msra.mxu0 0.0
        %4121 = vmatprep.subr.mxu0 0.0
        %4122 = vmatpush1.xpose.msra.mxu0 0.0
        %4123 = vmatprep.subr.mxu0 0.0
        %4124 = vmatpush1.xpose.msra.mxu0 0.0
        %4125 = vmatprep.subr.mxu0 0.0
        %4126 = vmatpush1.xpose.msra.mxu0 0.0
        %4127 = vmatprep.subr.mxu0 0.0
        %4128 = vmatpush1.xpose.msra.mxu0 0.0
        %4129 = vmatprep.subr.mxu0 0.0
        %4130 = vmatpush1.xpose.msra.mxu0 0.0
        %4131 = vmatprep.subr.mxu0 0.0
        %4132 = vmatpush1.xpose.msra.mxu0 0.0
        %4133 = vmatprep.subr.mxu0 0.0
        %4134 = vmatpush1.xpose.msra.mxu0 0.0
        %4135 = vmatprep.subr.mxu0 0.0
        %4136 = vmatpush1.xpose.msra.mxu0 0.0
        %4137 = vmatprep.subr.mxu0 0.0
        %4138 = vmatpush1.xpose.msra.mxu0 0.0
        %4139 = vmatprep.subr.mxu0 0.0
        %4140 = vmatpush1.xpose.msra.mxu0 0.0
        %4141 = vmatprep.subr.mxu0 0.0
        %4142 = vmatpush1.xpose.msra.mxu0 %v4111
        %4143 = vmatprep.subr.mxu0 0.0
        %4144 = vmatpush1.xpose.msra.mxu0 %v4108
        %4145 = vmatprep.subr.mxu0 0.0
        %4146 = vmatpush2.xpose.msra.mxu0 0.0
        %4147 = vmatprep.subr.mxu0 0.0
        %4148 = vmatpush2.xpose.msra.mxu0 0.0
        %4149 = vmatprep.subr.mxu0 0.0
        %4150 = vmatpush2.xpose.msra.mxu0 0.0
        %4151 = vmatprep.subr.mxu0 0.0
        %4152 = vmatpush2.xpose.msra.mxu0 0.0
        %4153 = vmatprep.subr.mxu0 0.0
        %4154 = vmatpush2.xpose.msra.mxu0 0.0
        %4155 = vmatprep.subr.mxu0 0.0
        %4156 = vmatpush2.xpose.msra.mxu0 0.0
        %4157 = vmatprep.subr.mxu0 0.0
        %4158 = vmatpush2.xpose.msra.mxu0 0.0
        %4159 = vmatprep.subr.mxu0 0.0
        %4160 = vmatpush2.xpose.msra.mxu0 0.0
        %4161 = vmatprep.subr.mxu0 0.0
        %4162 = vmatpush2.xpose.msra.mxu0 0.0
        %4163 = vmatprep.subr.mxu0 0.0
        %4164 = vmatpush2.xpose.msra.mxu0 0.0
        %4165 = vmatprep.subr.mxu0 0.0
        %4166 = vmatpush2.xpose.msra.mxu0 0.0
        %4167 = vmatprep.subr.mxu0 0.0
        %4168 = vmatpush2.xpose.msra.mxu0 0.0
        %4169 = vmatprep.subr.mxu0 0.0
        %4170 = vmatpush2.xpose.msra.mxu0 0.0
        %4171 = vmatprep.subr.mxu0 0.0
        %4172 = vmatpush2.xpose.msra.mxu0 0.0
        %4173 = vmatprep.subr.mxu0 0.0
        %4174 = vmatpush2.xpose.msra.mxu0 0.0
        %4175 = vmatprep.subr.mxu0 0.0
        %4176 = vmatpush2.xpose.msra.mxu0 0.0
        %4177 = vmatprep.mubr.f32.mxu0 0.0
        %4178 = vmatmul.mubr.f32.gmra.mxu0 %v4084
        %v4179 = vpop.f32.mrf.mxu0
        %v4180 = vadd.f32 0.0, %v4179
        %v4181 = vpop.f32.mrf.mxu0
        %4182 = vmatprep.mubr.f32.mxu0 0.0
        %4183 = vmatmul.mubr.f32.gmra.mxu0 %v4087
        %v4184 = vpop.f32.mrf.mxu0
        %v4185 = vadd.f32 0.0, %v4184
        %v4186 = vpop.f32.mrf.mxu0
        %4187 = vmatprep.mubr.f32.mxu0 0.0
        %4188 = vmatmul.mubr.f32.gmra.mxu0 %v4090
        %v4189 = vpop.f32.mrf.mxu0
        %v4190 = vadd.f32 0.0, %v4189
        %v4191 = vpop.f32.mrf.mxu0
        %4192 = vmatprep.mubr.f32.mxu0 0.0
        %4193 = vmatmul.mubr.f32.gmra.mxu0 %v4093
        %v4194 = vpop.f32.mrf.mxu0
        %v4195 = vadd.f32 0.0, %v4194
        %v4196 = vpop.f32.mrf.mxu0
        %4197 = vmatprep.mubr.f32.mxu0 0.0
        %4198 = vmatmul.mubr.f32.gmra.mxu0 %v4096
        %v4199 = vpop.f32.mrf.mxu0
        %v4200 = vadd.f32 0.0, %v4199
        %v4201 = vpop.f32.mrf.mxu0
        %4202 = vmatprep.mubr.f32.mxu0 0.0
        %4203 = vmatmul.mubr.f32.gmra.mxu0 %v4099
        %v4204 = vpop.f32.mrf.mxu0
        %v4205 = vadd.f32 0.0, %v4204
        %v4206 = vpop.f32.mrf.mxu0
        %4207 = vmatprep.mubr.f32.mxu0 0.0
        %4208 = vmatmul.mubr.f32.gmra.mxu0 %v4102
        %v4209 = vpop.f32.mrf.mxu0
        %v4210 = vadd.f32 0.0, %v4209
        %v4211 = vpop.f32.mrf.mxu0
        %4212 = vmatprep.mubr.f32.mxu0 0.0
        %4213 = vmatmul.mubr.f32.gmra.mxu0 %v4105
        %v4214 = vpop.f32.mrf.mxu0
        %v4215 = vadd.f32 0.0, %v4214
        %v4216 = vpop.f32.mrf.mxu0
        %4217 = vdwg.mxu0
        %v4218 = vstv %s377
        %v4219 = vmul.f32 %v4218, %v4180
        %v4220 = vmul.f32 %v4218, %v4185
        %v4221 = vmul.f32 %v4218, %v4190
        %v4222 = vmul.f32 %v4218, %v4195
        %v4223 = vmul.f32 %v4218, %v4200
        %v4224 = vmul.f32 %v4218, %v4205
        %v4225 = vmul.f32 %v4218, %v4210
        %v4226 = vmul.f32 %v4218, %v4215
        %v4227 = vadd.f32 %v4219, %v3932
        %v4228 = vadd.f32 %v4220, %v3933
        %v4229 = vadd.f32 %v4221, %v3934
        %v4230 = vadd.f32 %v4222, %v3935
        %v4231 = vadd.f32 %v4223, %v3936
        %v4232 = vadd.f32 %v4224, %v3937
        %v4233 = vadd.f32 %v4225, %v3938
        %v4234 = vadd.f32 %v4226, %v3939
        %4235 = vst.msk [vmem:[#allocation4] sm:$0xff] %vm1535, 0.0
        %4236 = vst.msk [vmem:[#allocation4 + $0x8] sm:$0x3] %vm2034, 0.0
        %4237 = vst.msk [vmem:[#allocation4 + $0x10] sm:$0xff] %vm1535, 0.0
        %4238 = vst.msk [vmem:[#allocation4 + $0x18] sm:$0x3] %vm2034, 0.0
        %4239 = vst.msk [vmem:[#allocation4 + $0x20] sm:$0xff] %vm1535, 0.0
        %4240 = vst.msk [vmem:[#allocation4 + $0x28] sm:$0x3] %vm2034, 0.0
        %4241 = vst.msk [vmem:[#allocation4 + $0x30] sm:$0xff] %vm1535, 0.0
        %4242 = vst.msk [vmem:[#allocation4 + $0x38] sm:$0x3] %vm2034, 0.0
        %4243 = vst.msk [vmem:[#allocation4 + $0x40] sm:$0xff] %vm1535, 0.0
        %4244 = vst.msk [vmem:[#allocation4 + $0x48] sm:$0x3] %vm2034, 0.0
        %4245 = vst.msk [vmem:[#allocation4 + $0x50] sm:$0xff] %vm1535, 0.0
        %4246 = vst.msk [vmem:[#allocation4 + $0x58] sm:$0x3] %vm2034, 0.0
        %4247 = vst.msk [vmem:[#allocation4 + $0x60] sm:$0xff] %vm1535, 0.0
        %4248 = vst.msk [vmem:[#allocation4 + $0x68] sm:$0x3] %vm2034, 0.0
        %4249 = vst.msk [vmem:[#allocation4 + $0x70] sm:$0xff] %vm1535, 0.0
        %4250 = vst.msk [vmem:[#allocation4 + $0x78] sm:$0x3] %vm2034, 0.0
        %4251 = vst.msk [vmem:[#allocation4 + $0x80] sm:$0xff] %vm1535, 0.0
        %4252 = vst.msk [vmem:[#allocation4 + $0x88] sm:$0x3] %vm2034, 0.0
        %4253 = vst.msk [vmem:[#allocation4 + $0x90] sm:$0xff] %vm1535, 0.0
        %4254 = vst.msk [vmem:[#allocation4 + $0x98] sm:$0x3] %vm2034, 0.0
        %4255 = vst.msk [vmem:[%s2054 + $0x1] sm:$0xff] %vm1535, %v4227
        %4256 = vst.msk [vmem:[%s2056 + $0x1] sm:$0xff] %vm1535, %v4228
        %4257 = vst.msk [vmem:[%s2058 + $0x1] sm:$0xff] %vm1535, %v4229
        %4258 = vst.msk [vmem:[%s2060 + $0x1] sm:$0xff] %vm1535, %v4230
        %4259 = vst.msk [vmem:[%s2062 + $0x1] sm:$0xff] %vm1535, %v4231
        %4260 = vst.msk [vmem:[%s2064 + $0x1] sm:$0xff] %vm1535, %v4232
        %4261 = vst.msk [vmem:[%s2066 + $0x1] sm:$0xff] %vm1535, %v4233
        %4262 = vst.msk [vmem:[%s2068 + $0x1] sm:$0xff] %vm1535, %v4234
        %v4263 = vld [vmem:[#allocation4] sm:$0xff]
        %v4264 = vld [vmem:[#allocation4 + $0x8] sm:$0x3]
        %v4265 = vld [vmem:[#allocation4 + $0x10] sm:$0xff]
        %v4266 = vld [vmem:[#allocation4 + $0x18] sm:$0x3]
        %v4267 = vld [vmem:[#allocation4 + $0x20] sm:$0xff]
        %v4268 = vld [vmem:[#allocation4 + $0x28] sm:$0x3]
        %v4269 = vld [vmem:[#allocation4 + $0x30] sm:$0xff]
        %v4270 = vld [vmem:[#allocation4 + $0x38] sm:$0x3]
        %v4271 = vld [vmem:[#allocation4 + $0x40] sm:$0xff]
        %v4272 = vld [vmem:[#allocation4 + $0x48] sm:$0x3]
        %v4273 = vld [vmem:[#allocation4 + $0x50] sm:$0xff]
        %v4274 = vld [vmem:[#allocation4 + $0x58] sm:$0x3]
        %v4275 = vld [vmem:[#allocation4 + $0x60] sm:$0xff]
        %v4276 = vld [vmem:[#allocation4 + $0x68] sm:$0x3]
        %v4277 = vld [vmem:[#allocation4 + $0x70] sm:$0xff]
        %v4278 = vld [vmem:[#allocation4 + $0x78] sm:$0x3]
        %v4279 = vld [vmem:[#allocation4 + $0x80] sm:$0xff]
        %v4280 = vld [vmem:[#allocation4 + $0x88] sm:$0x3]
        %v4281 = vld [vmem:[#allocation4 + $0x90] sm:$0xff]
        %v4282 = vld [vmem:[#allocation4 + $0x98] sm:$0x3]
        %v4283 = vpack.c.bf16 %v4265, %v4263
        %v4284 = vpack.c.bf16 %v4269, %v4267
        %v4285 = vpack.c.bf16 %v4273, %v4271
        %v4286 = vpack.c.bf16 %v4277, %v4275
        %v4291 = vunpack.c.l.b16 %v4283
        %v4292 = vunpack.c.h.b16 %v4283
        %v4293 = vunpack.c.l.b16 %v4284
        %v4294 = vunpack.c.h.b16 %v4284
        %v4295 = vunpack.c.l.b16 %v4285
        %v4296 = vunpack.c.h.b16 %v4285
        %v4297 = vunpack.c.l.b16 %v4286
        %v4298 = vunpack.c.h.b16 %v4286
        %v4299 = vpack.c.b16 %v4291, %v4291
        %v4300 = vpack.c.b16 %v4292, %v4292
        %v4301 = vpack.c.b16 %v4293, %v4293
        %v4302 = vpack.c.b16 %v4294, %v4294
        %v4303 = vpack.c.b16 %v4295, %v4295
        %v4304 = vpack.c.b16 %v4296, %v4296
        %v4305 = vpack.c.b16 %v4297, %v4297
        %v4306 = vpack.c.b16 %v4298, %v4298
        %4315 = vst.msk [vmem:[#allocation5] sm:$0xf] %vm2122, %v4299
        %4316 = vst.msk [vmem:[#allocation5 + $0x8] sm:$0xf] %vm2122, %v4300
        %4317 = vst.msk [vmem:[#allocation5 + $0x10] sm:$0xf] %vm2122, %v4301
        %4318 = vst.msk [vmem:[#allocation5 + $0x18] sm:$0xf] %vm2122, %v4302
        %4319 = vst.msk [vmem:[#allocation5 + $0x20] sm:$0xf] %vm2122, %v4303
        %4320 = vst.msk [vmem:[#allocation5 + $0x28] sm:$0xf] %vm2122, %v4304
        %4321 = vst.msk [vmem:[#allocation5 + $0x30] sm:$0xf] %vm2122, %v4305
        %4322 = vst.msk [vmem:[#allocation5 + $0x38] sm:$0xf] %vm2122, %v4306
        %v4339 = vrot.slane %v4263, 1
        %v4340 = vrot.slane %v4264, 1
        %v4341 = vsel %vm501, %v4339, %v4340
        %v4342 = vrot.slane %v4265, 1
        %v4343 = vrot.slane %v4266, 1
        %v4344 = vsel %vm501, %v4342, %v4343
        %v4345 = vrot.slane %v4267, 1
        %v4346 = vrot.slane %v4268, 1
        %v4347 = vsel %vm501, %v4345, %v4346
        %v4348 = vrot.slane %v4269, 1
        %v4349 = vrot.slane %v4270, 1
        %v4350 = vsel %vm501, %v4348, %v4349
        %v4351 = vrot.slane %v4271, 1
        %v4352 = vrot.slane %v4272, 1
        %v4353 = vsel %vm501, %v4351, %v4352
        %v4354 = vrot.slane %v4273, 1
        %v4355 = vrot.slane %v4274, 1
        %v4356 = vsel %vm501, %v4354, %v4355
        %v4357 = vrot.slane %v4275, 1
        %v4358 = vrot.slane %v4276, 1
        %v4359 = vsel %vm501, %v4357, %v4358
        %v4360 = vrot.slane %v4277, 1
        %v4361 = vrot.slane %v4278, 1
        %v4362 = vsel %vm501, %v4360, %v4361
        %v4371 = vpack.c.bf16 %v4344, %v4341
        %v4372 = vpack.c.bf16 %v4350, %v4347
        %v4373 = vpack.c.bf16 %v4356, %v4353
        %v4374 = vpack.c.bf16 %v4362, %v4359
        %v4379 = vunpack.c.l.b16 %v4371
        %v4380 = vunpack.c.h.b16 %v4371
        %v4381 = vunpack.c.l.b16 %v4372
        %v4382 = vunpack.c.h.b16 %v4372
        %v4383 = vunpack.c.l.b16 %v4373
        %v4384 = vunpack.c.h.b16 %v4373
        %v4385 = vunpack.c.l.b16 %v4374
        %v4386 = vunpack.c.h.b16 %v4374
        %v4387 = vpack.c.b16 %v4379, %v4379
        %v4388 = vpack.c.b16 %v4380, %v4380
        %v4389 = vpack.c.b16 %v4381, %v4381
        %v4390 = vpack.c.b16 %v4382, %v4382
        %v4391 = vpack.c.b16 %v4383, %v4383
        %v4392 = vpack.c.b16 %v4384, %v4384
        %v4393 = vpack.c.b16 %v4385, %v4385
        %v4394 = vpack.c.b16 %v4386, %v4386
        %4395 = vrot.lane.b32.xlu0 %v4387, 16
        %v4396 = vpop.permute.xlu0 %4395
        %4397 = vrot.lane.b32.xlu0 %v4388, 16
        %v4398 = vpop.permute.xlu0 %4397
        %4399 = vrot.lane.b32.xlu0 %v4389, 16
        %v4400 = vpop.permute.xlu0 %4399
        %4401 = vrot.lane.b32.xlu0 %v4390, 16
        %v4402 = vpop.permute.xlu0 %4401
        %4403 = vrot.lane.b32.xlu0 %v4391, 16
        %v4404 = vpop.permute.xlu0 %4403
        %4405 = vrot.lane.b32.xlu0 %v4392, 16
        %v4406 = vpop.permute.xlu0 %4405
        %4407 = vrot.lane.b32.xlu0 %v4393, 16
        %v4408 = vpop.permute.xlu0 %4407
        %4409 = vrot.lane.b32.xlu0 %v4394, 16
        %v4410 = vpop.permute.xlu0 %4409
        %4419 = vst.msk [vmem:[#allocation5] sm:$0xf] %vm2227, %v4396
        %4420 = vst.msk [vmem:[#allocation5 + $0x8] sm:$0xf] %vm2227, %v4398
        %4421 = vst.msk [vmem:[#allocation5 + $0x10] sm:$0xf] %vm2227, %v4400
        %4422 = vst.msk [vmem:[#allocation5 + $0x18] sm:$0xf] %vm2227, %v4402
        %4423 = vst.msk [vmem:[#allocation5 + $0x20] sm:$0xf] %vm2227, %v4404
        %4424 = vst.msk [vmem:[#allocation5 + $0x28] sm:$0xf] %vm2227, %v4406
        %4425 = vst.msk [vmem:[#allocation5 + $0x30] sm:$0xf] %vm2227, %v4408
        %4426 = vst.msk [vmem:[#allocation5 + $0x38] sm:$0xf] %vm2227, %v4410
        %v4427 = vrot.slane %v4263, 2
        %v4428 = vrot.slane %v4264, 2
        %v4429 = vsel %vm591, %v4427, %v4428
        %v4430 = vrot.slane %v4265, 2
        %v4431 = vrot.slane %v4266, 2
        %v4432 = vsel %vm591, %v4430, %v4431
        %v4433 = vrot.slane %v4267, 2
        %v4434 = vrot.slane %v4268, 2
        %v4435 = vsel %vm591, %v4433, %v4434
        %v4436 = vrot.slane %v4269, 2
        %v4437 = vrot.slane %v4270, 2
        %v4438 = vsel %vm591, %v4436, %v4437
        %v4439 = vrot.slane %v4271, 2
        %v4440 = vrot.slane %v4272, 2
        %v4441 = vsel %vm591, %v4439, %v4440
        %v4442 = vrot.slane %v4273, 2
        %v4443 = vrot.slane %v4274, 2
        %v4444 = vsel %vm591, %v4442, %v4443
        %v4445 = vrot.slane %v4275, 2
        %v4446 = vrot.slane %v4276, 2
        %v4447 = vsel %vm591, %v4445, %v4446
        %v4448 = vrot.slane %v4277, 2
        %v4449 = vrot.slane %v4278, 2
        %v4450 = vsel %vm591, %v4448, %v4449
        %v4459 = vpack.c.bf16 %v4432, %v4429
        %v4460 = vpack.c.bf16 %v4438, %v4435
        %v4461 = vpack.c.bf16 %v4444, %v4441
        %v4462 = vpack.c.bf16 %v4450, %v4447
        %v4467 = vunpack.c.l.b16 %v4459
        %v4468 = vunpack.c.h.b16 %v4459
        %v4469 = vunpack.c.l.b16 %v4460
        %v4470 = vunpack.c.h.b16 %v4460
        %v4471 = vunpack.c.l.b16 %v4461
        %v4472 = vunpack.c.h.b16 %v4461
        %v4473 = vunpack.c.l.b16 %v4462
        %v4474 = vunpack.c.h.b16 %v4462
        %v4475 = vpack.c.b16 %v4467, %v4467
        %v4476 = vpack.c.b16 %v4468, %v4468
        %v4477 = vpack.c.b16 %v4469, %v4469
        %v4478 = vpack.c.b16 %v4470, %v4470
        %v4479 = vpack.c.b16 %v4471, %v4471
        %v4480 = vpack.c.b16 %v4472, %v4472
        %v4481 = vpack.c.b16 %v4473, %v4473
        %v4482 = vpack.c.b16 %v4474, %v4474
        %4483 = vrot.lane.b32.xlu0 %v4475, 32
        %v4484 = vpop.permute.xlu0 %4483
        %4485 = vrot.lane.b32.xlu0 %v4476, 32
        %v4486 = vpop.permute.xlu0 %4485
        %4487 = vrot.lane.b32.xlu0 %v4477, 32
        %v4488 = vpop.permute.xlu0 %4487
        %4489 = vrot.lane.b32.xlu0 %v4478, 32
        %v4490 = vpop.permute.xlu0 %4489
        %4491 = vrot.lane.b32.xlu0 %v4479, 32
        %v4492 = vpop.permute.xlu0 %4491
        %4493 = vrot.lane.b32.xlu0 %v4480, 32
        %v4494 = vpop.permute.xlu0 %4493
        %4495 = vrot.lane.b32.xlu0 %v4481, 32
        %v4496 = vpop.permute.xlu0 %4495
        %4497 = vrot.lane.b32.xlu0 %v4482, 32
        %v4498 = vpop.permute.xlu0 %4497
        %4507 = vst.msk [vmem:[#allocation5] sm:$0xf] %vm2316, %v4484
        %4508 = vst.msk [vmem:[#allocation5 + $0x8] sm:$0xf] %vm2316, %v4486
        %4509 = vst.msk [vmem:[#allocation5 + $0x10] sm:$0xf] %vm2316, %v4488
        %4510 = vst.msk [vmem:[#allocation5 + $0x18] sm:$0xf] %vm2316, %v4490
        %4511 = vst.msk [vmem:[#allocation5 + $0x20] sm:$0xf] %vm2316, %v4492
        %4512 = vst.msk [vmem:[#allocation5 + $0x28] sm:$0xf] %vm2316, %v4494
        %4513 = vst.msk [vmem:[#allocation5 + $0x30] sm:$0xf] %vm2316, %v4496
        %4514 = vst.msk [vmem:[#allocation5 + $0x38] sm:$0xf] %vm2316, %v4498
        %v4515 = vpack.c.bf16 %v4267, %v4265
        %v4516 = vpack.c.bf16 %v4271, %v4269
        %v4517 = vpack.c.bf16 %v4275, %v4273
        %v4518 = vpack.c.bf16 %v4279, %v4277
        %v4523 = vunpack.c.l.b16 %v4515
        %v4524 = vunpack.c.h.b16 %v4515
        %v4525 = vunpack.c.l.b16 %v4516
        %v4526 = vunpack.c.h.b16 %v4516
        %v4527 = vunpack.c.l.b16 %v4517
        %v4528 = vunpack.c.h.b16 %v4517
        %v4529 = vunpack.c.l.b16 %v4518
        %v4530 = vunpack.c.h.b16 %v4518
        %v4531 = vpack.c.b16 %v4523, %v4523
        %v4532 = vpack.c.b16 %v4524, %v4524
        %v4533 = vpack.c.b16 %v4525, %v4525
        %v4534 = vpack.c.b16 %v4526, %v4526
        %v4535 = vpack.c.b16 %v4527, %v4527
        %v4536 = vpack.c.b16 %v4528, %v4528
        %v4537 = vpack.c.b16 %v4529, %v4529
        %v4538 = vpack.c.b16 %v4530, %v4530
        %4539 = vrot.lane.b32.xlu0 %v4531, 48
        %v4540 = vpop.permute.xlu0 %4539
        %4541 = vrot.lane.b32.xlu0 %v4532, 48
        %v4542 = vpop.permute.xlu0 %4541
        %4543 = vrot.lane.b32.xlu0 %v4533, 48
        %v4544 = vpop.permute.xlu0 %4543
        %4545 = vrot.lane.b32.xlu0 %v4534, 48
        %v4546 = vpop.permute.xlu0 %4545
        %4547 = vrot.lane.b32.xlu0 %v4535, 48
        %v4548 = vpop.permute.xlu0 %4547
        %4549 = vrot.lane.b32.xlu0 %v4536, 48
        %v4550 = vpop.permute.xlu0 %4549
        %4551 = vrot.lane.b32.xlu0 %v4537, 48
        %v4552 = vpop.permute.xlu0 %4551
        %4553 = vrot.lane.b32.xlu0 %v4538, 48
        %v4554 = vpop.permute.xlu0 %4553
        %4563 = vst.msk [vmem:[#allocation5] sm:$0xf] %vm2373, %v4540
        %4564 = vst.msk [vmem:[#allocation5 + $0x8] sm:$0xf] %vm2373, %v4542
        %4565 = vst.msk [vmem:[#allocation5 + $0x10] sm:$0xf] %vm2373, %v4544
        %4566 = vst.msk [vmem:[#allocation5 + $0x18] sm:$0xf] %vm2373, %v4546
        %4567 = vst.msk [vmem:[#allocation5 + $0x20] sm:$0xf] %vm2373, %v4548
        %4568 = vst.msk [vmem:[#allocation5 + $0x28] sm:$0xf] %vm2373, %v4550
        %4569 = vst.msk [vmem:[#allocation5 + $0x30] sm:$0xf] %vm2373, %v4552
        %4570 = vst.msk [vmem:[#allocation5 + $0x38] sm:$0xf] %vm2373, %v4554
        %v4573 = vrot.slane %v4279, 1
        %v4574 = vrot.slane %v4280, 1
        %v4575 = vsel %vm501, %v4573, %v4574
        %v4577 = vpack.c.bf16 %v4347, %v4344
        %v4578 = vpack.c.bf16 %v4353, %v4350
        %v4579 = vpack.c.bf16 %v4359, %v4356
        %v4580 = vpack.c.bf16 %v4575, %v4362
        %v4585 = vunpack.c.l.b16 %v4577
        %v4586 = vunpack.c.h.b16 %v4577
        %v4587 = vunpack.c.l.b16 %v4578
        %v4588 = vunpack.c.h.b16 %v4578
        %v4589 = vunpack.c.l.b16 %v4579
        %v4590 = vunpack.c.h.b16 %v4579
        %v4591 = vunpack.c.l.b16 %v4580
        %v4592 = vunpack.c.h.b16 %v4580
        %v4593 = vpack.c.b16 %v4585, %v4585
        %v4594 = vpack.c.b16 %v4586, %v4586
        %v4595 = vpack.c.b16 %v4587, %v4587
        %v4596 = vpack.c.b16 %v4588, %v4588
        %v4597 = vpack.c.b16 %v4589, %v4589
        %v4598 = vpack.c.b16 %v4590, %v4590
        %v4599 = vpack.c.b16 %v4591, %v4591
        %v4600 = vpack.c.b16 %v4592, %v4592
        %4601 = vrot.lane.b32.xlu0 %v4593, 64
        %v4602 = vpop.permute.xlu0 %4601
        %4603 = vrot.lane.b32.xlu0 %v4594, 64
        %v4604 = vpop.permute.xlu0 %4603
        %4605 = vrot.lane.b32.xlu0 %v4595, 64
        %v4606 = vpop.permute.xlu0 %4605
        %4607 = vrot.lane.b32.xlu0 %v4596, 64
        %v4608 = vpop.permute.xlu0 %4607
        %4609 = vrot.lane.b32.xlu0 %v4597, 64
        %v4610 = vpop.permute.xlu0 %4609
        %4611 = vrot.lane.b32.xlu0 %v4598, 64
        %v4612 = vpop.permute.xlu0 %4611
        %4613 = vrot.lane.b32.xlu0 %v4599, 64
        %v4614 = vpop.permute.xlu0 %4613
        %4615 = vrot.lane.b32.xlu0 %v4600, 64
        %v4616 = vpop.permute.xlu0 %4615
        %4625 = vst.msk [vmem:[#allocation5] sm:$0xf] %vm2436, %v4602
        %4626 = vst.msk [vmem:[#allocation5 + $0x8] sm:$0xf] %vm2436, %v4604
        %4627 = vst.msk [vmem:[#allocation5 + $0x10] sm:$0xf] %vm2436, %v4606
        %4628 = vst.msk [vmem:[#allocation5 + $0x18] sm:$0xf] %vm2436, %v4608
        %4629 = vst.msk [vmem:[#allocation5 + $0x20] sm:$0xf] %vm2436, %v4610
        %4630 = vst.msk [vmem:[#allocation5 + $0x28] sm:$0xf] %vm2436, %v4612
        %4631 = vst.msk [vmem:[#allocation5 + $0x30] sm:$0xf] %vm2436, %v4614
        %4632 = vst.msk [vmem:[#allocation5 + $0x38] sm:$0xf] %vm2436, %v4616
        %v4633 = vrot.slane %v4279, 2
        %v4634 = vrot.slane %v4280, 2
        %v4635 = vsel %vm591, %v4633, %v4634
        %v4637 = vpack.c.bf16 %v4435, %v4432
        %v4638 = vpack.c.bf16 %v4441, %v4438
        %v4639 = vpack.c.bf16 %v4447, %v4444
        %v4640 = vpack.c.bf16 %v4635, %v4450
        %v4645 = vunpack.c.l.b16 %v4637
        %v4646 = vunpack.c.h.b16 %v4637
        %v4647 = vunpack.c.l.b16 %v4638
        %v4648 = vunpack.c.h.b16 %v4638
        %v4649 = vunpack.c.l.b16 %v4639
        %v4650 = vunpack.c.h.b16 %v4639
        %v4651 = vunpack.c.l.b16 %v4640
        %v4652 = vunpack.c.h.b16 %v4640
        %v4653 = vpack.c.b16 %v4645, %v4645
        %v4654 = vpack.c.b16 %v4646, %v4646
        %v4655 = vpack.c.b16 %v4647, %v4647
        %v4656 = vpack.c.b16 %v4648, %v4648
        %v4657 = vpack.c.b16 %v4649, %v4649
        %v4658 = vpack.c.b16 %v4650, %v4650
        %v4659 = vpack.c.b16 %v4651, %v4651
        %v4660 = vpack.c.b16 %v4652, %v4652
        %4661 = vrot.lane.b32.xlu0 %v4653, 80
        %v4662 = vpop.permute.xlu0 %4661
        %4663 = vrot.lane.b32.xlu0 %v4654, 80
        %v4664 = vpop.permute.xlu0 %4663
        %4665 = vrot.lane.b32.xlu0 %v4655, 80
        %v4666 = vpop.permute.xlu0 %4665
        %4667 = vrot.lane.b32.xlu0 %v4656, 80
        %v4668 = vpop.permute.xlu0 %4667
        %4669 = vrot.lane.b32.xlu0 %v4657, 80
        %v4670 = vpop.permute.xlu0 %4669
        %4671 = vrot.lane.b32.xlu0 %v4658, 80
        %v4672 = vpop.permute.xlu0 %4671
        %4673 = vrot.lane.b32.xlu0 %v4659, 80
        %v4674 = vpop.permute.xlu0 %4673
        %4675 = vrot.lane.b32.xlu0 %v4660, 80
        %v4676 = vpop.permute.xlu0 %4675
        %4685 = vst.msk [vmem:[#allocation5] sm:$0xf] %vm2497, %v4662
        %4686 = vst.msk [vmem:[#allocation5 + $0x8] sm:$0xf] %vm2497, %v4664
        %4687 = vst.msk [vmem:[#allocation5 + $0x10] sm:$0xf] %vm2497, %v4666
        %4688 = vst.msk [vmem:[#allocation5 + $0x18] sm:$0xf] %vm2497, %v4668
        %4689 = vst.msk [vmem:[#allocation5 + $0x20] sm:$0xf] %vm2497, %v4670
        %4690 = vst.msk [vmem:[#allocation5 + $0x28] sm:$0xf] %vm2497, %v4672
        %4691 = vst.msk [vmem:[#allocation5 + $0x30] sm:$0xf] %vm2497, %v4674
        %4692 = vst.msk [vmem:[#allocation5 + $0x38] sm:$0xf] %vm2497, %v4676
        %v4693 = vpack.c.bf16 %v4281, %v4279
        %v4695 = vunpack.c.l.b16 %v4693
        %v4696 = vunpack.c.h.b16 %v4693
        %v4697 = vpack.c.b16 %v4695, %v4695
        %v4698 = vpack.c.b16 %v4696, %v4696
        %4699 = vrot.lane.b32.xlu0 %v4301, 96
        %v4700 = vpop.permute.xlu0 %4699
        %4701 = vrot.lane.b32.xlu0 %v4302, 96
        %v4702 = vpop.permute.xlu0 %4701
        %4703 = vrot.lane.b32.xlu0 %v4303, 96
        %v4704 = vpop.permute.xlu0 %4703
        %4705 = vrot.lane.b32.xlu0 %v4304, 96
        %v4706 = vpop.permute.xlu0 %4705
        %4707 = vrot.lane.b32.xlu0 %v4305, 96
        %v4708 = vpop.permute.xlu0 %4707
        %4709 = vrot.lane.b32.xlu0 %v4306, 96
        %v4710 = vpop.permute.xlu0 %4709
        %4711 = vrot.lane.b32.xlu0 %v4697, 96
        %v4712 = vpop.permute.xlu0 %4711
        %4713 = vrot.lane.b32.xlu0 %v4698, 96
        %v4714 = vpop.permute.xlu0 %4713
        %4723 = vst.msk [vmem:[#allocation5] sm:$0xf] %vm2536, %v4700
        %4724 = vst.msk [vmem:[#allocation5 + $0x8] sm:$0xf] %vm2536, %v4702
        %4725 = vst.msk [vmem:[#allocation5 + $0x10] sm:$0xf] %vm2536, %v4704
        %4726 = vst.msk [vmem:[#allocation5 + $0x18] sm:$0xf] %vm2536, %v4706
        %4727 = vst.msk [vmem:[#allocation5 + $0x20] sm:$0xf] %vm2536, %v4708
        %4728 = vst.msk [vmem:[#allocation5 + $0x28] sm:$0xf] %vm2536, %v4710
        %4729 = vst.msk [vmem:[#allocation5 + $0x30] sm:$0xf] %vm2536, %v4712
        %4730 = vst.msk [vmem:[#allocation5 + $0x38] sm:$0xf] %vm2536, %v4714
        %v4733 = vrot.slane %v4281, 1
        %v4734 = vrot.slane %v4282, 1
        %v4735 = vsel %vm501, %v4733, %v4734
        %v4737 = vpack.c.bf16 %v4735, %v4575
        %v4739 = vunpack.c.l.b16 %v4737
        %v4740 = vunpack.c.h.b16 %v4737
        %v4741 = vpack.c.b16 %v4739, %v4739
        %v4742 = vpack.c.b16 %v4740, %v4740
        %4743 = vrot.lane.b32.xlu0 %v4389, 112
        %v4744 = vpop.permute.xlu0 %4743
        %4745 = vrot.lane.b32.xlu0 %v4390, 112
        %v4746 = vpop.permute.xlu0 %4745
        %4747 = vrot.lane.b32.xlu0 %v4391, 112
        %v4748 = vpop.permute.xlu0 %4747
        %4749 = vrot.lane.b32.xlu0 %v4392, 112
        %v4750 = vpop.permute.xlu0 %4749
        %4751 = vrot.lane.b32.xlu0 %v4393, 112
        %v4752 = vpop.permute.xlu0 %4751
        %4753 = vrot.lane.b32.xlu0 %v4394, 112
        %v4754 = vpop.permute.xlu0 %4753
        %4755 = vrot.lane.b32.xlu0 %v4741, 112
        %v4756 = vpop.permute.xlu0 %4755
        %4757 = vrot.lane.b32.xlu0 %v4742, 112
        %v4758 = vpop.permute.xlu0 %4757
        %4767 = vst.msk [vmem:[#allocation5] sm:$0xf] %vm2581, %v4744
        %4768 = vst.msk [vmem:[#allocation5 + $0x8] sm:$0xf] %vm2581, %v4746
        %4769 = vst.msk [vmem:[#allocation5 + $0x10] sm:$0xf] %vm2581, %v4748
        %4770 = vst.msk [vmem:[#allocation5 + $0x18] sm:$0xf] %vm2581, %v4750
        %4771 = vst.msk [vmem:[#allocation5 + $0x20] sm:$0xf] %vm2581, %v4752
        %4772 = vst.msk [vmem:[#allocation5 + $0x28] sm:$0xf] %vm2581, %v4754
        %4773 = vst.msk [vmem:[#allocation5 + $0x30] sm:$0xf] %vm2581, %v4756
        %4774 = vst.msk [vmem:[#allocation5 + $0x38] sm:$0xf] %vm2581, %v4758
        %v4775 = vrot.slane %v4281, 2
        %v4776 = vrot.slane %v4282, 2
        %v4777 = vsel %vm591, %v4775, %v4776
        %v4779 = vpack.c.bf16 %v4777, %v4635
        %v4781 = vunpack.c.l.b16 %v4779
        %v4782 = vunpack.c.h.b16 %v4779
        %v4783 = vpack.c.b16 %v4781, %v4781
        %v4784 = vpack.c.b16 %v4782, %v4782
        %4793 = vst.msk [vmem:[#allocation5 + $0x4] sm:$0xf] %vm2122, %v4477
        %4794 = vst.msk [vmem:[#allocation5 + $0xc] sm:$0xf] %vm2122, %v4478
        %4795 = vst.msk [vmem:[#allocation5 + $0x14] sm:$0xf] %vm2122, %v4479
        %4796 = vst.msk [vmem:[#allocation5 + $0x1c] sm:$0xf] %vm2122, %v4480
        %4797 = vst.msk [vmem:[#allocation5 + $0x24] sm:$0xf] %vm2122, %v4481
        %4798 = vst.msk [vmem:[#allocation5 + $0x2c] sm:$0xf] %vm2122, %v4482
        %4799 = vst.msk [vmem:[#allocation5 + $0x34] sm:$0xf] %vm2122, %v4783
        %4800 = vst.msk [vmem:[#allocation5 + $0x3c] sm:$0xf] %vm2122, %v4784
        %v4801 = vld [vmem:[#allocation5] sm:$0xff]
        %v4802 = vld [vmem:[#allocation5 + $0x8] sm:$0xff]
        %v4803 = vld [vmem:[#allocation5 + $0x10] sm:$0xff]
        %v4804 = vld [vmem:[#allocation5 + $0x18] sm:$0xff]
        %v4805 = vld [vmem:[#allocation5 + $0x20] sm:$0xff]
        %v4806 = vld [vmem:[#allocation5 + $0x28] sm:$0xff]
        %v4807 = vld [vmem:[#allocation5 + $0x30] sm:$0xff]
        %v4808 = vld [vmem:[#allocation5 + $0x38] sm:$0xff]
        %v4809 = vld [vmem:[%s4] sm:$0xf]
        %v4810 = vld [vmem:[%s4 + $0x4] sm:$0xf]
        %v4811 = vld [vmem:[%s4 + $0x8] sm:$0xf]
        %v4812 = vld [vmem:[%s4 + $0xc] sm:$0xf]
        %v4813 = vld [vmem:[%s4 + $0x10] sm:$0xf]
        %v4814 = vld [vmem:[%s4 + $0x14] sm:$0xf]
        %v4815 = vld [vmem:[%s4 + $0x18] sm:$0xf]
        %v4816 = vld [vmem:[%s4 + $0x1c] sm:$0xf]
        %v4817 = vld [vmem:[%s4 + $0x20] sm:$0xf]
        %v4818 = vld [vmem:[%s4 + $0x24] sm:$0xf]
        %v4819 = vld [vmem:[%s4 + $0x28] sm:$0xf]
        %v4820 = vld [vmem:[%s4 + $0x2c] sm:$0xf]
        %v4821 = vld [vmem:[%s4 + $0x30] sm:$0xf]
        %v4822 = vld [vmem:[%s4 + $0x34] sm:$0xf]
        %v4823 = vld [vmem:[%s4 + $0x38] sm:$0xf]
        %v4824 = vld [vmem:[%s4 + $0x3c] sm:$0xf]
        %v4825 = vld [vmem:[%s4 + $0x40] sm:$0xf]
        %v4826 = vld [vmem:[%s4 + $0x44] sm:$0xf]
        %v4827 = vlaneseq
        %v4828 = vshrl.u32 %v4827, 7
        %v4829 = vsub.s32 3, %v4828
        %v4830 = vrot.slane %v375, %v4829
        %v4839 = vunpack.c.l.b16 %v4801
        %v4840 = vunpack.c.h.b16 %v4801
        %v4841 = vunpack.c.l.b16 %v4802
        %v4842 = vunpack.c.h.b16 %v4802
        %v4843 = vunpack.c.l.b16 %v4803
        %v4844 = vunpack.c.h.b16 %v4803
        %v4845 = vunpack.c.l.b16 %v4804
        %v4846 = vunpack.c.h.b16 %v4804
        %v4847 = vunpack.c.l.b16 %v4805
        %v4848 = vunpack.c.h.b16 %v4805
        %v4849 = vunpack.c.l.b16 %v4806
        %v4850 = vunpack.c.h.b16 %v4806
        %v4851 = vunpack.c.l.b16 %v4807
        %v4852 = vunpack.c.h.b16 %v4807
        %v4853 = vunpack.c.l.b16 %v4808
        %v4854 = vunpack.c.h.b16 %v4808
        %v4855 = vpack.c.b16 %v4841, %v4839
        %v4856 = vpack.c.b16 %v4842, %v4840
        %v4857 = vpack.c.b16 %v4845, %v4843
        %v4858 = vpack.c.b16 %v4846, %v4844
        %v4859 = vpack.c.b16 %v4849, %v4847
        %v4860 = vpack.c.b16 %v4850, %v4848
        %v4861 = vpack.c.b16 %v4853, %v4851
        %v4862 = vpack.c.b16 %v4854, %v4852
        %v4885 = vunpack.c.l.b16 %v4809
        %v4886 = vunpack.c.l.b16 %v4810
        %v4887 = vunpack.c.l.b16 %v4811
        %v4888 = vunpack.c.l.b16 %v4812
        %v4889 = vunpack.c.l.b16 %v4813
        %v4890 = vunpack.c.l.b16 %v4814
        %v4891 = vunpack.c.l.b16 %v4815
        %v4892 = vunpack.c.l.b16 %v4816
        %v4893 = vunpack.c.l.b16 %v4817
        %v4894 = vunpack.c.l.b16 %v4818
        %v4895 = vunpack.c.l.b16 %v4819
        %v4896 = vunpack.c.l.b16 %v4820
        %v4897 = vunpack.c.l.b16 %v4821
        %v4898 = vunpack.c.l.b16 %v4822
        %v4899 = vunpack.c.l.b16 %v4823
        %v4900 = vunpack.c.l.b16 %v4824
        %v4901 = vunpack.c.l.b16 %v4825
        %v4902 = vunpack.c.l.b16 %v4826
        %v4903 = vpack.c.b16 %v4886, %v4885
        %v4904 = vpack.c.b16 %v4888, %v4887
        %v4905 = vpack.c.b16 %v4890, %v4889
        %v4906 = vpack.c.b16 %v4892, %v4891
        %v4907 = vpack.c.b16 %v4894, %v4893
        %v4908 = vpack.c.b16 %v4896, %v4895
        %v4909 = vpack.c.b16 %v4898, %v4897
        %v4910 = vpack.c.b16 %v4900, %v4899
        %v4911 = vpack.c.b16 %v4902, %v4901
        %v4922 = vsel %vm1535, %v4856, 0
        %v4925 = vsel %vm1535, %v4858, 0
        %v4928 = vsel %vm1535, %v4860, 0
        %v4931 = vsel %vm1535, %v4862, 0
        %4933 = vmatprep.subr.bf16.mxu0 0
        %4934 = vmatpush1.bf16.msra.mxu0 %v4910
        %4935 = vmatprep.subr.bf16.mxu0 0
        %4936 = vmatpush1.bf16.msra.mxu0 %v4909
        %4937 = vmatprep.subr.bf16.mxu0 0
        %4938 = vmatpush1.bf16.msra.mxu0 %v4908
        %4939 = vmatprep.subr.bf16.mxu0 0
        %4940 = vmatpush1.bf16.msra.mxu0 %v4907
        %4941 = vmatprep.subr.bf16.mxu0 0
        %4942 = vmatpush1.bf16.msra.mxu0 %v4906
        %4943 = vmatprep.subr.bf16.mxu0 0
        %4944 = vmatpush1.bf16.msra.mxu0 %v4905
        %4945 = vmatprep.subr.bf16.mxu0 0
        %4946 = vmatpush1.bf16.msra.mxu0 %v4904
        %4947 = vmatprep.subr.bf16.mxu0 0
        %4948 = vmatpush1.bf16.msra.mxu0 %v4903
        %4949 = vmatprep.subr.bf16.mxu0 0
        %4950 = vmatpush2.bf16.msra.mxu0 0
        %4951 = vmatprep.subr.bf16.mxu0 0
        %4952 = vmatpush2.bf16.msra.mxu0 0
        %4953 = vmatprep.subr.bf16.mxu0 0
        %4954 = vmatpush2.bf16.msra.mxu0 0
        %4955 = vmatprep.subr.bf16.mxu0 0
        %4956 = vmatpush2.bf16.msra.mxu0 0
        %4957 = vmatprep.subr.bf16.mxu0 0
        %4958 = vmatpush2.bf16.msra.mxu0 0
        %4959 = vmatprep.subr.bf16.mxu0 0
        %4960 = vmatpush2.bf16.msra.mxu0 0
        %4961 = vmatprep.subr.bf16.mxu0 0
        %4962 = vmatpush2.bf16.msra.mxu0 0
        %4963 = vmatprep.subr.bf16.mxu0 0
        %4964 = vmatpush2.bf16.msra.mxu0 %v4911
        %4965 = vmatprep.mubr.bf16.mxu0 %v4922
        %4966 = vmatmul.mubr.bf16.gmra.mxu0 %v4855
        %v4967 = vpop.f32.mrf.mxu0
        %v4968 = vadd.f32 %v4830, %v4967
        %v4969 = vpop.f32.mrf.mxu0
        %v4970 = vpop.f32.mrf.mxu0
        %v4971 = vadd.f32 %v4830, %v4970
        %v4972 = vpop.f32.mrf.mxu0
        %4973 = vmatprep.mubr.bf16.mxu0 %v4925
        %4974 = vmatmul.mubr.bf16.gmra.mxu0 %v4857
        %v4975 = vpop.f32.mrf.mxu0
        %v4976 = vadd.f32 %v4830, %v4975
        %v4977 = vpop.f32.mrf.mxu0
        %v4978 = vpop.f32.mrf.mxu0
        %v4979 = vadd.f32 %v4830, %v4978
        %v4980 = vpop.f32.mrf.mxu0
        %4981 = vmatprep.mubr.bf16.mxu0 %v4928
        %4982 = vmatmul.mubr.bf16.gmra.mxu0 %v4859
        %v4983 = vpop.f32.mrf.mxu0
        %v4984 = vadd.f32 %v4830, %v4983
        %v4985 = vpop.f32.mrf.mxu0
        %v4986 = vpop.f32.mrf.mxu0
        %v4987 = vadd.f32 %v4830, %v4986
        %v4988 = vpop.f32.mrf.mxu0
        %4989 = vmatprep.mubr.bf16.mxu0 %v4931
        %4990 = vmatmul.mubr.bf16.gmra.mxu0 %v4861
        %v4991 = vpop.f32.mrf.mxu0
        %v4992 = vadd.f32 %v4830, %v4991
        %v4993 = vpop.f32.mrf.mxu0
        %v4994 = vpop.f32.mrf.mxu0
        %v4995 = vadd.f32 %v4830, %v4994
        %v4996 = vpop.f32.mrf.mxu0
        %4997 = vdwg.mxu0
        %v4998 = vmax.f32 %v4968, 0.0
        %v4999 = vmax.f32 %v4971, 0.0
        %v5000 = vmax.f32 %v4976, 0.0
        %v5001 = vmax.f32 %v4979, 0.0
        %v5002 = vmax.f32 %v4984, 0.0
        %v5003 = vmax.f32 %v4987, 0.0
        %v5004 = vmax.f32 %v4992, 0.0
        %v5005 = vmax.f32 %v4995, 0.0
        %v5006 = vpack.c.bf16 %v2814, %v2813
        %v5007 = vpack.c.bf16 %v2816, %v2815
        %v5008 = vpack.c.bf16 %v2818, %v2817
        %v5009 = vpack.c.bf16 %v2820, %v2819
        %v5010 = vld [vmem:[%s6] sm:$0xf]
        %v5011 = vld [vmem:[%s6 + $0x4] sm:$0xf]
        %v5012 = vpack.c.bf16 %v4999, %v4998
        %v5013 = vpack.c.bf16 %v5001, %v5000
        %v5014 = vpack.c.bf16 %v5003, %v5002
        %v5015 = vpack.c.bf16 %v5005, %v5004
        %v5016 = vld [vmem:[%s7] sm:$0xf]
        %v5017 = vld [vmem:[%s7 + $0x4] sm:$0xf]
        %v5020 = vunpack.c.l.b16 %v5016
        %v5021 = vunpack.c.l.b16 %v5017
        %v5022 = vpack.c.b16 %v5021, %v5020
        %v5025 = vsel %vm1535, %v5012, 0
        %v5028 = vsel %vm1535, %v5013, 0
        %v5031 = vsel %vm1535, %v5014, 0
        %v5034 = vsel %vm1535, %v5015, 0
        %5036 = vmatprep.subr.bf16.mxu0 0
        %5037 = vmatpush1.bf16.msra.mxu0 0
        %5038 = vmatprep.subr.bf16.mxu0 0
        %5039 = vmatpush1.bf16.msra.mxu0 0
        %5040 = vmatprep.subr.bf16.mxu0 0
        %5041 = vmatpush1.bf16.msra.mxu0 0
        %5042 = vmatprep.subr.bf16.mxu0 0
        %5043 = vmatpush1.bf16.msra.mxu0 0
        %5044 = vmatprep.subr.bf16.mxu0 0
        %5045 = vmatpush1.bf16.msra.mxu0 0
        %5046 = vmatprep.subr.bf16.mxu0 0
        %5047 = vmatpush1.bf16.msra.mxu0 0
        %5048 = vmatprep.subr.bf16.mxu0 0
        %5049 = vmatpush1.bf16.msra.mxu0 0
        %5050 = vmatprep.subr.bf16.mxu0 0
        %5051 = vmatpush1.bf16.msra.mxu0 %v5022
        %5052 = vmatprep.subr.bf16.mxu0 0
        %5053 = vmatpush2.bf16.msra.mxu0 0
        %5054 = vmatprep.subr.bf16.mxu0 0
        %5055 = vmatpush2.bf16.msra.mxu0 0
        %5056 = vmatprep.subr.bf16.mxu0 0
        %5057 = vmatpush2.bf16.msra.mxu0 0
        %5058 = vmatprep.subr.bf16.mxu0 0
        %5059 = vmatpush2.bf16.msra.mxu0 0
        %5060 = vmatprep.subr.bf16.mxu0 0
        %5061 = vmatpush2.bf16.msra.mxu0 0
        %5062 = vmatprep.subr.bf16.mxu0 0
        %5063 = vmatpush2.bf16.msra.mxu0 0
        %5064 = vmatprep.subr.bf16.mxu0 0
        %5065 = vmatpush2.bf16.msra.mxu0 0
        %5066 = vmatprep.subr.bf16.mxu0 0
        %5067 = vmatpush2.bf16.msra.mxu0 0
        %5068 = vmatprep.mubr.bf16.mxu0 0
        %5069 = vmatmul.mubr.bf16.gmra.mxu0 %v5025
        %v5070 = vpop.f32.mrf.mxu0
        %v5071 = vadd.f32 0.0, %v5070
        %v5072 = vpop.f32.mrf.mxu0
        %v5073 = vpop.f32.mrf.mxu0
        %v5074 = vadd.f32 0.0, %v5073
        %v5075 = vpop.f32.mrf.mxu0
        %5076 = vmatprep.mubr.bf16.mxu0 0
        %5077 = vmatmul.mubr.bf16.gmra.mxu0 %v5028
        %v5078 = vpop.f32.mrf.mxu0
        %v5079 = vadd.f32 0.0, %v5078
        %v5080 = vpop.f32.mrf.mxu0
        %v5081 = vpop.f32.mrf.mxu0
        %v5082 = vadd.f32 0.0, %v5081
        %v5083 = vpop.f32.mrf.mxu0
        %5084 = vmatprep.mubr.bf16.mxu0 0
        %5085 = vmatmul.mubr.bf16.gmra.mxu0 %v5031
        %v5086 = vpop.f32.mrf.mxu0
        %v5087 = vadd.f32 0.0, %v5086
        %v5088 = vpop.f32.mrf.mxu0
        %v5089 = vpop.f32.mrf.mxu0
        %v5090 = vadd.f32 0.0, %v5089
        %v5091 = vpop.f32.mrf.mxu0
        %5092 = vmatprep.mubr.bf16.mxu0 0
        %5093 = vmatmul.mubr.bf16.gmra.mxu0 %v5034
        %v5094 = vpop.f32.mrf.mxu0
        %v5095 = vadd.f32 0.0, %v5094
        %v5096 = vpop.f32.mrf.mxu0
        %v5097 = vpop.f32.mrf.mxu0
        %v5098 = vadd.f32 0.0, %v5097
        %v5099 = vpop.f32.mrf.mxu0
        %5100 = vdwg.mxu0
        %v5103 = vunpack.c.l.b16 %v5010
        %v5104 = vunpack.c.l.b16 %v5011
        %v5105 = vpack.c.b16 %v5104, %v5103
        %v5108 = vsel %vm1535, %v5006, 0
        %v5111 = vsel %vm1535, %v5007, 0
        %v5114 = vsel %vm1535, %v5008, 0
        %v5117 = vsel %vm1535, %v5009, 0
        %5119 = vmatprep.subr.bf16.mxu0 0
        %5120 = vmatpush1.bf16.msra.mxu0 0
        %5121 = vmatprep.subr.bf16.mxu0 0
        %5122 = vmatpush1.bf16.msra.mxu0 0
        %5123 = vmatprep.subr.bf16.mxu0 0
        %5124 = vmatpush1.bf16.msra.mxu0 0
        %5125 = vmatprep.subr.bf16.mxu0 0
        %5126 = vmatpush1.bf16.msra.mxu0 0
        %5127 = vmatprep.subr.bf16.mxu0 0
        %5128 = vmatpush1.bf16.msra.mxu0 0
        %5129 = vmatprep.subr.bf16.mxu0 0
        %5130 = vmatpush1.bf16.msra.mxu0 0
        %5131 = vmatprep.subr.bf16.mxu0 0
        %5132 = vmatpush1.bf16.msra.mxu0 0
        %5133 = vmatprep.subr.bf16.mxu0 0
        %5134 = vmatpush1.bf16.msra.mxu0 %v5105
        %5135 = vmatprep.subr.bf16.mxu0 0
        %5136 = vmatpush2.bf16.msra.mxu0 0
        %5137 = vmatprep.subr.bf16.mxu0 0
        %5138 = vmatpush2.bf16.msra.mxu0 0
        %5139 = vmatprep.subr.bf16.mxu0 0
        %5140 = vmatpush2.bf16.msra.mxu0 0
        %5141 = vmatprep.subr.bf16.mxu0 0
        %5142 = vmatpush2.bf16.msra.mxu0 0
        %5143 = vmatprep.subr.bf16.mxu0 0
        %5144 = vmatpush2.bf16.msra.mxu0 0
        %5145 = vmatprep.subr.bf16.mxu0 0
        %5146 = vmatpush2.bf16.msra.mxu0 0
        %5147 = vmatprep.subr.bf16.mxu0 0
        %5148 = vmatpush2.bf16.msra.mxu0 0
        %5149 = vmatprep.subr.bf16.mxu0 0
        %5150 = vmatpush2.bf16.msra.mxu0 0
        %5151 = vmatprep.mubr.bf16.mxu0 0
        %5152 = vmatmul.mubr.bf16.gmra.mxu0 %v5108
        %v5153 = vpop.f32.mrf.mxu0
        %v5154 = vadd.f32 %v5071, %v5153
        %v5155 = vpop.f32.mrf.mxu0
        %v5156 = vpop.f32.mrf.mxu0
        %v5157 = vadd.f32 %v5074, %v5156
        %v5158 = vpop.f32.mrf.mxu0
        %5159 = vmatprep.mubr.bf16.mxu0 0
        %5160 = vmatmul.mubr.bf16.gmra.mxu0 %v5111
        %v5161 = vpop.f32.mrf.mxu0
        %v5162 = vadd.f32 %v5079, %v5161
        %v5163 = vpop.f32.mrf.mxu0
        %v5164 = vpop.f32.mrf.mxu0
        %v5165 = vadd.f32 %v5082, %v5164
        %v5166 = vpop.f32.mrf.mxu0
        %5167 = vmatprep.mubr.bf16.mxu0 0
        %5168 = vmatmul.mubr.bf16.gmra.mxu0 %v5114
        %v5169 = vpop.f32.mrf.mxu0
        %v5170 = vadd.f32 %v5087, %v5169
        %v5171 = vpop.f32.mrf.mxu0
        %v5172 = vpop.f32.mrf.mxu0
        %v5173 = vadd.f32 %v5090, %v5172
        %v5174 = vpop.f32.mrf.mxu0
        %5175 = vmatprep.mubr.bf16.mxu0 0
        %5176 = vmatmul.mubr.bf16.gmra.mxu0 %v5117
        %v5177 = vpop.f32.mrf.mxu0
        %v5178 = vadd.f32 %v5095, %v5177
        %v5179 = vpop.f32.mrf.mxu0
        %v5180 = vpop.f32.mrf.mxu0
        %v5181 = vadd.f32 %v5098, %v5180
        %v5182 = vpop.f32.mrf.mxu0
        %5183 = vdwg.mxu0
        %v5184 = vlaneseq
        %v5185 = vshrl.u32 %v5184, 7
        %v5186 = vsub.s32 5, %v5185
        %v5187 = vrot.slane %v375, %v5186
        %v5188 = vadd.f32 %v5154, %v5187
        %v5189 = vadd.f32 %v5157, %v5187
        %v5190 = vadd.f32 %v5162, %v5187
        %v5191 = vadd.f32 %v5165, %v5187
        %v5192 = vadd.f32 %v5170, %v5187
        %v5193 = vadd.f32 %v5173, %v5187
        %v5194 = vadd.f32 %v5178, %v5187
        %v5195 = vadd.f32 %v5181, %v5187
        %vm5196 = vcmask 392192
        %5197 = vst.msk [vmem:[%s373] sm:$0xff] %vm5196, %v5188
        %5198 = vst.msk [vmem:[%s373 + $0x8] sm:$0xff] %vm5196, %v5189
        %5199 = vst.msk [vmem:[%s373 + $0x10] sm:$0xff] %vm5196, %v5190
        %5200 = vst.msk [vmem:[%s373 + $0x18] sm:$0xff] %vm5196, %v5191
        %5201 = vst.msk [vmem:[%s373 + $0x20] sm:$0xff] %vm5196, %v5192
        %5202 = vst.msk [vmem:[%s373 + $0x28] sm:$0xff] %vm5196, %v5193
        %5203 = vst.msk [vmem:[%s373 + $0x30] sm:$0xff] %vm5196, %v5194
        %5204 = vst.msk [vmem:[%s373 + $0x38] sm:$0xff] %vm5196, %v5195
        %p5205 = scmp.lt.s32.totalorder %s22, 1
        %s5206 = scalar_select %p5205, %s22, 1
        %s5207 = smul.addr %s5206, 8
        %s5208 = smul.addr %s5207, 8
        %s5209 = scalar_lea.vmem %s10, %s5208
        // Predicated region
        $region65: #{danet_head_forward.1} parent=59 // pred_check
          %p5210 = pneg %p255
        $region66: #{danet_head_forward.1} parent=59 // pred_check_branch
          %5212 = sbr.rel (%p5210) target = $region68
        $region67: #{danet_head_forward.1} parent=59 // pred_region
          _
        $region68: #{danet_head_forward.1} parent=59 // pred_fallthru
          _
      $region60: #{danet_head_forward.1} parent=5 // pred_fallthru
        _
      %p5213 = scmp.le.s32.totalorder 2, %s17
      // Predicated region
      $region69: #{danet_head_forward.1} parent=5 // pred_check
        %p5214 = pneg %p5213
      $region70: #{danet_head_forward.1} parent=5 // pred_check_branch
        %5216 = sbr.rel (%p5214) target = $region72
      $region71: #{danet_head_forward.1} parent=5 // pred_region
        %s5217 = ssub.s32 %s17, 2
        // Predicated region
        $region73: #{danet_head_forward.1} parent=71 // pred_check
          %p5218 = pneg %p261
        $region74: #{danet_head_forward.1} parent=71 // pred_check_branch
          %5220 = sbr.rel (%p5218) target = $region76
        $region75: #{danet_head_forward.1} parent=71 // pred_region
          %p5221 = scmp.lt.s32.totalorder %s23, 1
          %s5222 = scalar_select %p5221, %s23, 1
          %s5223 = smul.addr %s5222, 8
          %s5224 = smul.addr %s5223, 8
          %s5225 = scalar_lea.vmem %s10, %s5224
        $region76: #{danet_head_forward.1} parent=71 // pred_fallthru
          _
      $region72: #{danet_head_forward.1} parent=5 // pred_fallthru
        _
    $region6: #{danet_head_forward.1} parent=1 // loop_footer
      %s21 = sadd.s32 1, %s17
    $region7: #{danet_head_forward.1} parent=1 // loop_footer_branch
      %16 = sbr.rel target = $region3
    $region8: #{danet_head_forward.1} parent=1 // loop_exit
      _
    %5226 = vsyncpa [#allocation7], 1
    %s5227 = scalar_lea.sflag [#allocation7], 1
    %5228 = vsyncpa %s5227, 1

</llo_original>
